<compile_context>
chip_gen: v7x
topology: tpu7x:2x2x1
jax: 0.10.0
libtpu: 0.0.40
codegen_flags: <defaults>
</compile_context>

<pallas_src>
import jax
import jax.numpy as jnp
import numpy as np
from jax.experimental import pallas as pl
from jax.experimental.pallas import tpu as pltpu

# Small, module-consistent shapes
N_IMG, H, W, C = 2, 16, 16, 16
KH = KW = 3                  # kernel_size = 3 -> padding = 1 ("SAME")
REDUCTION = 4                # keep C // reduction >= 1 at small C
CR = C // REDUCTION
NUM_CAB = 2

HW = H * W                   # 256 lanes per image
L = N_IMG * HW               # 512 lanes total (batch folded into the lane axis)
KK = KH * KW                 # 9 conv taps

assert (W & (W - 1)) == 0 and (H & (H - 1)) == 0, "H, W must be powers of two"
LOG2_W = W.bit_length() - 1


def orb_kernel(x_ref, w1_ref, w2_ref, wd_ref, wu_ref, wf_ref, o_ref, col_ref):
    """x_ref/o_ref: (C, L) f32.  w1/w2_ref: (NUM_CAB, C, KK*C) bf16, wf_ref: (C, KK*C) bf16.
    wd_ref: (NUM_CAB, C, CR) f32, wu_ref: (NUM_CAB, C, CR) f32 (wu already transposed).
    col_ref: VMEM (KK*C, L) bf16 im2col scratch (reused by all 5 convs)."""
    # ---- constant roll amounts / halo masks, hoisted once for all convs ----------
    pos = jax.lax.broadcasted_iota(jnp.int32, (1, L), 1)
    xc = jnp.bitwise_and(pos, W - 1)                              # x within row
    yc = jnp.bitwise_and(jnp.right_shift(pos, LOG2_W), H - 1)     # y within image
    taps = []                                                     # (roll_amt, mask|None)
    for dy in range(KH):
        for dx in range(KW):
            s = (dy - 1) * W + (dx - 1)        # flat source offset of this tap
            conds = []
            if dy == 0:
                conds.append(yc >= 1)          # source row y-1 must exist
            if dy == KH - 1:
                conds.append(yc <= H - 2)      # source row y+1 must exist
            if dx == 0:
                conds.append(xc >= 1)
            if dx == KW - 1:
                conds.append(xc <= W - 2)
            mask = None
            if conds:
                v = conds[0]
                for cnd in conds[1:]:
                    v = jnp.logical_and(v, cnd)
                mask = jnp.where(v, 1.0, 0.0).astype(jnp.float32)     # (1, L)
            taps.append(((-s) % L, mask))      # roll by -s so out[p] = in[p + s]

    def conv3x3(v, w2d):
        """v: (C, L) f32, w2d: (C, KK*C) bf16 -> (C, L) f32 via one K=144 MXU matmul."""
        for k, (amt, mask) in enumerate(taps):
            shifted = v if amt == 0 else pltpu.roll(v, amt, axis=1)   # XLU rotate
            if mask is not None:
                shifted = shifted * mask                              # zero halo taps
            col_ref[k * C:(k + 1) * C, :] = shifted.astype(jnp.bfloat16)
        return jnp.dot(w2d, col_ref[...], preferred_element_type=jnp.float32)

    x0 = x_ref[...].astype(jnp.float32)                  # (C, L)
    y = x0
    for i in range(NUM_CAB):                             # static unroll over CABs
        r = conv3x3(y, w1_ref[i])
        r = jnp.maximum(r, 0.0)                          # act = ReLU
        r = conv3x3(r, w2_ref[i])
        # CALayer (per image): GAP -> 1x1 -> ReLU -> 1x1 -> sigmoid -> scale (VPU/XLU/EUP only)
        pieces = []
        for n in range(N_IMG):
            rn = r[:, n * HW:(n + 1) * HW]               # (C, HW), 128-aligned lane slice
            gap = jnp.mean(rn, axis=1, keepdims=True)                 # (C, 1)  lane reduce
            a1 = jnp.sum(gap * wd_ref[i], axis=0, keepdims=True)      # (1, CR) sublane reduce
            a1 = jnp.maximum(a1, 0.0)
            a2 = jnp.sum(wu_ref[i] * a1, axis=1, keepdims=True)       # (C, 1)  lane reduce
            att = pl.reciprocal(1.0 + jnp.exp(-a2), approx=True)      # sigmoid
            pieces.append(rn * att)
        r = jnp.concatenate(pieces, axis=1)              # (C, L)
        y = r + y                                        # CAB residual
    y = conv3x3(y, wf_ref[...])                          # trailing conv of body
    o_ref[...] = (y + x0).astype(o_ref.dtype)            # ORB residual (y_hat += x)


def _pack_conv_weight(w_hwio):
    """(KH, KW, Cin, Cout) HWIO -> (Cout, KH*KW*Cin) bf16, rows co, cols (ky, kx, ci)."""
    c_out = w_hwio.shape[-1]
    return jnp.transpose(w_hwio, (3, 0, 1, 2)).reshape(c_out, KK * C).astype(jnp.bfloat16)


def orb_forward(x, w1, w2, wd, wu, wf):
    """x: (N, H, W, C) f32.  w1/w2: (NUM_CAB, KH, KW, C, C) HWIO, wd: (NUM_CAB, C, CR),
    wu: (NUM_CAB, CR, C), wf: (KH, KW, C, C)."""
    # ---- wrapper-side layout plumbing (lane-dense, channel-major) ----
    x_cm = jnp.transpose(x, (3, 0, 1, 2)).reshape(C, L)              # (C, N*H*W)
    w1_r = jnp.stack([_pack_conv_weight(w1[i]) for i in range(NUM_CAB)])
    w2_r = jnp.stack([_pack_conv_weight(w2[i]) for i in range(NUM_CAB)])
    wf_r = _pack_conv_weight(wf)
    wu_t = jnp.transpose(wu, (0, 2, 1))                              # (NUM_CAB, C, CR)

    def full(shape):
        nd = len(shape)
        return pl.BlockSpec(shape, lambda i, _nd=nd: (0,) * _nd)

    out_cm = pl.pallas_call(
        orb_kernel,
        out_shape=jax.ShapeDtypeStruct((C, L), jnp.float32),
        grid_spec=pltpu.PrefetchScalarGridSpec(
            num_scalar_prefetch=0,
            grid=(1,),                                   # whole batch in one step
            in_specs=[
                full((C, L)),
                full(w1_r.shape), full(w2_r.shape),
                full(wd.shape), full(wu_t.shape), full(wf_r.shape),
            ],
            out_specs=full((C, L)),
            scratch_shapes=[pltpu.VMEM((KK * C, L), jnp.bfloat16)],   # im2col slab
        ),
        compiler_params=pltpu.CompilerParams(
            dimension_semantics=("arbitrary",)),
    )(x_cm, w1_r, w2_r, wd, wu_t, wf_r)

    return jnp.transpose(out_cm.reshape(C, N_IMG, H, W), (1, 2, 3, 0)).astype(x.dtype)


def ref_forward(x, w1, w2, wd, wu, wf):
    """Pure-JAX f32 reference (matches PyTorch ORB semantics in NHWC)."""
    def conv(v, w):
        return jax.lax.conv_general_dilated(
            v, w, window_strides=(1, 1), padding="SAME",
            dimension_numbers=("NHWC", "HWIO", "NHWC"))

    y = x
    for i in range(NUM_CAB):
        r = conv(y, w1[i])
        r = jnp.maximum(r, 0.0)
        r = conv(r, w2[i])
        gap = jnp.mean(r, axis=(1, 2), keepdims=True)                  # (N,1,1,C)
        a = jnp.maximum(jnp.einsum("nijc,cd->nijd", gap, wd[i]), 0.0)
        a = jax.nn.sigmoid(jnp.einsum("nijd,dc->nijc", a, wu[i]))
        r = r * a
        y = r + y
    return conv(y, wf) + x


if __name__ == "__main__":
    key = jax.random.PRNGKey(0)
    ks = jax.random.split(key, 6)
    scale = 0.1
    x = jax.random.normal(ks[0], (N_IMG, H, W, C), jnp.float32)
    w1 = jax.random.normal(ks[1], (NUM_CAB, KH, KW, C, C), jnp.float32) * scale
    w2 = jax.random.normal(ks[2], (NUM_CAB, KH, KW, C, C), jnp.float32) * scale
    wd = jax.random.normal(ks[3], (NUM_CAB, C, CR), jnp.float32) * scale
    wu = jax.random.normal(ks[4], (NUM_CAB, CR, C), jnp.float32) * scale
    wf = jax.random.normal(ks[5], (KH, KW, C, C), jnp.float32) * scale

    out = jax.block_until_ready(orb_forward(x, w1, w2, wd, wu, wf))
    ref = jax.block_until_ready(ref_forward(x, w1, w2, wd, wu, wf))

    assert out.shape == x.shape and out.dtype == x.dtype
    out_np, ref_np = np.asarray(out), np.asarray(ref)
    # bf16 MXU operands (f32 accumulation) vs f32 reference: tolerance loosened
    # per the performance review ("loosen the 1e-4 test tolerance accordingly").
    rel_l2 = float(np.linalg.norm(out_np - ref_np) / np.linalg.norm(ref_np))
    assert rel_l2 < 5e-2, f"relative L2 error too large: {rel_l2}"
    np.testing.assert_allclose(out_np, ref_np, rtol=1e-1, atol=1.5e-1)
    print("KERNEL_OK")
</pallas_src>

<mosaic_0001>
module attributes {stable_mosaic.version = 11 : i64} {
  func.func @orb_kernel(%arg0: i32, %arg1: memref<16x512xf32, #tpu.memory_space<vmem>>, %arg2: memref<2x16x144xbf16, #tpu.memory_space<vmem>>, %arg3: memref<2x16x144xbf16, #tpu.memory_space<vmem>>, %arg4: memref<2x16x4xf32, #tpu.memory_space<vmem>>, %arg5: memref<2x16x4xf32, #tpu.memory_space<vmem>>, %arg6: memref<16x144xbf16, #tpu.memory_space<vmem>>, %arg7: memref<16x512xf32, #tpu.memory_space<vmem>>, %arg8: memref<144x512xbf16, #tpu.memory_space<vmem>>) attributes {dimension_semantics = [#tpu.dimension_semantics<arbitrary>], iteration_bounds = array<i64: 1>, scalar_prefetch = 0 : i64, scratch_operands = 1 : i64, tpu.core_type = #tpu.core_type<tc>, window_params = [{pipeline_mode = #tpu.pipeline_mode<synchronous>, transform_indices = @transform_0, window_bounds = array<i64: 16, 512>}, {pipeline_mode = #tpu.pipeline_mode<synchronous>, transform_indices = @transform_1, window_bounds = array<i64: 2, 16, 144>}, {pipeline_mode = #tpu.pipeline_mode<synchronous>, transform_indices = @transform_2, window_bounds = array<i64: 2, 16, 144>}, {pipeline_mode = #tpu.pipeline_mode<synchronous>, transform_indices = @transform_3, window_bounds = array<i64: 2, 16, 4>}, {pipeline_mode = #tpu.pipeline_mode<synchronous>, transform_indices = @transform_4, window_bounds = array<i64: 2, 16, 4>}, {pipeline_mode = #tpu.pipeline_mode<synchronous>, transform_indices = @transform_5, window_bounds = array<i64: 16, 144>}, {pipeline_mode = #tpu.pipeline_mode<synchronous>, transform_indices = @transform_6, window_bounds = array<i64: 16, 512>}]} {
    %0 = tpu.iota {dimensions = array<i32: 1>} : vector<1x512xi32>
    %c15_i32 = arith.constant 15 : i32
    %1 = vector.broadcast %c15_i32 : i32 to vector<1x512xi32>
    %2 = arith.andi %0, %1 : vector<1x512xi32>
    %c4_i32 = arith.constant 4 : i32
    %3 = vector.broadcast %c4_i32 : i32 to vector<1x512xi32>
    %4 = arith.shrsi %0, %3 : vector<1x512xi32>
    %c15_i32_0 = arith.constant 15 : i32
    %5 = vector.broadcast %c15_i32_0 : i32 to vector<1x512xi32>
    %6 = arith.andi %4, %5 : vector<1x512xi32>
    %c1_i32 = arith.constant 1 : i32
    %7 = vector.broadcast %c1_i32 : i32 to vector<1x512xi32>
    %8 = arith.cmpi sge, %6, %7 : vector<1x512xi32>
    %c1_i32_1 = arith.constant 1 : i32
    %9 = vector.broadcast %c1_i32_1 : i32 to vector<1x512xi32>
    %10 = arith.cmpi sge, %2, %9 : vector<1x512xi32>
    %11 = arith.andi %8, %10 : vector<1x512xi1>
    %cst = arith.constant 1.000000e+00 : f32
    %cst_2 = arith.constant 0.000000e+00 : f32
    %12 = vector.broadcast %cst : f32 to vector<1x512xf32>
    %13 = vector.broadcast %cst_2 : f32 to vector<1x512xf32>
    %14 = arith.select %11, %12, %13 : vector<1x512xi1>, vector<1x512xf32>
    %c1_i32_3 = arith.constant 1 : i32
    %15 = vector.broadcast %c1_i32_3 : i32 to vector<1x512xi32>
    %16 = arith.cmpi sge, %6, %15 : vector<1x512xi32>
    %cst_4 = arith.constant 1.000000e+00 : f32
    %cst_5 = arith.constant 0.000000e+00 : f32
    %17 = vector.broadcast %cst_4 : f32 to vector<1x512xf32>
    %18 = vector.broadcast %cst_5 : f32 to vector<1x512xf32>
    %19 = arith.select %16, %17, %18 : vector<1x512xi1>, vector<1x512xf32>
    %c1_i32_6 = arith.constant 1 : i32
    %20 = vector.broadcast %c1_i32_6 : i32 to vector<1x512xi32>
    %21 = arith.cmpi sge, %6, %20 : vector<1x512xi32>
    %c14_i32 = arith.constant 14 : i32
    %22 = vector.broadcast %c14_i32 : i32 to vector<1x512xi32>
    %23 = arith.cmpi sle, %2, %22 : vector<1x512xi32>
    %24 = arith.andi %21, %23 : vector<1x512xi1>
    %cst_7 = arith.constant 1.000000e+00 : f32
    %cst_8 = arith.constant 0.000000e+00 : f32
    %25 = vector.broadcast %cst_7 : f32 to vector<1x512xf32>
    %26 = vector.broadcast %cst_8 : f32 to vector<1x512xf32>
    %27 = arith.select %24, %25, %26 : vector<1x512xi1>, vector<1x512xf32>
    %c1_i32_9 = arith.constant 1 : i32
    %28 = vector.broadcast %c1_i32_9 : i32 to vector<1x512xi32>
    %29 = arith.cmpi sge, %2, %28 : vector<1x512xi32>
    %cst_10 = arith.constant 1.000000e+00 : f32
    %cst_11 = arith.constant 0.000000e+00 : f32
    %30 = vector.broadcast %cst_10 : f32 to vector<1x512xf32>
    %31 = vector.broadcast %cst_11 : f32 to vector<1x512xf32>
    %32 = arith.select %29, %30, %31 : vector<1x512xi1>, vector<1x512xf32>
    %c14_i32_12 = arith.constant 14 : i32
    %33 = vector.broadcast %c14_i32_12 : i32 to vector<1x512xi32>
    %34 = arith.cmpi sle, %2, %33 : vector<1x512xi32>
    %cst_13 = arith.constant 1.000000e+00 : f32
    %cst_14 = arith.constant 0.000000e+00 : f32
    %35 = vector.broadcast %cst_13 : f32 to vector<1x512xf32>
    %36 = vector.broadcast %cst_14 : f32 to vector<1x512xf32>
    %37 = arith.select %34, %35, %36 : vector<1x512xi1>, vector<1x512xf32>
    %c14_i32_15 = arith.constant 14 : i32
    %38 = vector.broadcast %c14_i32_15 : i32 to vector<1x512xi32>
    %39 = arith.cmpi sle, %6, %38 : vector<1x512xi32>
    %c1_i32_16 = arith.constant 1 : i32
    %40 = vector.broadcast %c1_i32_16 : i32 to vector<1x512xi32>
    %41 = arith.cmpi sge, %2, %40 : vector<1x512xi32>
    %42 = arith.andi %39, %41 : vector<1x512xi1>
    %cst_17 = arith.constant 1.000000e+00 : f32
    %cst_18 = arith.constant 0.000000e+00 : f32
    %43 = vector.broadcast %cst_17 : f32 to vector<1x512xf32>
    %44 = vector.broadcast %cst_18 : f32 to vector<1x512xf32>
    %45 = arith.select %42, %43, %44 : vector<1x512xi1>, vector<1x512xf32>
    %c14_i32_19 = arith.constant 14 : i32
    %46 = vector.broadcast %c14_i32_19 : i32 to vector<1x512xi32>
    %47 = arith.cmpi sle, %6, %46 : vector<1x512xi32>
    %cst_20 = arith.constant 1.000000e+00 : f32
    %cst_21 = arith.constant 0.000000e+00 : f32
    %48 = vector.broadcast %cst_20 : f32 to vector<1x512xf32>
    %49 = vector.broadcast %cst_21 : f32 to vector<1x512xf32>
    %50 = arith.select %47, %48, %49 : vector<1x512xi1>, vector<1x512xf32>
    %c14_i32_22 = arith.constant 14 : i32
    %51 = vector.broadcast %c14_i32_22 : i32 to vector<1x512xi32>
    %52 = arith.cmpi sle, %6, %51 : vector<1x512xi32>
    %c14_i32_23 = arith.constant 14 : i32
    %53 = vector.broadcast %c14_i32_23 : i32 to vector<1x512xi32>
    %54 = arith.cmpi sle, %2, %53 : vector<1x512xi32>
    %55 = arith.andi %52, %54 : vector<1x512xi1>
    %cst_24 = arith.constant 1.000000e+00 : f32
    %cst_25 = arith.constant 0.000000e+00 : f32
    %56 = vector.broadcast %cst_24 : f32 to vector<1x512xf32>
    %57 = vector.broadcast %cst_25 : f32 to vector<1x512xf32>
    %58 = arith.select %55, %56, %57 : vector<1x512xi1>, vector<1x512xf32>
    %c0 = arith.constant 0 : index
    %c0_26 = arith.constant 0 : index
    %59 = vector.load %arg1[%c0, %c0_26] : memref<16x512xf32, #tpu.memory_space<vmem>>, vector<16x512xf32>
    %c0_27 = arith.constant 0 : index
    %c0_28 = arith.constant 0 : index
    %c0_29 = arith.constant 0 : index
    %60 = vector.load %arg2[%c0_27, %c0_28, %c0_29] : memref<2x16x144xbf16, #tpu.memory_space<vmem>>, vector<1x16x144xbf16>
    %61 = vector.shape_cast %60 : vector<1x16x144xbf16> to vector<16x144xbf16>
    %c17_i32 = arith.constant 17 : i32
    %62 = tpu.dynamic_rotate %59 by %c17_i32 dim 1 : vector<16x512xf32>, i32 -> vector<16x512xf32>
    %63 = vector.broadcast %14 : vector<1x512xf32> to vector<16x512xf32>
    %64 = arith.mulf %62, %63 : vector<16x512xf32>
    %65 = arith.truncf %64 : vector<16x512xf32> to vector<16x512xbf16>
    %c0_30 = arith.constant 0 : index
    %c0_31 = arith.constant 0 : index
    %66 = vector.load %arg8[%c0_30, %c0_31] : memref<144x512xbf16, #tpu.memory_space<vmem>>, vector<16x512xbf16>
    tpu.vector_store %arg8[%c0_30, %c0_31], %65 {strides = array<i32>} : memref<144x512xbf16, #tpu.memory_space<vmem>>, vector<16x512xbf16>,
    %c16_i32 = arith.constant 16 : i32
    %67 = tpu.dynamic_rotate %59 by %c16_i32 dim 1 : vector<16x512xf32>, i32 -> vector<16x512xf32>
    %68 = vector.broadcast %19 : vector<1x512xf32> to vector<16x512xf32>
    %69 = arith.mulf %67, %68 : vector<16x512xf32>
    %70 = arith.truncf %69 : vector<16x512xf32> to vector<16x512xbf16>
    %c16 = arith.constant 16 : index
    %c0_32 = arith.constant 0 : index
    %71 = vector.load %arg8[%c16, %c0_32] : memref<144x512xbf16, #tpu.memory_space<vmem>>, vector<16x512xbf16>
    tpu.vector_store %arg8[%c16, %c0_32], %70 {strides = array<i32>} : memref<144x512xbf16, #tpu.memory_space<vmem>>, vector<16x512xbf16>,
    %c15_i32_33 = arith.constant 15 : i32
    %72 = tpu.dynamic_rotate %59 by %c15_i32_33 dim 1 : vector<16x512xf32>, i32 -> vector<16x512xf32>
    %73 = vector.broadcast %27 : vector<1x512xf32> to vector<16x512xf32>
    %74 = arith.mulf %72, %73 : vector<16x512xf32>
    %75 = arith.truncf %74 : vector<16x512xf32> to vector<16x512xbf16>
    %c32 = arith.constant 32 : index
    %c0_34 = arith.constant 0 : index
    %76 = vector.load %arg8[%c32, %c0_34] : memref<144x512xbf16, #tpu.memory_space<vmem>>, vector<16x512xbf16>
    tpu.vector_store %arg8[%c32, %c0_34], %75 {strides = array<i32>} : memref<144x512xbf16, #tpu.memory_space<vmem>>, vector<16x512xbf16>,
    %c1_i32_35 = arith.constant 1 : i32
    %77 = tpu.dynamic_rotate %59 by %c1_i32_35 dim 1 : vector<16x512xf32>, i32 -> vector<16x512xf32>
    %78 = vector.broadcast %32 : vector<1x512xf32> to vector<16x512xf32>
    %79 = arith.mulf %77, %78 : vector<16x512xf32>
    %80 = arith.truncf %79 : vector<16x512xf32> to vector<16x512xbf16>
    %c48 = arith.constant 48 : index
    %c0_36 = arith.constant 0 : index
    %81 = vector.load %arg8[%c48, %c0_36] : memref<144x512xbf16, #tpu.memory_space<vmem>>, vector<16x512xbf16>
    tpu.vector_store %arg8[%c48, %c0_36], %80 {strides = array<i32>} : memref<144x512xbf16, #tpu.memory_space<vmem>>, vector<16x512xbf16>,
    %82 = arith.truncf %59 : vector<16x512xf32> to vector<16x512xbf16>
    %c64 = arith.constant 64 : index
    %c0_37 = arith.constant 0 : index
    %83 = vector.load %arg8[%c64, %c0_37] : memref<144x512xbf16, #tpu.memory_space<vmem>>, vector<16x512xbf16>
    tpu.vector_store %arg8[%c64, %c0_37], %82 {strides = array<i32>} : memref<144x512xbf16, #tpu.memory_space<vmem>>, vector<16x512xbf16>,
    %c511_i32 = arith.constant 511 : i32
    %84 = tpu.dynamic_rotate %59 by %c511_i32 dim 1 : vector<16x512xf32>, i32 -> vector<16x512xf32>
    %85 = vector.broadcast %37 : vector<1x512xf32> to vector<16x512xf32>
    %86 = arith.mulf %84, %85 : vector<16x512xf32>
    %87 = arith.truncf %86 : vector<16x512xf32> to vector<16x512xbf16>
    %c80 = arith.constant 80 : index
    %c0_38 = arith.constant 0 : index
    %88 = vector.load %arg8[%c80, %c0_38] : memref<144x512xbf16, #tpu.memory_space<vmem>>, vector<16x512xbf16>
    tpu.vector_store %arg8[%c80, %c0_38], %87 {strides = array<i32>} : memref<144x512xbf16, #tpu.memory_space<vmem>>, vector<16x512xbf16>,
    %c497_i32 = arith.constant 497 : i32
    %89 = tpu.dynamic_rotate %59 by %c497_i32 dim 1 : vector<16x512xf32>, i32 -> vector<16x512xf32>
    %90 = vector.broadcast %45 : vector<1x512xf32> to vector<16x512xf32>
    %91 = arith.mulf %89, %90 : vector<16x512xf32>
    %92 = arith.truncf %91 : vector<16x512xf32> to vector<16x512xbf16>
    %c96 = arith.constant 96 : index
    %c0_39 = arith.constant 0 : index
    %93 = vector.load %arg8[%c96, %c0_39] : memref<144x512xbf16, #tpu.memory_space<vmem>>, vector<16x512xbf16>
    tpu.vector_store %arg8[%c96, %c0_39], %92 {strides = array<i32>} : memref<144x512xbf16, #tpu.memory_space<vmem>>, vector<16x512xbf16>,
    %c496_i32 = arith.constant 496 : i32
    %94 = tpu.dynamic_rotate %59 by %c496_i32 dim 1 : vector<16x512xf32>, i32 -> vector<16x512xf32>
    %95 = vector.broadcast %50 : vector<1x512xf32> to vector<16x512xf32>
    %96 = arith.mulf %94, %95 : vector<16x512xf32>
    %97 = arith.truncf %96 : vector<16x512xf32> to vector<16x512xbf16>
    %c112 = arith.constant 112 : index
    %c0_40 = arith.constant 0 : index
    %98 = vector.load %arg8[%c112, %c0_40] : memref<144x512xbf16, #tpu.memory_space<vmem>>, vector<16x512xbf16>
    tpu.vector_store %arg8[%c112, %c0_40], %97 {strides = array<i32>} : memref<144x512xbf16, #tpu.memory_space<vmem>>, vector<16x512xbf16>,
    %c495_i32 = arith.constant 495 : i32
    %99 = tpu.dynamic_rotate %59 by %c495_i32 dim 1 : vector<16x512xf32>, i32 -> vector<16x512xf32>
    %100 = vector.broadcast %58 : vector<1x512xf32> to vector<16x512xf32>
    %101 = arith.mulf %99, %100 : vector<16x512xf32>
    %102 = arith.truncf %101 : vector<16x512xf32> to vector<16x512xbf16>
    %c128 = arith.constant 128 : index
    %c0_41 = arith.constant 0 : index
    %103 = vector.load %arg8[%c128, %c0_41] : memref<144x512xbf16, #tpu.memory_space<vmem>>, vector<16x512xbf16>
    tpu.vector_store %arg8[%c128, %c0_41], %102 {strides = array<i32>} : memref<144x512xbf16, #tpu.memory_space<vmem>>, vector<16x512xbf16>,
    %c0_42 = arith.constant 0 : index
    %c0_43 = arith.constant 0 : index
    %104 = vector.load %arg8[%c0_42, %c0_43] : memref<144x512xbf16, #tpu.memory_space<vmem>>, vector<144x512xbf16>
    %cst_44 = arith.constant dense<0.000000e+00> : vector<16x512xf32>
    %105 = tpu.matmul %61, %104, %cst_44 {dimension_numbers = #tpu.dot_dimension_numbers<[1], [0], [0], [1], [0, 0, 1, 1], [], []>} : vector<16x144xbf16>, vector<144x512xbf16>, vector<16x512xf32> -> vector<16x512xf32>
    %cst_45 = arith.constant 0.000000e+00 : f32
    %106 = vector.broadcast %cst_45 : f32 to vector<16x512xf32>
    %107 = arith.maximumf %105, %106 : vector<16x512xf32>
    %c0_46 = arith.constant 0 : index
    %c0_47 = arith.constant 0 : index
    %c0_48 = arith.constant 0 : index
    %108 = vector.load %arg3[%c0_46, %c0_47, %c0_48] : memref<2x16x144xbf16, #tpu.memory_space<vmem>>, vector<1x16x144xbf16>
    %109 = vector.shape_cast %108 : vector<1x16x144xbf16> to vector<16x144xbf16>
    %c17_i32_49 = arith.constant 17 : i32
    %110 = tpu.dynamic_rotate %107 by %c17_i32_49 dim 1 : vector<16x512xf32>, i32 -> vector<16x512xf32>
    %111 = vector.broadcast %14 : vector<1x512xf32> to vector<16x512xf32>
    %112 = arith.mulf %110, %111 : vector<16x512xf32>
    %113 = arith.truncf %112 : vector<16x512xf32> to vector<16x512xbf16>
    %c0_50 = arith.constant 0 : index
    %c0_51 = arith.constant 0 : index
    %114 = vector.load %arg8[%c0_50, %c0_51] : memref<144x512xbf16, #tpu.memory_space<vmem>>, vector<16x512xbf16>
    tpu.vector_store %arg8[%c0_50, %c0_51], %113 {strides = array<i32>} : memref<144x512xbf16, #tpu.memory_space<vmem>>, vector<16x512xbf16>,
    %c16_i32_52 = arith.constant 16 : i32
    %115 = tpu.dynamic_rotate %107 by %c16_i32_52 dim 1 : vector<16x512xf32>, i32 -> vector<16x512xf32>
    %116 = vector.broadcast %19 : vector<1x512xf32> to vector<16x512xf32>
    %117 = arith.mulf %115, %116 : vector<16x512xf32>
    %118 = arith.truncf %117 : vector<16x512xf32> to vector<16x512xbf16>
    %c16_53 = arith.constant 16 : index
    %c0_54 = arith.constant 0 : index
    %119 = vector.load %arg8[%c16_53, %c0_54] : memref<144x512xbf16, #tpu.memory_space<vmem>>, vector<16x512xbf16>
    tpu.vector_store %arg8[%c16_53, %c0_54], %118 {strides = array<i32>} : memref<144x512xbf16, #tpu.memory_space<vmem>>, vector<16x512xbf16>,
    %c15_i32_55 = arith.constant 15 : i32
    %120 = tpu.dynamic_rotate %107 by %c15_i32_55 dim 1 : vector<16x512xf32>, i32 -> vector<16x512xf32>
    %121 = vector.broadcast %27 : vector<1x512xf32> to vector<16x512xf32>
    %122 = arith.mulf %120, %121 : vector<16x512xf32>
    %123 = arith.truncf %122 : vector<16x512xf32> to vector<16x512xbf16>
    %c32_56 = arith.constant 32 : index
    %c0_57 = arith.constant 0 : index
    %124 = vector.load %arg8[%c32_56, %c0_57] : memref<144x512xbf16, #tpu.memory_space<vmem>>, vector<16x512xbf16>
    tpu.vector_store %arg8[%c32_56, %c0_57], %123 {strides = array<i32>} : memref<144x512xbf16, #tpu.memory_space<vmem>>, vector<16x512xbf16>,
    %c1_i32_58 = arith.constant 1 : i32
    %125 = tpu.dynamic_rotate %107 by %c1_i32_58 dim 1 : vector<16x512xf32>, i32 -> vector<16x512xf32>
    %126 = vector.broadcast %32 : vector<1x512xf32> to vector<16x512xf32>
    %127 = arith.mulf %125, %126 : vector<16x512xf32>
    %128 = arith.truncf %127 : vector<16x512xf32> to vector<16x512xbf16>
    %c48_59 = arith.constant 48 : index
    %c0_60 = arith.constant 0 : index
    %129 = vector.load %arg8[%c48_59, %c0_60] : memref<144x512xbf16, #tpu.memory_space<vmem>>, vector<16x512xbf16>
    tpu.vector_store %arg8[%c48_59, %c0_60], %128 {strides = array<i32>} : memref<144x512xbf16, #tpu.memory_space<vmem>>, vector<16x512xbf16>,
    %130 = arith.truncf %107 : vector<16x512xf32> to vector<16x512xbf16>
    %c64_61 = arith.constant 64 : index
    %c0_62 = arith.constant 0 : index
    %131 = vector.load %arg8[%c64_61, %c0_62] : memref<144x512xbf16, #tpu.memory_space<vmem>>, vector<16x512xbf16>
    tpu.vector_store %arg8[%c64_61, %c0_62], %130 {strides = array<i32>} : memref<144x512xbf16, #tpu.memory_space<vmem>>, vector<16x512xbf16>,
    %c511_i32_63 = arith.constant 511 : i32
    %132 = tpu.dynamic_rotate %107 by %c511_i32_63 dim 1 : vector<16x512xf32>, i32 -> vector<16x512xf32>
    %133 = vector.broadcast %37 : vector<1x512xf32> to vector<16x512xf32>
    %134 = arith.mulf %132, %133 : vector<16x512xf32>
    %135 = arith.truncf %134 : vector<16x512xf32> to vector<16x512xbf16>
    %c80_64 = arith.constant 80 : index
    %c0_65 = arith.constant 0 : index
    %136 = vector.load %arg8[%c80_64, %c0_65] : memref<144x512xbf16, #tpu.memory_space<vmem>>, vector<16x512xbf16>
    tpu.vector_store %arg8[%c80_64, %c0_65], %135 {strides = array<i32>} : memref<144x512xbf16, #tpu.memory_space<vmem>>, vector<16x512xbf16>,
    %c497_i32_66 = arith.constant 497 : i32
    %137 = tpu.dynamic_rotate %107 by %c497_i32_66 dim 1 : vector<16x512xf32>, i32 -> vector<16x512xf32>
    %138 = vector.broadcast %45 : vector<1x512xf32> to vector<16x512xf32>
    %139 = arith.mulf %137, %138 : vector<16x512xf32>
    %140 = arith.truncf %139 : vector<16x512xf32> to vector<16x512xbf16>
    %c96_67 = arith.constant 96 : index
    %c0_68 = arith.constant 0 : index
    %141 = vector.load %arg8[%c96_67, %c0_68] : memref<144x512xbf16, #tpu.memory_space<vmem>>, vector<16x512xbf16>
    tpu.vector_store %arg8[%c96_67, %c0_68], %140 {strides = array<i32>} : memref<144x512xbf16, #tpu.memory_space<vmem>>, vector<16x512xbf16>,
    %c496_i32_69 = arith.constant 496 : i32
    %142 = tpu.dynamic_rotate %107 by %c496_i32_69 dim 1 : vector<16x512xf32>, i32 -> vector<16x512xf32>
    %143 = vector.broadcast %50 : vector<1x512xf32> to vector<16x512xf32>
    %144 = arith.mulf %142, %143 : vector<16x512xf32>
    %145 = arith.truncf %144 : vector<16x512xf32> to vector<16x512xbf16>
    %c112_70 = arith.constant 112 : index
    %c0_71 = arith.constant 0 : index
    %146 = vector.load %arg8[%c112_70, %c0_71] : memref<144x512xbf16, #tpu.memory_space<vmem>>, vector<16x512xbf16>
    tpu.vector_store %arg8[%c112_70, %c0_71], %145 {strides = array<i32>} : memref<144x512xbf16, #tpu.memory_space<vmem>>, vector<16x512xbf16>,
    %c495_i32_72 = arith.constant 495 : i32
    %147 = tpu.dynamic_rotate %107 by %c495_i32_72 dim 1 : vector<16x512xf32>, i32 -> vector<16x512xf32>
    %148 = vector.broadcast %58 : vector<1x512xf32> to vector<16x512xf32>
    %149 = arith.mulf %147, %148 : vector<16x512xf32>
    %150 = arith.truncf %149 : vector<16x512xf32> to vector<16x512xbf16>
    %c128_73 = arith.constant 128 : index
    %c0_74 = arith.constant 0 : index
    %151 = vector.load %arg8[%c128_73, %c0_74] : memref<144x512xbf16, #tpu.memory_space<vmem>>, vector<16x512xbf16>
    tpu.vector_store %arg8[%c128_73, %c0_74], %150 {strides = array<i32>} : memref<144x512xbf16, #tpu.memory_space<vmem>>, vector<16x512xbf16>,
    %c0_75 = arith.constant 0 : index
    %c0_76 = arith.constant 0 : index
    %152 = vector.load %arg8[%c0_75, %c0_76] : memref<144x512xbf16, #tpu.memory_space<vmem>>, vector<144x512xbf16>
    %cst_77 = arith.constant dense<0.000000e+00> : vector<16x512xf32>
    %153 = tpu.matmul %109, %152, %cst_77 {dimension_numbers = #tpu.dot_dimension_numbers<[1], [0], [0], [1], [0, 0, 1, 1], [], []>} : vector<16x144xbf16>, vector<144x512xbf16>, vector<16x512xf32> -> vector<16x512xf32>
    %154 = vector.extract_strided_slice %153 {offsets = [0, 0], sizes = [16, 256], strides = [1, 1]} : vector<16x512xf32> to vector<16x256xf32>
    %cst_78 = arith.constant dense<0.000000e+00> : vector<16xf32>
    %155 = vector.multi_reduction <add>, %154, %cst_78 [1] : vector<16x256xf32> to vector<16xf32>
    %156 = vector.shape_cast %155 : vector<16xf32> to vector<16x1xf32>
    %cst_79 = arith.constant 2.560000e+02 : f32
    %157 = vector.broadcast %cst_79 : f32 to vector<16x1xf32>
    %158 = arith.divf %156, %157 : vector<16x1xf32>
    %c0_80 = arith.constant 0 : index
    %c0_81 = arith.constant 0 : index
    %c0_82 = arith.constant 0 : index
    %159 = vector.load %arg4[%c0_80, %c0_81, %c0_82] : memref<2x16x4xf32, #tpu.memory_space<vmem>>, vector<1x16x4xf32>
    %160 = vector.shape_cast %159 : vector<1x16x4xf32> to vector<16x4xf32>
    %161 = vector.broadcast %158 : vector<16x1xf32> to vector<16x4xf32>
    %162 = arith.mulf %161, %160 : vector<16x4xf32>
    %cst_83 = arith.constant dense<0.000000e+00> : vector<4xf32>
    %163 = vector.multi_reduction <add>, %162, %cst_83 [0] : vector<16x4xf32> to vector<4xf32>
    %164 = vector.shape_cast %163 : vector<4xf32> to vector<1x4xf32>
    %cst_84 = arith.constant 0.000000e+00 : f32
    %165 = vector.broadcast %cst_84 : f32 to vector<1x4xf32>
    %166 = arith.maximumf %164, %165 : vector<1x4xf32>
    %c0_85 = arith.constant 0 : index
    %c0_86 = arith.constant 0 : index
    %c0_87 = arith.constant 0 : index
    %167 = vector.load %arg5[%c0_85, %c0_86, %c0_87] : memref<2x16x4xf32, #tpu.memory_space<vmem>>, vector<1x16x4xf32>
    %168 = vector.shape_cast %167 : vector<1x16x4xf32> to vector<16x4xf32>
    %169 = vector.broadcast %166 : vector<1x4xf32> to vector<16x4xf32>
    %170 = arith.mulf %168, %169 : vector<16x4xf32>
    %cst_88 = arith.constant dense<0.000000e+00> : vector<16xf32>
    %171 = vector.multi_reduction <add>, %170, %cst_88 [1] : vector<16x4xf32> to vector<16xf32>
    %172 = vector.shape_cast %171 : vector<16xf32> to vector<16x1xf32>
    %cst_89 = arith.constant 0.000000e+00 : f32
    %173 = vector.broadcast %cst_89 : f32 to vector<16x1xf32>
    %174 = arith.subf %173, %172 : vector<16x1xf32>
    %175 = math.exp %174 : vector<16x1xf32>
    %cst_90 = arith.constant 1.000000e+00 : f32
    %176 = vector.broadcast %cst_90 : f32 to vector<16x1xf32>
    %177 = arith.addf %176, %175 : vector<16x1xf32>
    %178 = tpu.reciprocal %177 {approx = true} : vector<16x1xf32> -> vector<16x1xf32>
    %179 = vector.broadcast %178 : vector<16x1xf32> to vector<16x256xf32>
    %180 = arith.mulf %154, %179 : vector<16x256xf32>
    %181 = vector.extract_strided_slice %153 {offsets = [0, 256], sizes = [16, 256], strides = [1, 1]} : vector<16x512xf32> to vector<16x256xf32>
    %cst_91 = arith.constant dense<0.000000e+00> : vector<16xf32>
    %182 = vector.multi_reduction <add>, %181, %cst_91 [1] : vector<16x256xf32> to vector<16xf32>
    %183 = vector.shape_cast %182 : vector<16xf32> to vector<16x1xf32>
    %cst_92 = arith.constant 2.560000e+02 : f32
    %184 = vector.broadcast %cst_92 : f32 to vector<16x1xf32>
    %185 = arith.divf %183, %184 : vector<16x1xf32>
    %c0_93 = arith.constant 0 : index
    %c0_94 = arith.constant 0 : index
    %c0_95 = arith.constant 0 : index
    %186 = vector.load %arg4[%c0_93, %c0_94, %c0_95] : memref<2x16x4xf32, #tpu.memory_space<vmem>>, vector<1x16x4xf32>
    %187 = vector.shape_cast %186 : vector<1x16x4xf32> to vector<16x4xf32>
    %188 = vector.broadcast %185 : vector<16x1xf32> to vector<16x4xf32>
    %189 = arith.mulf %188, %187 : vector<16x4xf32>
    %cst_96 = arith.constant dense<0.000000e+00> : vector<4xf32>
    %190 = vector.multi_reduction <add>, %189, %cst_96 [0] : vector<16x4xf32> to vector<4xf32>
    %191 = vector.shape_cast %190 : vector<4xf32> to vector<1x4xf32>
    %cst_97 = arith.constant 0.000000e+00 : f32
    %192 = vector.broadcast %cst_97 : f32 to vector<1x4xf32>
    %193 = arith.maximumf %191, %192 : vector<1x4xf32>
    %c0_98 = arith.constant 0 : index
    %c0_99 = arith.constant 0 : index
    %c0_100 = arith.constant 0 : index
    %194 = vector.load %arg5[%c0_98, %c0_99, %c0_100] : memref<2x16x4xf32, #tpu.memory_space<vmem>>, vector<1x16x4xf32>
    %195 = vector.shape_cast %194 : vector<1x16x4xf32> to vector<16x4xf32>
    %196 = vector.broadcast %193 : vector<1x4xf32> to vector<16x4xf32>
    %197 = arith.mulf %195, %196 : vector<16x4xf32>
    %cst_101 = arith.constant dense<0.000000e+00> : vector<16xf32>
    %198 = vector.multi_reduction <add>, %197, %cst_101 [1] : vector<16x4xf32> to vector<16xf32>
    %199 = vector.shape_cast %198 : vector<16xf32> to vector<16x1xf32>
    %cst_102 = arith.constant 0.000000e+00 : f32
    %200 = vector.broadcast %cst_102 : f32 to vector<16x1xf32>
    %201 = arith.subf %200, %199 : vector<16x1xf32>
    %202 = math.exp %201 : vector<16x1xf32>
    %cst_103 = arith.constant 1.000000e+00 : f32
    %203 = vector.broadcast %cst_103 : f32 to vector<16x1xf32>
    %204 = arith.addf %203, %202 : vector<16x1xf32>
    %205 = tpu.reciprocal %204 {approx = true} : vector<16x1xf32> -> vector<16x1xf32>
    %206 = vector.broadcast %205 : vector<16x1xf32> to vector<16x256xf32>
    %207 = arith.mulf %181, %206 : vector<16x256xf32>
    %208 = tpu.concatenate %180, %207 in 1 : vector<16x256xf32>, vector<16x256xf32> -> vector<16x512xf32>
    %209 = arith.addf %208, %59 : vector<16x512xf32>
    %c1 = arith.constant 1 : index
    %c0_104 = arith.constant 0 : index
    %c0_105 = arith.constant 0 : index
    %210 = vector.load %arg2[%c1, %c0_104, %c0_105] : memref<2x16x144xbf16, #tpu.memory_space<vmem>>, vector<1x16x144xbf16>
    %211 = vector.shape_cast %210 : vector<1x16x144xbf16> to vector<16x144xbf16>
    %c17_i32_106 = arith.constant 17 : i32
    %212 = tpu.dynamic_rotate %209 by %c17_i32_106 dim 1 : vector<16x512xf32>, i32 -> vector<16x512xf32>
    %213 = vector.broadcast %14 : vector<1x512xf32> to vector<16x512xf32>
    %214 = arith.mulf %212, %213 : vector<16x512xf32>
    %215 = arith.truncf %214 : vector<16x512xf32> to vector<16x512xbf16>
    %c0_107 = arith.constant 0 : index
    %c0_108 = arith.constant 0 : index
    %216 = vector.load %arg8[%c0_107, %c0_108] : memref<144x512xbf16, #tpu.memory_space<vmem>>, vector<16x512xbf16>
    tpu.vector_store %arg8[%c0_107, %c0_108], %215 {strides = array<i32>} : memref<144x512xbf16, #tpu.memory_space<vmem>>, vector<16x512xbf16>,
    %c16_i32_109 = arith.constant 16 : i32
    %217 = tpu.dynamic_rotate %209 by %c16_i32_109 dim 1 : vector<16x512xf32>, i32 -> vector<16x512xf32>
    %218 = vector.broadcast %19 : vector<1x512xf32> to vector<16x512xf32>
    %219 = arith.mulf %217, %218 : vector<16x512xf32>
    %220 = arith.truncf %219 : vector<16x512xf32> to vector<16x512xbf16>
    %c16_110 = arith.constant 16 : index
    %c0_111 = arith.constant 0 : index
    %221 = vector.load %arg8[%c16_110, %c0_111] : memref<144x512xbf16, #tpu.memory_space<vmem>>, vector<16x512xbf16>
    tpu.vector_store %arg8[%c16_110, %c0_111], %220 {strides = array<i32>} : memref<144x512xbf16, #tpu.memory_space<vmem>>, vector<16x512xbf16>,
    %c15_i32_112 = arith.constant 15 : i32
    %222 = tpu.dynamic_rotate %209 by %c15_i32_112 dim 1 : vector<16x512xf32>, i32 -> vector<16x512xf32>
    %223 = vector.broadcast %27 : vector<1x512xf32> to vector<16x512xf32>
    %224 = arith.mulf %222, %223 : vector<16x512xf32>
    %225 = arith.truncf %224 : vector<16x512xf32> to vector<16x512xbf16>
    %c32_113 = arith.constant 32 : index
    %c0_114 = arith.constant 0 : index
    %226 = vector.load %arg8[%c32_113, %c0_114] : memref<144x512xbf16, #tpu.memory_space<vmem>>, vector<16x512xbf16>
    tpu.vector_store %arg8[%c32_113, %c0_114], %225 {strides = array<i32>} : memref<144x512xbf16, #tpu.memory_space<vmem>>, vector<16x512xbf16>,
    %c1_i32_115 = arith.constant 1 : i32
    %227 = tpu.dynamic_rotate %209 by %c1_i32_115 dim 1 : vector<16x512xf32>, i32 -> vector<16x512xf32>
    %228 = vector.broadcast %32 : vector<1x512xf32> to vector<16x512xf32>
    %229 = arith.mulf %227, %228 : vector<16x512xf32>
    %230 = arith.truncf %229 : vector<16x512xf32> to vector<16x512xbf16>
    %c48_116 = arith.constant 48 : index
    %c0_117 = arith.constant 0 : index
    %231 = vector.load %arg8[%c48_116, %c0_117] : memref<144x512xbf16, #tpu.memory_space<vmem>>, vector<16x512xbf16>
    tpu.vector_store %arg8[%c48_116, %c0_117], %230 {strides = array<i32>} : memref<144x512xbf16, #tpu.memory_space<vmem>>, vector<16x512xbf16>,
    %232 = arith.truncf %209 : vector<16x512xf32> to vector<16x512xbf16>
    %c64_118 = arith.constant 64 : index
    %c0_119 = arith.constant 0 : index
    %233 = vector.load %arg8[%c64_118, %c0_119] : memref<144x512xbf16, #tpu.memory_space<vmem>>, vector<16x512xbf16>
    tpu.vector_store %arg8[%c64_118, %c0_119], %232 {strides = array<i32>} : memref<144x512xbf16, #tpu.memory_space<vmem>>, vector<16x512xbf16>,
    %c511_i32_120 = arith.constant 511 : i32
    %234 = tpu.dynamic_rotate %209 by %c511_i32_120 dim 1 : vector<16x512xf32>, i32 -> vector<16x512xf32>
    %235 = vector.broadcast %37 : vector<1x512xf32> to vector<16x512xf32>
    %236 = arith.mulf %234, %235 : vector<16x512xf32>
    %237 = arith.truncf %236 : vector<16x512xf32> to vector<16x512xbf16>
    %c80_121 = arith.constant 80 : index
    %c0_122 = arith.constant 0 : index
    %238 = vector.load %arg8[%c80_121, %c0_122] : memref<144x512xbf16, #tpu.memory_space<vmem>>, vector<16x512xbf16>
    tpu.vector_store %arg8[%c80_121, %c0_122], %237 {strides = array<i32>} : memref<144x512xbf16, #tpu.memory_space<vmem>>, vector<16x512xbf16>,
    %c497_i32_123 = arith.constant 497 : i32
    %239 = tpu.dynamic_rotate %209 by %c497_i32_123 dim 1 : vector<16x512xf32>, i32 -> vector<16x512xf32>
    %240 = vector.broadcast %45 : vector<1x512xf32> to vector<16x512xf32>
    %241 = arith.mulf %239, %240 : vector<16x512xf32>
    %242 = arith.truncf %241 : vector<16x512xf32> to vector<16x512xbf16>
    %c96_124 = arith.constant 96 : index
    %c0_125 = arith.constant 0 : index
    %243 = vector.load %arg8[%c96_124, %c0_125] : memref<144x512xbf16, #tpu.memory_space<vmem>>, vector<16x512xbf16>
    tpu.vector_store %arg8[%c96_124, %c0_125], %242 {strides = array<i32>} : memref<144x512xbf16, #tpu.memory_space<vmem>>, vector<16x512xbf16>,
    %c496_i32_126 = arith.constant 496 : i32
    %244 = tpu.dynamic_rotate %209 by %c496_i32_126 dim 1 : vector<16x512xf32>, i32 -> vector<16x512xf32>
    %245 = vector.broadcast %50 : vector<1x512xf32> to vector<16x512xf32>
    %246 = arith.mulf %244, %245 : vector<16x512xf32>
    %247 = arith.truncf %246 : vector<16x512xf32> to vector<16x512xbf16>
    %c112_127 = arith.constant 112 : index
    %c0_128 = arith.constant 0 : index
    %248 = vector.load %arg8[%c112_127, %c0_128] : memref<144x512xbf16, #tpu.memory_space<vmem>>, vector<16x512xbf16>
    tpu.vector_store %arg8[%c112_127, %c0_128], %247 {strides = array<i32>} : memref<144x512xbf16, #tpu.memory_space<vmem>>, vector<16x512xbf16>,
    %c495_i32_129 = arith.constant 495 : i32
    %249 = tpu.dynamic_rotate %209 by %c495_i32_129 dim 1 : vector<16x512xf32>, i32 -> vector<16x512xf32>
    %250 = vector.broadcast %58 : vector<1x512xf32> to vector<16x512xf32>
    %251 = arith.mulf %249, %250 : vector<16x512xf32>
    %252 = arith.truncf %251 : vector<16x512xf32> to vector<16x512xbf16>
    %c128_130 = arith.constant 128 : index
    %c0_131 = arith.constant 0 : index
    %253 = vector.load %arg8[%c128_130, %c0_131] : memref<144x512xbf16, #tpu.memory_space<vmem>>, vector<16x512xbf16>
    tpu.vector_store %arg8[%c128_130, %c0_131], %252 {strides = array<i32>} : memref<144x512xbf16, #tpu.memory_space<vmem>>, vector<16x512xbf16>,
    %c0_132 = arith.constant 0 : index
    %c0_133 = arith.constant 0 : index
    %254 = vector.load %arg8[%c0_132, %c0_133] : memref<144x512xbf16, #tpu.memory_space<vmem>>, vector<144x512xbf16>
    %cst_134 = arith.constant dense<0.000000e+00> : vector<16x512xf32>
    %255 = tpu.matmul %211, %254, %cst_134 {dimension_numbers = #tpu.dot_dimension_numbers<[1], [0], [0], [1], [0, 0, 1, 1], [], []>} : vector<16x144xbf16>, vector<144x512xbf16>, vector<16x512xf32> -> vector<16x512xf32>
    %cst_135 = arith.constant 0.000000e+00 : f32
    %256 = vector.broadcast %cst_135 : f32 to vector<16x512xf32>
    %257 = arith.maximumf %255, %256 : vector<16x512xf32>
    %c1_136 = arith.constant 1 : index
    %c0_137 = arith.constant 0 : index
    %c0_138 = arith.constant 0 : index
    %258 = vector.load %arg3[%c1_136, %c0_137, %c0_138] : memref<2x16x144xbf16, #tpu.memory_space<vmem>>, vector<1x16x144xbf16>
    %259 = vector.shape_cast %258 : vector<1x16x144xbf16> to vector<16x144xbf16>
    %c17_i32_139 = arith.constant 17 : i32
    %260 = tpu.dynamic_rotate %257 by %c17_i32_139 dim 1 : vector<16x512xf32>, i32 -> vector<16x512xf32>
    %261 = vector.broadcast %14 : vector<1x512xf32> to vector<16x512xf32>
    %262 = arith.mulf %260, %261 : vector<16x512xf32>
    %263 = arith.truncf %262 : vector<16x512xf32> to vector<16x512xbf16>
    %c0_140 = arith.constant 0 : index
    %c0_141 = arith.constant 0 : index
    %264 = vector.load %arg8[%c0_140, %c0_141] : memref<144x512xbf16, #tpu.memory_space<vmem>>, vector<16x512xbf16>
    tpu.vector_store %arg8[%c0_140, %c0_141], %263 {strides = array<i32>} : memref<144x512xbf16, #tpu.memory_space<vmem>>, vector<16x512xbf16>,
    %c16_i32_142 = arith.constant 16 : i32
    %265 = tpu.dynamic_rotate %257 by %c16_i32_142 dim 1 : vector<16x512xf32>, i32 -> vector<16x512xf32>
    %266 = vector.broadcast %19 : vector<1x512xf32> to vector<16x512xf32>
    %267 = arith.mulf %265, %266 : vector<16x512xf32>
    %268 = arith.truncf %267 : vector<16x512xf32> to vector<16x512xbf16>
    %c16_143 = arith.constant 16 : index
    %c0_144 = arith.constant 0 : index
    %269 = vector.load %arg8[%c16_143, %c0_144] : memref<144x512xbf16, #tpu.memory_space<vmem>>, vector<16x512xbf16>
    tpu.vector_store %arg8[%c16_143, %c0_144], %268 {strides = array<i32>} : memref<144x512xbf16, #tpu.memory_space<vmem>>, vector<16x512xbf16>,
    %c15_i32_145 = arith.constant 15 : i32
    %270 = tpu.dynamic_rotate %257 by %c15_i32_145 dim 1 : vector<16x512xf32>, i32 -> vector<16x512xf32>
    %271 = vector.broadcast %27 : vector<1x512xf32> to vector<16x512xf32>
    %272 = arith.mulf %270, %271 : vector<16x512xf32>
    %273 = arith.truncf %272 : vector<16x512xf32> to vector<16x512xbf16>
    %c32_146 = arith.constant 32 : index
    %c0_147 = arith.constant 0 : index
    %274 = vector.load %arg8[%c32_146, %c0_147] : memref<144x512xbf16, #tpu.memory_space<vmem>>, vector<16x512xbf16>
    tpu.vector_store %arg8[%c32_146, %c0_147], %273 {strides = array<i32>} : memref<144x512xbf16, #tpu.memory_space<vmem>>, vector<16x512xbf16>,
    %c1_i32_148 = arith.constant 1 : i32
    %275 = tpu.dynamic_rotate %257 by %c1_i32_148 dim 1 : vector<16x512xf32>, i32 -> vector<16x512xf32>
    %276 = vector.broadcast %32 : vector<1x512xf32> to vector<16x512xf32>
    %277 = arith.mulf %275, %276 : vector<16x512xf32>
    %278 = arith.truncf %277 : vector<16x512xf32> to vector<16x512xbf16>
    %c48_149 = arith.constant 48 : index
    %c0_150 = arith.constant 0 : index
    %279 = vector.load %arg8[%c48_149, %c0_150] : memref<144x512xbf16, #tpu.memory_space<vmem>>, vector<16x512xbf16>
    tpu.vector_store %arg8[%c48_149, %c0_150], %278 {strides = array<i32>} : memref<144x512xbf16, #tpu.memory_space<vmem>>, vector<16x512xbf16>,
    %280 = arith.truncf %257 : vector<16x512xf32> to vector<16x512xbf16>
    %c64_151 = arith.constant 64 : index
    %c0_152 = arith.constant 0 : index
    %281 = vector.load %arg8[%c64_151, %c0_152] : memref<144x512xbf16, #tpu.memory_space<vmem>>, vector<16x512xbf16>
    tpu.vector_store %arg8[%c64_151, %c0_152], %280 {strides = array<i32>} : memref<144x512xbf16, #tpu.memory_space<vmem>>, vector<16x512xbf16>,
    %c511_i32_153 = arith.constant 511 : i32
    %282 = tpu.dynamic_rotate %257 by %c511_i32_153 dim 1 : vector<16x512xf32>, i32 -> vector<16x512xf32>
    %283 = vector.broadcast %37 : vector<1x512xf32> to vector<16x512xf32>
    %284 = arith.mulf %282, %283 : vector<16x512xf32>
    %285 = arith.truncf %284 : vector<16x512xf32> to vector<16x512xbf16>
    %c80_154 = arith.constant 80 : index
    %c0_155 = arith.constant 0 : index
    %286 = vector.load %arg8[%c80_154, %c0_155] : memref<144x512xbf16, #tpu.memory_space<vmem>>, vector<16x512xbf16>
    tpu.vector_store %arg8[%c80_154, %c0_155], %285 {strides = array<i32>} : memref<144x512xbf16, #tpu.memory_space<vmem>>, vector<16x512xbf16>,
    %c497_i32_156 = arith.constant 497 : i32
    %287 = tpu.dynamic_rotate %257 by %c497_i32_156 dim 1 : vector<16x512xf32>, i32 -> vector<16x512xf32>
    %288 = vector.broadcast %45 : vector<1x512xf32> to vector<16x512xf32>
    %289 = arith.mulf %287, %288 : vector<16x512xf32>
    %290 = arith.truncf %289 : vector<16x512xf32> to vector<16x512xbf16>
    %c96_157 = arith.constant 96 : index
    %c0_158 = arith.constant 0 : index
    %291 = vector.load %arg8[%c96_157, %c0_158] : memref<144x512xbf16, #tpu.memory_space<vmem>>, vector<16x512xbf16>
    tpu.vector_store %arg8[%c96_157, %c0_158], %290 {strides = array<i32>} : memref<144x512xbf16, #tpu.memory_space<vmem>>, vector<16x512xbf16>,
    %c496_i32_159 = arith.constant 496 : i32
    %292 = tpu.dynamic_rotate %257 by %c496_i32_159 dim 1 : vector<16x512xf32>, i32 -> vector<16x512xf32>
    %293 = vector.broadcast %50 : vector<1x512xf32> to vector<16x512xf32>
    %294 = arith.mulf %292, %293 : vector<16x512xf32>
    %295 = arith.truncf %294 : vector<16x512xf32> to vector<16x512xbf16>
    %c112_160 = arith.constant 112 : index
    %c0_161 = arith.constant 0 : index
    %296 = vector.load %arg8[%c112_160, %c0_161] : memref<144x512xbf16, #tpu.memory_space<vmem>>, vector<16x512xbf16>
    tpu.vector_store %arg8[%c112_160, %c0_161], %295 {strides = array<i32>} : memref<144x512xbf16, #tpu.memory_space<vmem>>, vector<16x512xbf16>,
    %c495_i32_162 = arith.constant 495 : i32
    %297 = tpu.dynamic_rotate %257 by %c495_i32_162 dim 1 : vector<16x512xf32>, i32 -> vector<16x512xf32>
    %298 = vector.broadcast %58 : vector<1x512xf32> to vector<16x512xf32>
    %299 = arith.mulf %297, %298 : vector<16x512xf32>
    %300 = arith.truncf %299 : vector<16x512xf32> to vector<16x512xbf16>
    %c128_163 = arith.constant 128 : index
    %c0_164 = arith.constant 0 : index
    %301 = vector.load %arg8[%c128_163, %c0_164] : memref<144x512xbf16, #tpu.memory_space<vmem>>, vector<16x512xbf16>
    tpu.vector_store %arg8[%c128_163, %c0_164], %300 {strides = array<i32>} : memref<144x512xbf16, #tpu.memory_space<vmem>>, vector<16x512xbf16>,
    %c0_165 = arith.constant 0 : index
    %c0_166 = arith.constant 0 : index
    %302 = vector.load %arg8[%c0_165, %c0_166] : memref<144x512xbf16, #tpu.memory_space<vmem>>, vector<144x512xbf16>
    %cst_167 = arith.constant dense<0.000000e+00> : vector<16x512xf32>
    %303 = tpu.matmul %259, %302, %cst_167 {dimension_numbers = #tpu.dot_dimension_numbers<[1], [0], [0], [1], [0, 0, 1, 1], [], []>} : vector<16x144xbf16>, vector<144x512xbf16>, vector<16x512xf32> -> vector<16x512xf32>
    %304 = vector.extract_strided_slice %303 {offsets = [0, 0], sizes = [16, 256], strides = [1, 1]} : vector<16x512xf32> to vector<16x256xf32>
    %cst_168 = arith.constant dense<0.000000e+00> : vector<16xf32>
    %305 = vector.multi_reduction <add>, %304, %cst_168 [1] : vector<16x256xf32> to vector<16xf32>
    %306 = vector.shape_cast %305 : vector<16xf32> to vector<16x1xf32>
    %cst_169 = arith.constant 2.560000e+02 : f32
    %307 = vector.broadcast %cst_169 : f32 to vector<16x1xf32>
    %308 = arith.divf %306, %307 : vector<16x1xf32>
    %c1_170 = arith.constant 1 : index
    %c0_171 = arith.constant 0 : index
    %c0_172 = arith.constant 0 : index
    %309 = vector.load %arg4[%c1_170, %c0_171, %c0_172] : memref<2x16x4xf32, #tpu.memory_space<vmem>>, vector<1x16x4xf32>
    %310 = vector.shape_cast %309 : vector<1x16x4xf32> to vector<16x4xf32>
    %311 = vector.broadcast %308 : vector<16x1xf32> to vector<16x4xf32>
    %312 = arith.mulf %311, %310 : vector<16x4xf32>
    %cst_173 = arith.constant dense<0.000000e+00> : vector<4xf32>
    %313 = vector.multi_reduction <add>, %312, %cst_173 [0] : vector<16x4xf32> to vector<4xf32>
    %314 = vector.shape_cast %313 : vector<4xf32> to vector<1x4xf32>
    %cst_174 = arith.constant 0.000000e+00 : f32
    %315 = vector.broadcast %cst_174 : f32 to vector<1x4xf32>
    %316 = arith.maximumf %314, %315 : vector<1x4xf32>
    %c1_175 = arith.constant 1 : index
    %c0_176 = arith.constant 0 : index
    %c0_177 = arith.constant 0 : index
    %317 = vector.load %arg5[%c1_175, %c0_176, %c0_177] : memref<2x16x4xf32, #tpu.memory_space<vmem>>, vector<1x16x4xf32>
    %318 = vector.shape_cast %317 : vector<1x16x4xf32> to vector<16x4xf32>
    %319 = vector.broadcast %316 : vector<1x4xf32> to vector<16x4xf32>
    %320 = arith.mulf %318, %319 : vector<16x4xf32>
    %cst_178 = arith.constant dense<0.000000e+00> : vector<16xf32>
    %321 = vector.multi_reduction <add>, %320, %cst_178 [1] : vector<16x4xf32> to vector<16xf32>
    %322 = vector.shape_cast %321 : vector<16xf32> to vector<16x1xf32>
    %cst_179 = arith.constant 0.000000e+00 : f32
    %323 = vector.broadcast %cst_179 : f32 to vector<16x1xf32>
    %324 = arith.subf %323, %322 : vector<16x1xf32>
    %325 = math.exp %324 : vector<16x1xf32>
    %cst_180 = arith.constant 1.000000e+00 : f32
    %326 = vector.broadcast %cst_180 : f32 to vector<16x1xf32>
    %327 = arith.addf %326, %325 : vector<16x1xf32>
    %328 = tpu.reciprocal %327 {approx = true} : vector<16x1xf32> -> vector<16x1xf32>
    %329 = vector.broadcast %328 : vector<16x1xf32> to vector<16x256xf32>
    %330 = arith.mulf %304, %329 : vector<16x256xf32>
    %331 = vector.extract_strided_slice %303 {offsets = [0, 256], sizes = [16, 256], strides = [1, 1]} : vector<16x512xf32> to vector<16x256xf32>
    %cst_181 = arith.constant dense<0.000000e+00> : vector<16xf32>
    %332 = vector.multi_reduction <add>, %331, %cst_181 [1] : vector<16x256xf32> to vector<16xf32>
    %333 = vector.shape_cast %332 : vector<16xf32> to vector<16x1xf32>
    %cst_182 = arith.constant 2.560000e+02 : f32
    %334 = vector.broadcast %cst_182 : f32 to vector<16x1xf32>
    %335 = arith.divf %333, %334 : vector<16x1xf32>
    %c1_183 = arith.constant 1 : index
    %c0_184 = arith.constant 0 : index
    %c0_185 = arith.constant 0 : index
    %336 = vector.load %arg4[%c1_183, %c0_184, %c0_185] : memref<2x16x4xf32, #tpu.memory_space<vmem>>, vector<1x16x4xf32>
    %337 = vector.shape_cast %336 : vector<1x16x4xf32> to vector<16x4xf32>
    %338 = vector.broadcast %335 : vector<16x1xf32> to vector<16x4xf32>
    %339 = arith.mulf %338, %337 : vector<16x4xf32>
    %cst_186 = arith.constant dense<0.000000e+00> : vector<4xf32>
    %340 = vector.multi_reduction <add>, %339, %cst_186 [0] : vector<16x4xf32> to vector<4xf32>
    %341 = vector.shape_cast %340 : vector<4xf32> to vector<1x4xf32>
    %cst_187 = arith.constant 0.000000e+00 : f32
    %342 = vector.broadcast %cst_187 : f32 to vector<1x4xf32>
    %343 = arith.maximumf %341, %342 : vector<1x4xf32>
    %c1_188 = arith.constant 1 : index
    %c0_189 = arith.constant 0 : index
    %c0_190 = arith.constant 0 : index
    %344 = vector.load %arg5[%c1_188, %c0_189, %c0_190] : memref<2x16x4xf32, #tpu.memory_space<vmem>>, vector<1x16x4xf32>
    %345 = vector.shape_cast %344 : vector<1x16x4xf32> to vector<16x4xf32>
    %346 = vector.broadcast %343 : vector<1x4xf32> to vector<16x4xf32>
    %347 = arith.mulf %345, %346 : vector<16x4xf32>
    %cst_191 = arith.constant dense<0.000000e+00> : vector<16xf32>
    %348 = vector.multi_reduction <add>, %347, %cst_191 [1] : vector<16x4xf32> to vector<16xf32>
    %349 = vector.shape_cast %348 : vector<16xf32> to vector<16x1xf32>
    %cst_192 = arith.constant 0.000000e+00 : f32
    %350 = vector.broadcast %cst_192 : f32 to vector<16x1xf32>
    %351 = arith.subf %350, %349 : vector<16x1xf32>
    %352 = math.exp %351 : vector<16x1xf32>
    %cst_193 = arith.constant 1.000000e+00 : f32
    %353 = vector.broadcast %cst_193 : f32 to vector<16x1xf32>
    %354 = arith.addf %353, %352 : vector<16x1xf32>
    %355 = tpu.reciprocal %354 {approx = true} : vector<16x1xf32> -> vector<16x1xf32>
    %356 = vector.broadcast %355 : vector<16x1xf32> to vector<16x256xf32>
    %357 = arith.mulf %331, %356 : vector<16x256xf32>
    %358 = tpu.concatenate %330, %357 in 1 : vector<16x256xf32>, vector<16x256xf32> -> vector<16x512xf32>
    %359 = arith.addf %358, %209 : vector<16x512xf32>
    %c0_194 = arith.constant 0 : index
    %c0_195 = arith.constant 0 : index
    %360 = vector.load %arg6[%c0_194, %c0_195] : memref<16x144xbf16, #tpu.memory_space<vmem>>, vector<16x144xbf16>
    %c17_i32_196 = arith.constant 17 : i32
    %361 = tpu.dynamic_rotate %359 by %c17_i32_196 dim 1 : vector<16x512xf32>, i32 -> vector<16x512xf32>
    %362 = vector.broadcast %14 : vector<1x512xf32> to vector<16x512xf32>
    %363 = arith.mulf %361, %362 : vector<16x512xf32>
    %364 = arith.truncf %363 : vector<16x512xf32> to vector<16x512xbf16>
    %c0_197 = arith.constant 0 : index
    %c0_198 = arith.constant 0 : index
    %365 = vector.load %arg8[%c0_197, %c0_198] : memref<144x512xbf16, #tpu.memory_space<vmem>>, vector<16x512xbf16>
    tpu.vector_store %arg8[%c0_197, %c0_198], %364 {strides = array<i32>} : memref<144x512xbf16, #tpu.memory_space<vmem>>, vector<16x512xbf16>,
    %c16_i32_199 = arith.constant 16 : i32
    %366 = tpu.dynamic_rotate %359 by %c16_i32_199 dim 1 : vector<16x512xf32>, i32 -> vector<16x512xf32>
    %367 = vector.broadcast %19 : vector<1x512xf32> to vector<16x512xf32>
    %368 = arith.mulf %366, %367 : vector<16x512xf32>
    %369 = arith.truncf %368 : vector<16x512xf32> to vector<16x512xbf16>
    %c16_200 = arith.constant 16 : index
    %c0_201 = arith.constant 0 : index
    %370 = vector.load %arg8[%c16_200, %c0_201] : memref<144x512xbf16, #tpu.memory_space<vmem>>, vector<16x512xbf16>
    tpu.vector_store %arg8[%c16_200, %c0_201], %369 {strides = array<i32>} : memref<144x512xbf16, #tpu.memory_space<vmem>>, vector<16x512xbf16>,
    %c15_i32_202 = arith.constant 15 : i32
    %371 = tpu.dynamic_rotate %359 by %c15_i32_202 dim 1 : vector<16x512xf32>, i32 -> vector<16x512xf32>
    %372 = vector.broadcast %27 : vector<1x512xf32> to vector<16x512xf32>
    %373 = arith.mulf %371, %372 : vector<16x512xf32>
    %374 = arith.truncf %373 : vector<16x512xf32> to vector<16x512xbf16>
    %c32_203 = arith.constant 32 : index
    %c0_204 = arith.constant 0 : index
    %375 = vector.load %arg8[%c32_203, %c0_204] : memref<144x512xbf16, #tpu.memory_space<vmem>>, vector<16x512xbf16>
    tpu.vector_store %arg8[%c32_203, %c0_204], %374 {strides = array<i32>} : memref<144x512xbf16, #tpu.memory_space<vmem>>, vector<16x512xbf16>,
    %c1_i32_205 = arith.constant 1 : i32
    %376 = tpu.dynamic_rotate %359 by %c1_i32_205 dim 1 : vector<16x512xf32>, i32 -> vector<16x512xf32>
    %377 = vector.broadcast %32 : vector<1x512xf32> to vector<16x512xf32>
    %378 = arith.mulf %376, %377 : vector<16x512xf32>
    %379 = arith.truncf %378 : vector<16x512xf32> to vector<16x512xbf16>
    %c48_206 = arith.constant 48 : index
    %c0_207 = arith.constant 0 : index
    %380 = vector.load %arg8[%c48_206, %c0_207] : memref<144x512xbf16, #tpu.memory_space<vmem>>, vector<16x512xbf16>
    tpu.vector_store %arg8[%c48_206, %c0_207], %379 {strides = array<i32>} : memref<144x512xbf16, #tpu.memory_space<vmem>>, vector<16x512xbf16>,
    %381 = arith.truncf %359 : vector<16x512xf32> to vector<16x512xbf16>
    %c64_208 = arith.constant 64 : index
    %c0_209 = arith.constant 0 : index
    %382 = vector.load %arg8[%c64_208, %c0_209] : memref<144x512xbf16, #tpu.memory_space<vmem>>, vector<16x512xbf16>
    tpu.vector_store %arg8[%c64_208, %c0_209], %381 {strides = array<i32>} : memref<144x512xbf16, #tpu.memory_space<vmem>>, vector<16x512xbf16>,
    %c511_i32_210 = arith.constant 511 : i32
    %383 = tpu.dynamic_rotate %359 by %c511_i32_210 dim 1 : vector<16x512xf32>, i32 -> vector<16x512xf32>
    %384 = vector.broadcast %37 : vector<1x512xf32> to vector<16x512xf32>
    %385 = arith.mulf %383, %384 : vector<16x512xf32>
    %386 = arith.truncf %385 : vector<16x512xf32> to vector<16x512xbf16>
    %c80_211 = arith.constant 80 : index
    %c0_212 = arith.constant 0 : index
    %387 = vector.load %arg8[%c80_211, %c0_212] : memref<144x512xbf16, #tpu.memory_space<vmem>>, vector<16x512xbf16>
    tpu.vector_store %arg8[%c80_211, %c0_212], %386 {strides = array<i32>} : memref<144x512xbf16, #tpu.memory_space<vmem>>, vector<16x512xbf16>,
    %c497_i32_213 = arith.constant 497 : i32
    %388 = tpu.dynamic_rotate %359 by %c497_i32_213 dim 1 : vector<16x512xf32>, i32 -> vector<16x512xf32>
    %389 = vector.broadcast %45 : vector<1x512xf32> to vector<16x512xf32>
    %390 = arith.mulf %388, %389 : vector<16x512xf32>
    %391 = arith.truncf %390 : vector<16x512xf32> to vector<16x512xbf16>
    %c96_214 = arith.constant 96 : index
    %c0_215 = arith.constant 0 : index
    %392 = vector.load %arg8[%c96_214, %c0_215] : memref<144x512xbf16, #tpu.memory_space<vmem>>, vector<16x512xbf16>
    tpu.vector_store %arg8[%c96_214, %c0_215], %391 {strides = array<i32>} : memref<144x512xbf16, #tpu.memory_space<vmem>>, vector<16x512xbf16>,
    %c496_i32_216 = arith.constant 496 : i32
    %393 = tpu.dynamic_rotate %359 by %c496_i32_216 dim 1 : vector<16x512xf32>, i32 -> vector<16x512xf32>
    %394 = vector.broadcast %50 : vector<1x512xf32> to vector<16x512xf32>
    %395 = arith.mulf %393, %394 : vector<16x512xf32>
    %396 = arith.truncf %395 : vector<16x512xf32> to vector<16x512xbf16>
    %c112_217 = arith.constant 112 : index
    %c0_218 = arith.constant 0 : index
    %397 = vector.load %arg8[%c112_217, %c0_218] : memref<144x512xbf16, #tpu.memory_space<vmem>>, vector<16x512xbf16>
    tpu.vector_store %arg8[%c112_217, %c0_218], %396 {strides = array<i32>} : memref<144x512xbf16, #tpu.memory_space<vmem>>, vector<16x512xbf16>,
    %c495_i32_219 = arith.constant 495 : i32
    %398 = tpu.dynamic_rotate %359 by %c495_i32_219 dim 1 : vector<16x512xf32>, i32 -> vector<16x512xf32>
    %399 = vector.broadcast %58 : vector<1x512xf32> to vector<16x512xf32>
    %400 = arith.mulf %398, %399 : vector<16x512xf32>
    %401 = arith.truncf %400 : vector<16x512xf32> to vector<16x512xbf16>
    %c128_220 = arith.constant 128 : index
    %c0_221 = arith.constant 0 : index
    %402 = vector.load %arg8[%c128_220, %c0_221] : memref<144x512xbf16, #tpu.memory_space<vmem>>, vector<16x512xbf16>
    tpu.vector_store %arg8[%c128_220, %c0_221], %401 {strides = array<i32>} : memref<144x512xbf16, #tpu.memory_space<vmem>>, vector<16x512xbf16>,
    %c0_222 = arith.constant 0 : index
    %c0_223 = arith.constant 0 : index
    %403 = vector.load %arg8[%c0_222, %c0_223] : memref<144x512xbf16, #tpu.memory_space<vmem>>, vector<144x512xbf16>
    %cst_224 = arith.constant dense<0.000000e+00> : vector<16x512xf32>
    %404 = tpu.matmul %360, %403, %cst_224 {dimension_numbers = #tpu.dot_dimension_numbers<[1], [0], [0], [1], [0, 0, 1, 1], [], []>} : vector<16x144xbf16>, vector<144x512xbf16>, vector<16x512xf32> -> vector<16x512xf32>
    %405 = arith.addf %404, %59 : vector<16x512xf32>
    %c0_225 = arith.constant 0 : index
    %c0_226 = arith.constant 0 : index
    %406 = vector.load %arg7[%c0_225, %c0_226] : memref<16x512xf32, #tpu.memory_space<vmem>>, vector<16x512xf32>
    tpu.vector_store %arg7[%c0_225, %c0_226], %405 {strides = array<i32>} : memref<16x512xf32, #tpu.memory_space<vmem>>, vector<16x512xf32>,
    return
  }
  func.func @transform_0(%arg0: i32) -> (i32, i32) {
    %c0_i32 = arith.constant 0 : i32
    %c0_i32_0 = arith.constant 0 : i32
    %c0_i32_1 = arith.constant 0 : i32
    return %c0_i32, %c0_i32_0 : i32, i32
  }
  func.func @transform_1(%arg0: i32) -> (i32, i32, i32) {
    %c0_i32 = arith.constant 0 : i32
    %c0_i32_0 = arith.constant 0 : i32
    %c0_i32_1 = arith.constant 0 : i32
    %c0_i32_2 = arith.constant 0 : i32
    return %c0_i32, %c0_i32_0, %c0_i32_1 : i32, i32, i32
  }
  func.func @transform_2(%arg0: i32) -> (i32, i32, i32) {
    %c0_i32 = arith.constant 0 : i32
    %c0_i32_0 = arith.constant 0 : i32
    %c0_i32_1 = arith.constant 0 : i32
    %c0_i32_2 = arith.constant 0 : i32
    return %c0_i32, %c0_i32_0, %c0_i32_1 : i32, i32, i32
  }
  func.func @transform_3(%arg0: i32) -> (i32, i32, i32) {
    %c0_i32 = arith.constant 0 : i32
    %c0_i32_0 = arith.constant 0 : i32
    %c0_i32_1 = arith.constant 0 : i32
    %c0_i32_2 = arith.constant 0 : i32
    return %c0_i32, %c0_i32_0, %c0_i32_1 : i32, i32, i32
  }
  func.func @transform_4(%arg0: i32) -> (i32, i32, i32) {
    %c0_i32 = arith.constant 0 : i32
    %c0_i32_0 = arith.constant 0 : i32
    %c0_i32_1 = arith.constant 0 : i32
    %c0_i32_2 = arith.constant 0 : i32
    return %c0_i32, %c0_i32_0, %c0_i32_1 : i32, i32, i32
  }
  func.func @transform_5(%arg0: i32) -> (i32, i32) {
    %c0_i32 = arith.constant 0 : i32
    %c0_i32_0 = arith.constant 0 : i32
    %c0_i32_1 = arith.constant 0 : i32
    return %c0_i32, %c0_i32_0 : i32, i32
  }
  func.func @transform_6(%arg0: i32) -> (i32, i32) {
    %c0_i32 = arith.constant 0 : i32
    %c0_i32_0 = arith.constant 0 : i32
    %c0_i32_1 = arith.constant 0 : i32
    return %c0_i32, %c0_i32_0 : i32, i32
  }
}

</mosaic_0001>

<llo_original>
// kernel: tpu_custom_call.1
$region0: #{tpu_custom_call.1}
  #allocation0 [shape = 'u32[]', space=smem, size = 0x4, offset = 0x4, fixed_abs, tag = 'smem constant byte address 0x4 - core index']
  #allocation1 [shape = 'u32[144,128]{1,0:T(1,128)}', space=vmem, size = 0x12000, scoped, tag = 'internal scratch']
  #allocation2 [shape = 'bf16[144,512]{1,0:T(16,128)(2,1)}', space=vmem, size = 0x24000, scoped, tag = 'scratch operand']
  %s0 = inlined_call_operand.vmem [shape: f32[16,512], index: 0, kind: input, shape index: {}]
  %s1 = inlined_call_operand.hbm [shape: bf16[2,16,144], index: 1, kind: input, shape index: {}]
  %s2 = inlined_call_operand.hbm [shape: bf16[2,16,144], index: 2, kind: input, shape index: {}]
  %s3 = inlined_call_operand.vmem [shape: f32[2,16,4], index: 3, kind: input, shape index: {}]
  %s4 = inlined_call_operand.vmem [shape: f32[2,16,4], index: 4, kind: input, shape index: {}]
  %s5 = inlined_call_operand.vmem [shape: bf16[16,144], index: 5, kind: input, shape index: {}]
  %s6 = inlined_call_operand.hbm [shape: f32[16,512], index: 6, kind: output, shape index: {}]
  %s7 = sld [smem:[#allocation0]]
  $region42: #{tpu_custom_call.1} parent=0
    _
  %s9 = ssub.s32 1, %s7
  %s10 = scalar_select 0, %s9, %s7
  $region1: #{tpu_custom_call.1} parent=0
    #allocation3 [shape = 'u8[16384]{0}', space=vmem, size = 0x4000, scoped, tag = 'input window, operand 1, single buffered']
    #allocation4 [shape = 's32[1]{0}', space=sflag, size = 0x4, scoped, tag = 'scoped memory for tpu_custom_call.1']
    #allocation5 [shape = 's32[1]{0}', space=sflag, size = 0x4, scoped, tag = 'scoped memory for tpu_custom_call.1']
    #allocation6 [shape = 'u8[16384]{0}', space=vmem, size = 0x4000, scoped, tag = 'input window, operand 2, single buffered']
    #allocation7 [shape = 's32[1]{0}', space=sflag, size = 0x4, scoped, tag = 'scoped memory for tpu_custom_call.1']
    #allocation8 [shape = 'u8[32768]{0}', space=vmem, size = 0x8000, scoped, tag = 'output window, operand 0, single buffered']
    %11 = vsyncpa [#allocation4], 0
    %12 = vsyncpa [#allocation7], 0
    %13 = vsyncpa [#allocation5], 0
    // Predicated region
    $region2: #{tpu_custom_call.1} parent=1 // pred_check
      _
    $region3: #{tpu_custom_call.1} parent=1 // pred_check_branch
      %15 = sbr.rel (0) target = $region5
    $region4: #{tpu_custom_call.1} parent=1 // pred_region
      _
    $region5: #{tpu_custom_call.1} parent=1 // pred_fallthru
      _
    // Predicated region
    $region6: #{tpu_custom_call.1} parent=1 // pred_check
      _
    $region7: #{tpu_custom_call.1} parent=1 // pred_check_branch
      %17 = sbr.rel (0) target = $region9
    $region8: #{tpu_custom_call.1} parent=1 // pred_region
      %s19 = ssub.s32 512, 512
      %20 = vsyncadd [#allocation4], %s19
      %s21 = sshll.u32 [#allocation3], 4
      %s22 = int_to_ptr.vmem [resolvable:$true] %s21
      %27 = dma.hbm_to_vmem [thread:$0]  %s1, 512, %s22, [#allocation4], 128, 128, 8
    $region9: #{tpu_custom_call.1} parent=1 // pred_fallthru
      _
    // Predicated region
    $region10: #{tpu_custom_call.1} parent=1 // pred_check
      _
    $region11: #{tpu_custom_call.1} parent=1 // pred_check_branch
      %29 = sbr.rel (0) target = $region13
    $region12: #{tpu_custom_call.1} parent=1 // pred_region
      %s31 = ssub.s32 512, 512
      %32 = vsyncadd [#allocation7], %s31
      %s33 = sshll.u32 [#allocation6], 4
      %s34 = int_to_ptr.vmem [resolvable:$true] %s33
      %39 = dma.hbm_to_vmem [thread:$0]  %s2, 512, %s34, [#allocation7], 128, 128, 8
    $region13: #{tpu_custom_call.1} parent=1 // pred_fallthru
      _
    // Predicated region
    $region14: #{tpu_custom_call.1} parent=1 // pred_check
      _
    $region15: #{tpu_custom_call.1} parent=1 // pred_check_branch
      %41 = sbr.rel (0) target = $region17
    $region16: #{tpu_custom_call.1} parent=1 // pred_region
      _
    $region17: #{tpu_custom_call.1} parent=1 // pred_fallthru
      _
    // Predicated region
    $region18: #{tpu_custom_call.1} parent=1 // pred_check
      _
    $region19: #{tpu_custom_call.1} parent=1 // pred_check_branch
      %43 = sbr.rel (0) target = $region21
    $region20: #{tpu_custom_call.1} parent=1 // pred_region
      _
    $region21: #{tpu_custom_call.1} parent=1 // pred_fallthru
      _
    // Predicated region
    $region22: #{tpu_custom_call.1} parent=1 // pred_check
      _
    $region23: #{tpu_custom_call.1} parent=1 // pred_check_branch
      %45 = sbr.rel (0) target = $region25
    $region24: #{tpu_custom_call.1} parent=1 // pred_region
      _
    $region25: #{tpu_custom_call.1} parent=1 // pred_fallthru
      _
    // Predicated region
    $region26: #{tpu_custom_call.1} parent=1 // pred_check
      _
    $region27: #{tpu_custom_call.1} parent=1 // pred_check_branch
      %47 = sbr.rel (0) target = $region29
    $region28: #{tpu_custom_call.1} parent=1 // pred_region
      %48 = dma.done [#allocation4], 512
    $region29: #{tpu_custom_call.1} parent=1 // pred_fallthru
      _
    // Predicated region
    $region30: #{tpu_custom_call.1} parent=1 // pred_check
      _
    $region31: #{tpu_custom_call.1} parent=1 // pred_check_branch
      %50 = sbr.rel (0) target = $region33
    $region32: #{tpu_custom_call.1} parent=1 // pred_region
      %51 = dma.done [#allocation7], 512
    $region33: #{tpu_custom_call.1} parent=1 // pred_fallthru
      _
    %v53 = vlaneseq
    %v54 = vand.u32 %v53, 127
    %v55 = vadd.s32 %v54, 128
    %v56 = vadd.s32 %v54, 256
    %v57 = vadd.s32 %v54, 384
    %v58 = vand.u32 %v54, 15
    %v59 = vand.u32 %v55, 15
    %v60 = vand.u32 %v56, 15
    %v61 = vand.u32 %v57, 15
    %v62 = vshra.s32 %v54, 4
    %v63 = vshra.s32 %v55, 4
    %v64 = vshra.s32 %v56, 4
    %v65 = vshra.s32 %v57, 4
    %v66 = vand.u32 %v62, 15
    %v67 = vand.u32 %v63, 15
    %v68 = vand.u32 %v64, 15
    %v69 = vand.u32 %v65, 15
    %vm70 = vcmp.ge.s32.totalorder %v66, 1
    %vm71 = vcmp.ge.s32.totalorder %v67, 1
    %vm72 = vcmp.ge.s32.totalorder %v68, 1
    %vm73 = vcmp.ge.s32.totalorder %v69, 1
    %vm74 = vcmp.ge.s32.totalorder %v58, 1
    %vm75 = vcmp.ge.s32.totalorder %v59, 1
    %vm76 = vcmp.ge.s32.totalorder %v60, 1
    %vm77 = vcmp.ge.s32.totalorder %v61, 1
    %vm78 = vmand %vm70, %vm74
    %vm79 = vmand %vm71, %vm75
    %vm80 = vmand %vm72, %vm76
    %vm81 = vmand %vm73, %vm77
    %v82 = vsel %vm78, 1.0, 0.0
    %v83 = vsel %vm79, 1.0, 0.0
    %v84 = vsel %vm80, 1.0, 0.0
    %v85 = vsel %vm81, 1.0, 0.0
    %v86 = vsel %vm70, 1.0, 0.0
    %v87 = vsel %vm71, 1.0, 0.0
    %v88 = vsel %vm72, 1.0, 0.0
    %v89 = vsel %vm73, 1.0, 0.0
    %vm90 = vcmp.le.s32.totalorder %v58, 14
    %vm91 = vcmp.le.s32.totalorder %v59, 14
    %vm92 = vcmp.le.s32.totalorder %v60, 14
    %vm93 = vcmp.le.s32.totalorder %v61, 14
    %vm94 = vmand %vm70, %vm90
    %vm95 = vmand %vm71, %vm91
    %vm96 = vmand %vm72, %vm92
    %vm97 = vmand %vm73, %vm93
    %v98 = vsel %vm94, 1.0, 0.0
    %v99 = vsel %vm95, 1.0, 0.0
    %v100 = vsel %vm96, 1.0, 0.0
    %v101 = vsel %vm97, 1.0, 0.0
    %v102 = vsel %vm74, 1.0, 0.0
    %v103 = vsel %vm75, 1.0, 0.0
    %v104 = vsel %vm76, 1.0, 0.0
    %v105 = vsel %vm77, 1.0, 0.0
    %v106 = vsel %vm90, 1.0, 0.0
    %v107 = vsel %vm91, 1.0, 0.0
    %v108 = vsel %vm92, 1.0, 0.0
    %v109 = vsel %vm93, 1.0, 0.0
    %vm110 = vcmp.le.s32.totalorder %v66, 14
    %vm111 = vcmp.le.s32.totalorder %v67, 14
    %vm112 = vcmp.le.s32.totalorder %v68, 14
    %vm113 = vcmp.le.s32.totalorder %v69, 14
    %vm114 = vmand %vm110, %vm74
    %vm115 = vmand %vm111, %vm75
    %vm116 = vmand %vm112, %vm76
    %vm117 = vmand %vm113, %vm77
    %v118 = vsel %vm114, 1.0, 0.0
    %v119 = vsel %vm115, 1.0, 0.0
    %v120 = vsel %vm116, 1.0, 0.0
    %v121 = vsel %vm117, 1.0, 0.0
    %v122 = vsel %vm110, 1.0, 0.0
    %v123 = vsel %vm111, 1.0, 0.0
    %v124 = vsel %vm112, 1.0, 0.0
    %v125 = vsel %vm113, 1.0, 0.0
    %vm126 = vmand %vm110, %vm90
    %vm127 = vmand %vm111, %vm91
    %vm128 = vmand %vm112, %vm92
    %vm129 = vmand %vm113, %vm93
    %v130 = vsel %vm126, 1.0, 0.0
    %v131 = vsel %vm127, 1.0, 0.0
    %v132 = vsel %vm128, 1.0, 0.0
    %v133 = vsel %vm129, 1.0, 0.0
    %v134 = vld [vmem:[%s0] sm:$0xff]
    %v135 = vld [vmem:[%s0 + $0x8] sm:$0xff]
    %v136 = vld [vmem:[%s0 + $0x10] sm:$0xff]
    %v137 = vld [vmem:[%s0 + $0x18] sm:$0xff]
    %v138 = vld [vmem:[%s0 + $0x20] sm:$0xff]
    %v139 = vld [vmem:[%s0 + $0x28] sm:$0xff]
    %v140 = vld [vmem:[%s0 + $0x30] sm:$0xff]
    %v141 = vld [vmem:[%s0 + $0x38] sm:$0xff]
    %v142 = vld [vmem:[#allocation3] sm:$0xff]
    %v143 = vld [vmem:[#allocation3 + $0x8] sm:$0xff]
    %144 = vrot.lane.b32.xlu0 %v134, 17
    %v145 = vpop.permute.xlu0 %144
    %146 = vrot.lane.b32.xlu0 %v138, 17
    %v147 = vpop.permute.xlu0 %146
    %148 = vrot.lane.b32.xlu0 %v135, 17
    %v149 = vpop.permute.xlu0 %148
    %150 = vrot.lane.b32.xlu0 %v139, 17
    %v151 = vpop.permute.xlu0 %150
    %152 = vrot.lane.b32.xlu0 %v136, 17
    %v153 = vpop.permute.xlu0 %152
    %154 = vrot.lane.b32.xlu0 %v140, 17
    %v155 = vpop.permute.xlu0 %154
    %156 = vrot.lane.b32.xlu0 %v137, 17
    %v157 = vpop.permute.xlu0 %156
    %158 = vrot.lane.b32.xlu0 %v141, 17
    %v159 = vpop.permute.xlu0 %158
    %vm160 = vcmp.lt.s32.totalorder %v54, 17
    %v161 = vsel %vm160, %v153, %v157
    %v162 = vsel %vm160, %v155, %v159
    %v163 = vsel %vm160, %v149, %v153
    %v164 = vsel %vm160, %v151, %v155
    %v165 = vsel %vm160, %v145, %v149
    %v166 = vsel %vm160, %v147, %v151
    %v167 = vsel %vm160, %v157, %v145
    %v168 = vsel %vm160, %v159, %v147
    %v169 = vmul.f32 %v167, %v82
    %v170 = vmul.f32 %v165, %v83
    %v171 = vmul.f32 %v163, %v84
    %v172 = vmul.f32 %v161, %v85
    %v173 = vmul.f32 %v168, %v82
    %v174 = vmul.f32 %v166, %v83
    %v175 = vmul.f32 %v164, %v84
    %v176 = vmul.f32 %v162, %v85
    %v177 = vpack.c.bf16 %v173, %v169
    %v178 = vpack.c.bf16 %v174, %v170
    %v179 = vpack.c.bf16 %v175, %v171
    %v180 = vpack.c.bf16 %v176, %v172
    %181 = vst [vmem:[#allocation2] sm:$0xff] %v177
    %182 = vst [vmem:[#allocation2 + $0x8] sm:$0xff] %v178
    %183 = vst [vmem:[#allocation2 + $0x10] sm:$0xff] %v179
    %184 = vst [vmem:[#allocation2 + $0x18] sm:$0xff] %v180
    %185 = vrot.lane.b32.xlu0 %v134, 16
    %v186 = vpop.permute.xlu0 %185
    %187 = vrot.lane.b32.xlu0 %v138, 16
    %v188 = vpop.permute.xlu0 %187
    %189 = vrot.lane.b32.xlu0 %v135, 16
    %v190 = vpop.permute.xlu0 %189
    %191 = vrot.lane.b32.xlu0 %v139, 16
    %v192 = vpop.permute.xlu0 %191
    %193 = vrot.lane.b32.xlu0 %v136, 16
    %v194 = vpop.permute.xlu0 %193
    %195 = vrot.lane.b32.xlu0 %v140, 16
    %v196 = vpop.permute.xlu0 %195
    %197 = vrot.lane.b32.xlu0 %v137, 16
    %v198 = vpop.permute.xlu0 %197
    %199 = vrot.lane.b32.xlu0 %v141, 16
    %v200 = vpop.permute.xlu0 %199
    %vm201 = vcmp.lt.s32.totalorder %v54, 16
    %v202 = vsel %vm201, %v194, %v198
    %v203 = vsel %vm201, %v196, %v200
    %v204 = vsel %vm201, %v190, %v194
    %v205 = vsel %vm201, %v192, %v196
    %v206 = vsel %vm201, %v186, %v190
    %v207 = vsel %vm201, %v188, %v192
    %v208 = vsel %vm201, %v198, %v186
    %v209 = vsel %vm201, %v200, %v188
    %v210 = vmul.f32 %v208, %v86
    %v211 = vmul.f32 %v206, %v87
    %v212 = vmul.f32 %v204, %v88
    %v213 = vmul.f32 %v202, %v89
    %v214 = vmul.f32 %v209, %v86
    %v215 = vmul.f32 %v207, %v87
    %v216 = vmul.f32 %v205, %v88
    %v217 = vmul.f32 %v203, %v89
    %v218 = vpack.c.bf16 %v214, %v210
    %v219 = vpack.c.bf16 %v215, %v211
    %v220 = vpack.c.bf16 %v216, %v212
    %v221 = vpack.c.bf16 %v217, %v213
    %222 = vst [vmem:[#allocation2 + $0x20] sm:$0xff] %v218
    %223 = vst [vmem:[#allocation2 + $0x28] sm:$0xff] %v219
    %224 = vst [vmem:[#allocation2 + $0x30] sm:$0xff] %v220
    %225 = vst [vmem:[#allocation2 + $0x38] sm:$0xff] %v221
    %226 = vrot.lane.b32.xlu0 %v134, 15
    %v227 = vpop.permute.xlu0 %226
    %228 = vrot.lane.b32.xlu0 %v138, 15
    %v229 = vpop.permute.xlu0 %228
    %230 = vrot.lane.b32.xlu0 %v135, 15
    %v231 = vpop.permute.xlu0 %230
    %232 = vrot.lane.b32.xlu0 %v139, 15
    %v233 = vpop.permute.xlu0 %232
    %234 = vrot.lane.b32.xlu0 %v136, 15
    %v235 = vpop.permute.xlu0 %234
    %236 = vrot.lane.b32.xlu0 %v140, 15
    %v237 = vpop.permute.xlu0 %236
    %238 = vrot.lane.b32.xlu0 %v137, 15
    %v239 = vpop.permute.xlu0 %238
    %240 = vrot.lane.b32.xlu0 %v141, 15
    %v241 = vpop.permute.xlu0 %240
    %vm242 = vcmp.lt.s32.totalorder %v54, 15
    %v243 = vsel %vm242, %v235, %v239
    %v244 = vsel %vm242, %v237, %v241
    %v245 = vsel %vm242, %v231, %v235
    %v246 = vsel %vm242, %v233, %v237
    %v247 = vsel %vm242, %v227, %v231
    %v248 = vsel %vm242, %v229, %v233
    %v249 = vsel %vm242, %v239, %v227
    %v250 = vsel %vm242, %v241, %v229
    %v251 = vmul.f32 %v249, %v98
    %v252 = vmul.f32 %v247, %v99
    %v253 = vmul.f32 %v245, %v100
    %v254 = vmul.f32 %v243, %v101
    %v255 = vmul.f32 %v250, %v98
    %v256 = vmul.f32 %v248, %v99
    %v257 = vmul.f32 %v246, %v100
    %v258 = vmul.f32 %v244, %v101
    %v259 = vpack.c.bf16 %v255, %v251
    %v260 = vpack.c.bf16 %v256, %v252
    %v261 = vpack.c.bf16 %v257, %v253
    %v262 = vpack.c.bf16 %v258, %v254
    %263 = vst [vmem:[#allocation2 + $0x40] sm:$0xff] %v259
    %264 = vst [vmem:[#allocation2 + $0x48] sm:$0xff] %v260
    %265 = vst [vmem:[#allocation2 + $0x50] sm:$0xff] %v261
    %266 = vst [vmem:[#allocation2 + $0x58] sm:$0xff] %v262
    %267 = vrot.lane.b32.xlu0 %v134, 1
    %v268 = vpop.permute.xlu0 %267
    %269 = vrot.lane.b32.xlu0 %v138, 1
    %v270 = vpop.permute.xlu0 %269
    %271 = vrot.lane.b32.xlu0 %v135, 1
    %v272 = vpop.permute.xlu0 %271
    %273 = vrot.lane.b32.xlu0 %v139, 1
    %v274 = vpop.permute.xlu0 %273
    %275 = vrot.lane.b32.xlu0 %v136, 1
    %v276 = vpop.permute.xlu0 %275
    %277 = vrot.lane.b32.xlu0 %v140, 1
    %v278 = vpop.permute.xlu0 %277
    %279 = vrot.lane.b32.xlu0 %v137, 1
    %v280 = vpop.permute.xlu0 %279
    %281 = vrot.lane.b32.xlu0 %v141, 1
    %v282 = vpop.permute.xlu0 %281
    %vm283 = vcmp.lt.s32.totalorder %v54, 1
    %v284 = vsel %vm283, %v276, %v280
    %v285 = vsel %vm283, %v278, %v282
    %v286 = vsel %vm283, %v272, %v276
    %v287 = vsel %vm283, %v274, %v278
    %v288 = vsel %vm283, %v268, %v272
    %v289 = vsel %vm283, %v270, %v274
    %v290 = vsel %vm283, %v280, %v268
    %v291 = vsel %vm283, %v282, %v270
    %v292 = vmul.f32 %v290, %v102
    %v293 = vmul.f32 %v288, %v103
    %v294 = vmul.f32 %v286, %v104
    %v295 = vmul.f32 %v284, %v105
    %v296 = vmul.f32 %v291, %v102
    %v297 = vmul.f32 %v289, %v103
    %v298 = vmul.f32 %v287, %v104
    %v299 = vmul.f32 %v285, %v105
    %v300 = vpack.c.bf16 %v296, %v292
    %v301 = vpack.c.bf16 %v297, %v293
    %v302 = vpack.c.bf16 %v298, %v294
    %v303 = vpack.c.bf16 %v299, %v295
    %304 = vst [vmem:[#allocation2 + $0x60] sm:$0xff] %v300
    %305 = vst [vmem:[#allocation2 + $0x68] sm:$0xff] %v301
    %306 = vst [vmem:[#allocation2 + $0x70] sm:$0xff] %v302
    %307 = vst [vmem:[#allocation2 + $0x78] sm:$0xff] %v303
    %v308 = vpack.c.bf16 %v138, %v134
    %v309 = vpack.c.bf16 %v139, %v135
    %v310 = vpack.c.bf16 %v140, %v136
    %v311 = vpack.c.bf16 %v141, %v137
    %312 = vst [vmem:[#allocation2 + $0x80] sm:$0xff] %v308
    %313 = vst [vmem:[#allocation2 + $0x88] sm:$0xff] %v309
    %314 = vst [vmem:[#allocation2 + $0x90] sm:$0xff] %v310
    %315 = vst [vmem:[#allocation2 + $0x98] sm:$0xff] %v311
    %316 = vrot.lane.b32.xlu0 %v134, 127
    %v317 = vpop.permute.xlu0 %316
    %318 = vrot.lane.b32.xlu0 %v138, 127
    %v319 = vpop.permute.xlu0 %318
    %320 = vrot.lane.b32.xlu0 %v135, 127
    %v321 = vpop.permute.xlu0 %320
    %322 = vrot.lane.b32.xlu0 %v139, 127
    %v323 = vpop.permute.xlu0 %322
    %324 = vrot.lane.b32.xlu0 %v136, 127
    %v325 = vpop.permute.xlu0 %324
    %326 = vrot.lane.b32.xlu0 %v140, 127
    %v327 = vpop.permute.xlu0 %326
    %328 = vrot.lane.b32.xlu0 %v137, 127
    %v329 = vpop.permute.xlu0 %328
    %330 = vrot.lane.b32.xlu0 %v141, 127
    %v331 = vpop.permute.xlu0 %330
    %vm332 = vcmp.lt.s32.totalorder %v54, 127
    %v333 = vsel %vm332, %v325, %v329
    %v334 = vsel %vm332, %v327, %v331
    %v335 = vsel %vm332, %v321, %v325
    %v336 = vsel %vm332, %v323, %v327
    %v337 = vsel %vm332, %v317, %v321
    %v338 = vsel %vm332, %v319, %v323
    %v339 = vsel %vm332, %v329, %v317
    %v340 = vsel %vm332, %v331, %v319
    %v341 = vmul.f32 %v337, %v106
    %v342 = vmul.f32 %v335, %v107
    %v343 = vmul.f32 %v333, %v108
    %v344 = vmul.f32 %v339, %v109
    %v345 = vmul.f32 %v338, %v106
    %v346 = vmul.f32 %v336, %v107
    %v347 = vmul.f32 %v334, %v108
    %v348 = vmul.f32 %v340, %v109
    %v349 = vpack.c.bf16 %v345, %v341
    %v350 = vpack.c.bf16 %v346, %v342
    %v351 = vpack.c.bf16 %v347, %v343
    %v352 = vpack.c.bf16 %v348, %v344
    %353 = vst [vmem:[#allocation2 + $0xa0] sm:$0xff] %v349
    %354 = vst [vmem:[#allocation2 + $0xa8] sm:$0xff] %v350
    %355 = vst [vmem:[#allocation2 + $0xb0] sm:$0xff] %v351
    %356 = vst [vmem:[#allocation2 + $0xb8] sm:$0xff] %v352
    %357 = vrot.lane.b32.xlu0 %v134, 113
    %v358 = vpop.permute.xlu0 %357
    %359 = vrot.lane.b32.xlu0 %v138, 113
    %v360 = vpop.permute.xlu0 %359
    %361 = vrot.lane.b32.xlu0 %v135, 113
    %v362 = vpop.permute.xlu0 %361
    %363 = vrot.lane.b32.xlu0 %v139, 113
    %v364 = vpop.permute.xlu0 %363
    %365 = vrot.lane.b32.xlu0 %v136, 113
    %v366 = vpop.permute.xlu0 %365
    %367 = vrot.lane.b32.xlu0 %v140, 113
    %v368 = vpop.permute.xlu0 %367
    %369 = vrot.lane.b32.xlu0 %v137, 113
    %v370 = vpop.permute.xlu0 %369
    %371 = vrot.lane.b32.xlu0 %v141, 113
    %v372 = vpop.permute.xlu0 %371
    %vm373 = vcmp.lt.s32.totalorder %v54, 113
    %v374 = vsel %vm373, %v366, %v370
    %v375 = vsel %vm373, %v368, %v372
    %v376 = vsel %vm373, %v362, %v366
    %v377 = vsel %vm373, %v364, %v368
    %v378 = vsel %vm373, %v358, %v362
    %v379 = vsel %vm373, %v360, %v364
    %v380 = vsel %vm373, %v370, %v358
    %v381 = vsel %vm373, %v372, %v360
    %v382 = vmul.f32 %v378, %v118
    %v383 = vmul.f32 %v376, %v119
    %v384 = vmul.f32 %v374, %v120
    %v385 = vmul.f32 %v380, %v121
    %v386 = vmul.f32 %v379, %v118
    %v387 = vmul.f32 %v377, %v119
    %v388 = vmul.f32 %v375, %v120
    %v389 = vmul.f32 %v381, %v121
    %v390 = vpack.c.bf16 %v386, %v382
    %v391 = vpack.c.bf16 %v387, %v383
    %v392 = vpack.c.bf16 %v388, %v384
    %v393 = vpack.c.bf16 %v389, %v385
    %394 = vst [vmem:[#allocation2 + $0xc0] sm:$0xff] %v390
    %395 = vst [vmem:[#allocation2 + $0xc8] sm:$0xff] %v391
    %396 = vst [vmem:[#allocation2 + $0xd0] sm:$0xff] %v392
    %397 = vst [vmem:[#allocation2 + $0xd8] sm:$0xff] %v393
    %398 = vrot.lane.b32.xlu0 %v134, 112
    %v399 = vpop.permute.xlu0 %398
    %400 = vrot.lane.b32.xlu0 %v138, 112
    %v401 = vpop.permute.xlu0 %400
    %402 = vrot.lane.b32.xlu0 %v135, 112
    %v403 = vpop.permute.xlu0 %402
    %404 = vrot.lane.b32.xlu0 %v139, 112
    %v405 = vpop.permute.xlu0 %404
    %406 = vrot.lane.b32.xlu0 %v136, 112
    %v407 = vpop.permute.xlu0 %406
    %408 = vrot.lane.b32.xlu0 %v140, 112
    %v409 = vpop.permute.xlu0 %408
    %410 = vrot.lane.b32.xlu0 %v137, 112
    %v411 = vpop.permute.xlu0 %410
    %412 = vrot.lane.b32.xlu0 %v141, 112
    %v413 = vpop.permute.xlu0 %412
    %vm414 = vcmp.lt.s32.totalorder %v54, 112
    %v415 = vsel %vm414, %v407, %v411
    %v416 = vsel %vm414, %v409, %v413
    %v417 = vsel %vm414, %v403, %v407
    %v418 = vsel %vm414, %v405, %v409
    %v419 = vsel %vm414, %v399, %v403
    %v420 = vsel %vm414, %v401, %v405
    %v421 = vsel %vm414, %v411, %v399
    %v422 = vsel %vm414, %v413, %v401
    %v423 = vmul.f32 %v419, %v122
    %v424 = vmul.f32 %v417, %v123
    %v425 = vmul.f32 %v415, %v124
    %v426 = vmul.f32 %v421, %v125
    %v427 = vmul.f32 %v420, %v122
    %v428 = vmul.f32 %v418, %v123
    %v429 = vmul.f32 %v416, %v124
    %v430 = vmul.f32 %v422, %v125
    %v431 = vpack.c.bf16 %v427, %v423
    %v432 = vpack.c.bf16 %v428, %v424
    %v433 = vpack.c.bf16 %v429, %v425
    %v434 = vpack.c.bf16 %v430, %v426
    %435 = vst [vmem:[#allocation2 + $0xe0] sm:$0xff] %v431
    %436 = vst [vmem:[#allocation2 + $0xe8] sm:$0xff] %v432
    %437 = vst [vmem:[#allocation2 + $0xf0] sm:$0xff] %v433
    %438 = vst [vmem:[#allocation2 + $0xf8] sm:$0xff] %v434
    %439 = vrot.lane.b32.xlu0 %v134, 111
    %v440 = vpop.permute.xlu0 %439
    %441 = vrot.lane.b32.xlu0 %v138, 111
    %v442 = vpop.permute.xlu0 %441
    %443 = vrot.lane.b32.xlu0 %v135, 111
    %v444 = vpop.permute.xlu0 %443
    %445 = vrot.lane.b32.xlu0 %v139, 111
    %v446 = vpop.permute.xlu0 %445
    %447 = vrot.lane.b32.xlu0 %v136, 111
    %v448 = vpop.permute.xlu0 %447
    %449 = vrot.lane.b32.xlu0 %v140, 111
    %v450 = vpop.permute.xlu0 %449
    %451 = vrot.lane.b32.xlu0 %v137, 111
    %v452 = vpop.permute.xlu0 %451
    %453 = vrot.lane.b32.xlu0 %v141, 111
    %v454 = vpop.permute.xlu0 %453
    %vm455 = vcmp.lt.s32.totalorder %v54, 111
    %v456 = vsel %vm455, %v448, %v452
    %v457 = vsel %vm455, %v450, %v454
    %v458 = vsel %vm455, %v444, %v448
    %v459 = vsel %vm455, %v446, %v450
    %v460 = vsel %vm455, %v440, %v444
    %v461 = vsel %vm455, %v442, %v446
    %v462 = vsel %vm455, %v452, %v440
    %v463 = vsel %vm455, %v454, %v442
    %v464 = vmul.f32 %v460, %v130
    %v465 = vmul.f32 %v458, %v131
    %v466 = vmul.f32 %v456, %v132
    %v467 = vmul.f32 %v462, %v133
    %v468 = vmul.f32 %v461, %v130
    %v469 = vmul.f32 %v459, %v131
    %v470 = vmul.f32 %v457, %v132
    %v471 = vmul.f32 %v463, %v133
    %v472 = vpack.c.bf16 %v468, %v464
    %v473 = vpack.c.bf16 %v469, %v465
    %v474 = vpack.c.bf16 %v470, %v466
    %v475 = vpack.c.bf16 %v471, %v467
    %476 = vst [vmem:[#allocation2 + $0x100] sm:$0xff] %v472
    %477 = vst [vmem:[#allocation2 + $0x108] sm:$0xff] %v473
    %478 = vst [vmem:[#allocation2 + $0x110] sm:$0xff] %v474
    %479 = vst [vmem:[#allocation2 + $0x118] sm:$0xff] %v475
    %v480 = vld [vmem:[#allocation2] sm:$0xff]
    %v481 = vld [vmem:[#allocation2 + $0x8] sm:$0xff]
    %v482 = vld [vmem:[#allocation2 + $0x10] sm:$0xff]
    %v483 = vld [vmem:[#allocation2 + $0x18] sm:$0xff]
    %v484 = vld [vmem:[#allocation2 + $0x20] sm:$0xff]
    %v485 = vld [vmem:[#allocation2 + $0x28] sm:$0xff]
    %v486 = vld [vmem:[#allocation2 + $0x30] sm:$0xff]
    %v487 = vld [vmem:[#allocation2 + $0x38] sm:$0xff]
    %v488 = vld [vmem:[#allocation2 + $0x40] sm:$0xff]
    %v489 = vld [vmem:[#allocation2 + $0x48] sm:$0xff]
    %v490 = vld [vmem:[#allocation2 + $0x50] sm:$0xff]
    %v491 = vld [vmem:[#allocation2 + $0x58] sm:$0xff]
    %v492 = vld [vmem:[#allocation2 + $0x60] sm:$0xff]
    %v493 = vld [vmem:[#allocation2 + $0x68] sm:$0xff]
    %v494 = vld [vmem:[#allocation2 + $0x70] sm:$0xff]
    %v495 = vld [vmem:[#allocation2 + $0x78] sm:$0xff]
    %v496 = vld [vmem:[#allocation2 + $0x80] sm:$0xff]
    %v497 = vld [vmem:[#allocation2 + $0x88] sm:$0xff]
    %v498 = vld [vmem:[#allocation2 + $0x90] sm:$0xff]
    %v499 = vld [vmem:[#allocation2 + $0x98] sm:$0xff]
    %v500 = vld [vmem:[#allocation2 + $0xa0] sm:$0xff]
    %v501 = vld [vmem:[#allocation2 + $0xa8] sm:$0xff]
    %v502 = vld [vmem:[#allocation2 + $0xb0] sm:$0xff]
    %v503 = vld [vmem:[#allocation2 + $0xb8] sm:$0xff]
    %v504 = vld [vmem:[#allocation2 + $0xc0] sm:$0xff]
    %v505 = vld [vmem:[#allocation2 + $0xc8] sm:$0xff]
    %v506 = vld [vmem:[#allocation2 + $0xd0] sm:$0xff]
    %v507 = vld [vmem:[#allocation2 + $0xd8] sm:$0xff]
    %v508 = vld [vmem:[#allocation2 + $0xe0] sm:$0xff]
    %v509 = vld [vmem:[#allocation2 + $0xe8] sm:$0xff]
    %v510 = vld [vmem:[#allocation2 + $0xf0] sm:$0xff]
    %v511 = vld [vmem:[#allocation2 + $0xf8] sm:$0xff]
    %v512 = vld [vmem:[#allocation2 + $0x100] sm:$0xff]
    %v513 = vld [vmem:[#allocation2 + $0x108] sm:$0xff]
    %v514 = vld [vmem:[#allocation2 + $0x110] sm:$0xff]
    %v515 = vld [vmem:[#allocation2 + $0x118] sm:$0xff]
    %v518 = vunpack.c.l.b16 %v142
    %v519 = vunpack.c.h.b16 %v142
    %v520 = vunpack.c.l.b16 %v143
    %v521 = vunpack.c.h.b16 %v143
    %v522 = vpack.c.b16 %v520, %v518
    %v523 = vpack.c.b16 %v521, %v519
    %vm525 = vcmask 130048
    %v527 = vsel %vm525, %v523, 0
    %529 = vmatprep.subr.bf16.mxu0 %v481
    %530 = vmatpush1.bf16.msra.mxu0 %v480
    %531 = vmatprep.subr.bf16.mxu0 %v485
    %532 = vmatpush1.bf16.msra.mxu0 %v484
    %533 = vmatprep.subr.bf16.mxu0 %v489
    %534 = vmatpush1.bf16.msra.mxu0 %v488
    %535 = vmatprep.subr.bf16.mxu0 %v493
    %536 = vmatpush1.bf16.msra.mxu0 %v492
    %537 = vmatprep.subr.bf16.mxu0 %v497
    %538 = vmatpush1.bf16.msra.mxu0 %v496
    %539 = vmatprep.subr.bf16.mxu0 %v501
    %540 = vmatpush1.bf16.msra.mxu0 %v500
    %541 = vmatprep.subr.bf16.mxu0 %v505
    %542 = vmatpush1.bf16.msra.mxu0 %v504
    %543 = vmatprep.subr.bf16.mxu0 %v509
    %544 = vmatpush1.bf16.msra.mxu0 %v508
    %545 = vmatprep.subr.bf16.mxu0 %v513
    %546 = vmatpush1.bf16.msra.mxu0 %v512
    %547 = vmatprep.subr.bf16.mxu0 0
    %548 = vmatpush1.bf16.msra.mxu0 0
    %549 = vmatprep.subr.bf16.mxu0 0
    %550 = vmatpush1.bf16.msra.mxu0 0
    %551 = vmatprep.subr.bf16.mxu0 0
    %552 = vmatpush1.bf16.msra.mxu0 0
    %553 = vmatprep.subr.bf16.mxu0 0
    %554 = vmatpush1.bf16.msra.mxu0 0
    %555 = vmatprep.subr.bf16.mxu0 0
    %556 = vmatpush1.bf16.msra.mxu0 0
    %557 = vmatprep.subr.bf16.mxu0 0
    %558 = vmatpush1.bf16.msra.mxu0 0
    %559 = vmatprep.subr.bf16.mxu0 0
    %560 = vmatpush1.bf16.msra.mxu0 0
    %561 = vmatprep.mubr.bf16.mxu0 %v527
    %562 = vmatmul.mubr.bf16.gmra.mrb[0].mxu0 %v522
    %v563 = vpop.f32.mrb[0].mxu0
    %v564 = vadd.f32 0.0, %v563
    %v565 = vpop.f32.mrb[0].mxu0
    %v566 = vadd.f32 0.0, %v565
    %v567 = vpop.f32.mrb[0].mxu0
    %v568 = vadd.f32 0.0, %v567
    %v569 = vpop.f32.mrb[0].mxu0
    %v570 = vadd.f32 0.0, %v569
    %571 = vdwg.mxu0
    %572 = vmatprep.subr.bf16.mxu0 %v483
    %573 = vmatpush1.bf16.msra.mxu0 %v482
    %574 = vmatprep.subr.bf16.mxu0 %v487
    %575 = vmatpush1.bf16.msra.mxu0 %v486
    %576 = vmatprep.subr.bf16.mxu0 %v491
    %577 = vmatpush1.bf16.msra.mxu0 %v490
    %578 = vmatprep.subr.bf16.mxu0 %v495
    %579 = vmatpush1.bf16.msra.mxu0 %v494
    %580 = vmatprep.subr.bf16.mxu0 %v499
    %581 = vmatpush1.bf16.msra.mxu0 %v498
    %582 = vmatprep.subr.bf16.mxu0 %v503
    %583 = vmatpush1.bf16.msra.mxu0 %v502
    %584 = vmatprep.subr.bf16.mxu0 %v507
    %585 = vmatpush1.bf16.msra.mxu0 %v506
    %586 = vmatprep.subr.bf16.mxu0 %v511
    %587 = vmatpush1.bf16.msra.mxu0 %v510
    %588 = vmatprep.subr.bf16.mxu0 %v515
    %589 = vmatpush1.bf16.msra.mxu0 %v514
    %590 = vmatprep.subr.bf16.mxu0 0
    %591 = vmatpush1.bf16.msra.mxu0 0
    %592 = vmatprep.subr.bf16.mxu0 0
    %593 = vmatpush1.bf16.msra.mxu0 0
    %594 = vmatprep.subr.bf16.mxu0 0
    %595 = vmatpush1.bf16.msra.mxu0 0
    %596 = vmatprep.subr.bf16.mxu0 0
    %597 = vmatpush1.bf16.msra.mxu0 0
    %598 = vmatprep.subr.bf16.mxu0 0
    %599 = vmatpush1.bf16.msra.mxu0 0
    %600 = vmatprep.subr.bf16.mxu0 0
    %601 = vmatpush1.bf16.msra.mxu0 0
    %602 = vmatprep.subr.bf16.mxu0 0
    %603 = vmatpush1.bf16.msra.mxu0 0
    %604 = vmatprep.mubr.bf16.mxu0 %v527
    %605 = vmatmul.mubr.bf16.gmra.mrb[0].mxu0 %v522
    %v606 = vpop.f32.mrb[0].mxu0
    %v607 = vadd.f32 0.0, %v606
    %v608 = vpop.f32.mrb[0].mxu0
    %v609 = vadd.f32 0.0, %v608
    %v610 = vpop.f32.mrb[0].mxu0
    %v611 = vadd.f32 0.0, %v610
    %v612 = vpop.f32.mrb[0].mxu0
    %v613 = vadd.f32 0.0, %v612
    %614 = vdwg.mxu0
    %v615 = vmax.f32 %v564, 0.0
    %v616 = vmax.f32 %v566, 0.0
    %v617 = vmax.f32 %v607, 0.0
    %v618 = vmax.f32 %v609, 0.0
    %v619 = vmax.f32 %v568, 0.0
    %v620 = vmax.f32 %v570, 0.0
    %v621 = vmax.f32 %v611, 0.0
    %v622 = vmax.f32 %v613, 0.0
    %v623 = vld [vmem:[#allocation6] sm:$0xff]
    %v624 = vld [vmem:[#allocation6 + $0x8] sm:$0xff]
    %625 = vrot.lane.b32.xlu0 %v615, 17
    %v626 = vpop.permute.xlu0 %625
    %627 = vrot.lane.b32.xlu0 %v619, 17
    %v628 = vpop.permute.xlu0 %627
    %629 = vrot.lane.b32.xlu0 %v616, 17
    %v630 = vpop.permute.xlu0 %629
    %631 = vrot.lane.b32.xlu0 %v620, 17
    %v632 = vpop.permute.xlu0 %631
    %633 = vrot.lane.b32.xlu0 %v617, 17
    %v634 = vpop.permute.xlu0 %633
    %635 = vrot.lane.b32.xlu0 %v621, 17
    %v636 = vpop.permute.xlu0 %635
    %637 = vrot.lane.b32.xlu0 %v618, 17
    %v638 = vpop.permute.xlu0 %637
    %639 = vrot.lane.b32.xlu0 %v622, 17
    %v640 = vpop.permute.xlu0 %639
    %v641 = vsel %vm160, %v634, %v638
    %v642 = vsel %vm160, %v636, %v640
    %v643 = vsel %vm160, %v630, %v634
    %v644 = vsel %vm160, %v632, %v636
    %v645 = vsel %vm160, %v626, %v630
    %v646 = vsel %vm160, %v628, %v632
    %v647 = vsel %vm160, %v638, %v626
    %v648 = vsel %vm160, %v640, %v628
    %v649 = vmul.f32 %v647, %v82
    %v650 = vmul.f32 %v645, %v83
    %v651 = vmul.f32 %v643, %v84
    %v652 = vmul.f32 %v641, %v85
    %v653 = vmul.f32 %v648, %v82
    %v654 = vmul.f32 %v646, %v83
    %v655 = vmul.f32 %v644, %v84
    %v656 = vmul.f32 %v642, %v85
    %v657 = vpack.c.bf16 %v653, %v649
    %v658 = vpack.c.bf16 %v654, %v650
    %v659 = vpack.c.bf16 %v655, %v651
    %v660 = vpack.c.bf16 %v656, %v652
    %661 = vst [vmem:[#allocation2] sm:$0xff] %v657
    %662 = vst [vmem:[#allocation2 + $0x8] sm:$0xff] %v658
    %663 = vst [vmem:[#allocation2 + $0x10] sm:$0xff] %v659
    %664 = vst [vmem:[#allocation2 + $0x18] sm:$0xff] %v660
    %665 = vrot.lane.b32.xlu0 %v615, 16
    %v666 = vpop.permute.xlu0 %665
    %667 = vrot.lane.b32.xlu0 %v619, 16
    %v668 = vpop.permute.xlu0 %667
    %669 = vrot.lane.b32.xlu0 %v616, 16
    %v670 = vpop.permute.xlu0 %669
    %671 = vrot.lane.b32.xlu0 %v620, 16
    %v672 = vpop.permute.xlu0 %671
    %673 = vrot.lane.b32.xlu0 %v617, 16
    %v674 = vpop.permute.xlu0 %673
    %675 = vrot.lane.b32.xlu0 %v621, 16
    %v676 = vpop.permute.xlu0 %675
    %677 = vrot.lane.b32.xlu0 %v618, 16
    %v678 = vpop.permute.xlu0 %677
    %679 = vrot.lane.b32.xlu0 %v622, 16
    %v680 = vpop.permute.xlu0 %679
    %v681 = vsel %vm201, %v674, %v678
    %v682 = vsel %vm201, %v676, %v680
    %v683 = vsel %vm201, %v670, %v674
    %v684 = vsel %vm201, %v672, %v676
    %v685 = vsel %vm201, %v666, %v670
    %v686 = vsel %vm201, %v668, %v672
    %v687 = vsel %vm201, %v678, %v666
    %v688 = vsel %vm201, %v680, %v668
    %v689 = vmul.f32 %v687, %v86
    %v690 = vmul.f32 %v685, %v87
    %v691 = vmul.f32 %v683, %v88
    %v692 = vmul.f32 %v681, %v89
    %v693 = vmul.f32 %v688, %v86
    %v694 = vmul.f32 %v686, %v87
    %v695 = vmul.f32 %v684, %v88
    %v696 = vmul.f32 %v682, %v89
    %v697 = vpack.c.bf16 %v693, %v689
    %v698 = vpack.c.bf16 %v694, %v690
    %v699 = vpack.c.bf16 %v695, %v691
    %v700 = vpack.c.bf16 %v696, %v692
    %701 = vst [vmem:[#allocation2 + $0x20] sm:$0xff] %v697
    %702 = vst [vmem:[#allocation2 + $0x28] sm:$0xff] %v698
    %703 = vst [vmem:[#allocation2 + $0x30] sm:$0xff] %v699
    %704 = vst [vmem:[#allocation2 + $0x38] sm:$0xff] %v700
    %705 = vrot.lane.b32.xlu0 %v615, 15
    %v706 = vpop.permute.xlu0 %705
    %707 = vrot.lane.b32.xlu0 %v619, 15
    %v708 = vpop.permute.xlu0 %707
    %709 = vrot.lane.b32.xlu0 %v616, 15
    %v710 = vpop.permute.xlu0 %709
    %711 = vrot.lane.b32.xlu0 %v620, 15
    %v712 = vpop.permute.xlu0 %711
    %713 = vrot.lane.b32.xlu0 %v617, 15
    %v714 = vpop.permute.xlu0 %713
    %715 = vrot.lane.b32.xlu0 %v621, 15
    %v716 = vpop.permute.xlu0 %715
    %717 = vrot.lane.b32.xlu0 %v618, 15
    %v718 = vpop.permute.xlu0 %717
    %719 = vrot.lane.b32.xlu0 %v622, 15
    %v720 = vpop.permute.xlu0 %719
    %v721 = vsel %vm242, %v714, %v718
    %v722 = vsel %vm242, %v716, %v720
    %v723 = vsel %vm242, %v710, %v714
    %v724 = vsel %vm242, %v712, %v716
    %v725 = vsel %vm242, %v706, %v710
    %v726 = vsel %vm242, %v708, %v712
    %v727 = vsel %vm242, %v718, %v706
    %v728 = vsel %vm242, %v720, %v708
    %v729 = vmul.f32 %v727, %v98
    %v730 = vmul.f32 %v725, %v99
    %v731 = vmul.f32 %v723, %v100
    %v732 = vmul.f32 %v721, %v101
    %v733 = vmul.f32 %v728, %v98
    %v734 = vmul.f32 %v726, %v99
    %v735 = vmul.f32 %v724, %v100
    %v736 = vmul.f32 %v722, %v101
    %v737 = vpack.c.bf16 %v733, %v729
    %v738 = vpack.c.bf16 %v734, %v730
    %v739 = vpack.c.bf16 %v735, %v731
    %v740 = vpack.c.bf16 %v736, %v732
    %741 = vst [vmem:[#allocation2 + $0x40] sm:$0xff] %v737
    %742 = vst [vmem:[#allocation2 + $0x48] sm:$0xff] %v738
    %743 = vst [vmem:[#allocation2 + $0x50] sm:$0xff] %v739
    %744 = vst [vmem:[#allocation2 + $0x58] sm:$0xff] %v740
    %745 = vrot.lane.b32.xlu0 %v615, 1
    %v746 = vpop.permute.xlu0 %745
    %747 = vrot.lane.b32.xlu0 %v619, 1
    %v748 = vpop.permute.xlu0 %747
    %749 = vrot.lane.b32.xlu0 %v616, 1
    %v750 = vpop.permute.xlu0 %749
    %751 = vrot.lane.b32.xlu0 %v620, 1
    %v752 = vpop.permute.xlu0 %751
    %753 = vrot.lane.b32.xlu0 %v617, 1
    %v754 = vpop.permute.xlu0 %753
    %755 = vrot.lane.b32.xlu0 %v621, 1
    %v756 = vpop.permute.xlu0 %755
    %757 = vrot.lane.b32.xlu0 %v618, 1
    %v758 = vpop.permute.xlu0 %757
    %759 = vrot.lane.b32.xlu0 %v622, 1
    %v760 = vpop.permute.xlu0 %759
    %v761 = vsel %vm283, %v754, %v758
    %v762 = vsel %vm283, %v756, %v760
    %v763 = vsel %vm283, %v750, %v754
    %v764 = vsel %vm283, %v752, %v756
    %v765 = vsel %vm283, %v746, %v750
    %v766 = vsel %vm283, %v748, %v752
    %v767 = vsel %vm283, %v758, %v746
    %v768 = vsel %vm283, %v760, %v748
    %v769 = vmul.f32 %v767, %v102
    %v770 = vmul.f32 %v765, %v103
    %v771 = vmul.f32 %v763, %v104
    %v772 = vmul.f32 %v761, %v105
    %v773 = vmul.f32 %v768, %v102
    %v774 = vmul.f32 %v766, %v103
    %v775 = vmul.f32 %v764, %v104
    %v776 = vmul.f32 %v762, %v105
    %v777 = vpack.c.bf16 %v773, %v769
    %v778 = vpack.c.bf16 %v774, %v770
    %v779 = vpack.c.bf16 %v775, %v771
    %v780 = vpack.c.bf16 %v776, %v772
    %781 = vst [vmem:[#allocation2 + $0x60] sm:$0xff] %v777
    %782 = vst [vmem:[#allocation2 + $0x68] sm:$0xff] %v778
    %783 = vst [vmem:[#allocation2 + $0x70] sm:$0xff] %v779
    %784 = vst [vmem:[#allocation2 + $0x78] sm:$0xff] %v780
    %v785 = vpack.c.bf16 %v619, %v615
    %v786 = vpack.c.bf16 %v620, %v616
    %v787 = vpack.c.bf16 %v621, %v617
    %v788 = vpack.c.bf16 %v622, %v618
    %789 = vst [vmem:[#allocation2 + $0x80] sm:$0xff] %v785
    %790 = vst [vmem:[#allocation2 + $0x88] sm:$0xff] %v786
    %791 = vst [vmem:[#allocation2 + $0x90] sm:$0xff] %v787
    %792 = vst [vmem:[#allocation2 + $0x98] sm:$0xff] %v788
    %793 = vrot.lane.b32.xlu0 %v615, 127
    %v794 = vpop.permute.xlu0 %793
    %795 = vrot.lane.b32.xlu0 %v619, 127
    %v796 = vpop.permute.xlu0 %795
    %797 = vrot.lane.b32.xlu0 %v616, 127
    %v798 = vpop.permute.xlu0 %797
    %799 = vrot.lane.b32.xlu0 %v620, 127
    %v800 = vpop.permute.xlu0 %799
    %801 = vrot.lane.b32.xlu0 %v617, 127
    %v802 = vpop.permute.xlu0 %801
    %803 = vrot.lane.b32.xlu0 %v621, 127
    %v804 = vpop.permute.xlu0 %803
    %805 = vrot.lane.b32.xlu0 %v618, 127
    %v806 = vpop.permute.xlu0 %805
    %807 = vrot.lane.b32.xlu0 %v622, 127
    %v808 = vpop.permute.xlu0 %807
    %v809 = vsel %vm332, %v802, %v806
    %v810 = vsel %vm332, %v804, %v808
    %v811 = vsel %vm332, %v798, %v802
    %v812 = vsel %vm332, %v800, %v804
    %v813 = vsel %vm332, %v794, %v798
    %v814 = vsel %vm332, %v796, %v800
    %v815 = vsel %vm332, %v806, %v794
    %v816 = vsel %vm332, %v808, %v796
    %v817 = vmul.f32 %v813, %v106
    %v818 = vmul.f32 %v811, %v107
    %v819 = vmul.f32 %v809, %v108
    %v820 = vmul.f32 %v815, %v109
    %v821 = vmul.f32 %v814, %v106
    %v822 = vmul.f32 %v812, %v107
    %v823 = vmul.f32 %v810, %v108
    %v824 = vmul.f32 %v816, %v109
    %v825 = vpack.c.bf16 %v821, %v817
    %v826 = vpack.c.bf16 %v822, %v818
    %v827 = vpack.c.bf16 %v823, %v819
    %v828 = vpack.c.bf16 %v824, %v820
    %829 = vst [vmem:[#allocation2 + $0xa0] sm:$0xff] %v825
    %830 = vst [vmem:[#allocation2 + $0xa8] sm:$0xff] %v826
    %831 = vst [vmem:[#allocation2 + $0xb0] sm:$0xff] %v827
    %832 = vst [vmem:[#allocation2 + $0xb8] sm:$0xff] %v828
    %833 = vrot.lane.b32.xlu0 %v615, 113
    %v834 = vpop.permute.xlu0 %833
    %835 = vrot.lane.b32.xlu0 %v619, 113
    %v836 = vpop.permute.xlu0 %835
    %837 = vrot.lane.b32.xlu0 %v616, 113
    %v838 = vpop.permute.xlu0 %837
    %839 = vrot.lane.b32.xlu0 %v620, 113
    %v840 = vpop.permute.xlu0 %839
    %841 = vrot.lane.b32.xlu0 %v617, 113
    %v842 = vpop.permute.xlu0 %841
    %843 = vrot.lane.b32.xlu0 %v621, 113
    %v844 = vpop.permute.xlu0 %843
    %845 = vrot.lane.b32.xlu0 %v618, 113
    %v846 = vpop.permute.xlu0 %845
    %847 = vrot.lane.b32.xlu0 %v622, 113
    %v848 = vpop.permute.xlu0 %847
    %v849 = vsel %vm373, %v842, %v846
    %v850 = vsel %vm373, %v844, %v848
    %v851 = vsel %vm373, %v838, %v842
    %v852 = vsel %vm373, %v840, %v844
    %v853 = vsel %vm373, %v834, %v838
    %v854 = vsel %vm373, %v836, %v840
    %v855 = vsel %vm373, %v846, %v834
    %v856 = vsel %vm373, %v848, %v836
    %v857 = vmul.f32 %v853, %v118
    %v858 = vmul.f32 %v851, %v119
    %v859 = vmul.f32 %v849, %v120
    %v860 = vmul.f32 %v855, %v121
    %v861 = vmul.f32 %v854, %v118
    %v862 = vmul.f32 %v852, %v119
    %v863 = vmul.f32 %v850, %v120
    %v864 = vmul.f32 %v856, %v121
    %v865 = vpack.c.bf16 %v861, %v857
    %v866 = vpack.c.bf16 %v862, %v858
    %v867 = vpack.c.bf16 %v863, %v859
    %v868 = vpack.c.bf16 %v864, %v860
    %869 = vst [vmem:[#allocation2 + $0xc0] sm:$0xff] %v865
    %870 = vst [vmem:[#allocation2 + $0xc8] sm:$0xff] %v866
    %871 = vst [vmem:[#allocation2 + $0xd0] sm:$0xff] %v867
    %872 = vst [vmem:[#allocation2 + $0xd8] sm:$0xff] %v868
    %873 = vrot.lane.b32.xlu0 %v615, 112
    %v874 = vpop.permute.xlu0 %873
    %875 = vrot.lane.b32.xlu0 %v619, 112
    %v876 = vpop.permute.xlu0 %875
    %877 = vrot.lane.b32.xlu0 %v616, 112
    %v878 = vpop.permute.xlu0 %877
    %879 = vrot.lane.b32.xlu0 %v620, 112
    %v880 = vpop.permute.xlu0 %879
    %881 = vrot.lane.b32.xlu0 %v617, 112
    %v882 = vpop.permute.xlu0 %881
    %883 = vrot.lane.b32.xlu0 %v621, 112
    %v884 = vpop.permute.xlu0 %883
    %885 = vrot.lane.b32.xlu0 %v618, 112
    %v886 = vpop.permute.xlu0 %885
    %887 = vrot.lane.b32.xlu0 %v622, 112
    %v888 = vpop.permute.xlu0 %887
    %v889 = vsel %vm414, %v882, %v886
    %v890 = vsel %vm414, %v884, %v888
    %v891 = vsel %vm414, %v878, %v882
    %v892 = vsel %vm414, %v880, %v884
    %v893 = vsel %vm414, %v874, %v878
    %v894 = vsel %vm414, %v876, %v880
    %v895 = vsel %vm414, %v886, %v874
    %v896 = vsel %vm414, %v888, %v876
    %v897 = vmul.f32 %v893, %v122
    %v898 = vmul.f32 %v891, %v123
    %v899 = vmul.f32 %v889, %v124
    %v900 = vmul.f32 %v895, %v125
    %v901 = vmul.f32 %v894, %v122
    %v902 = vmul.f32 %v892, %v123
    %v903 = vmul.f32 %v890, %v124
    %v904 = vmul.f32 %v896, %v125
    %v905 = vpack.c.bf16 %v901, %v897
    %v906 = vpack.c.bf16 %v902, %v898
    %v907 = vpack.c.bf16 %v903, %v899
    %v908 = vpack.c.bf16 %v904, %v900
    %909 = vst [vmem:[#allocation2 + $0xe0] sm:$0xff] %v905
    %910 = vst [vmem:[#allocation2 + $0xe8] sm:$0xff] %v906
    %911 = vst [vmem:[#allocation2 + $0xf0] sm:$0xff] %v907
    %912 = vst [vmem:[#allocation2 + $0xf8] sm:$0xff] %v908
    %913 = vrot.lane.b32.xlu0 %v615, 111
    %v914 = vpop.permute.xlu0 %913
    %915 = vrot.lane.b32.xlu0 %v619, 111
    %v916 = vpop.permute.xlu0 %915
    %917 = vrot.lane.b32.xlu0 %v616, 111
    %v918 = vpop.permute.xlu0 %917
    %919 = vrot.lane.b32.xlu0 %v620, 111
    %v920 = vpop.permute.xlu0 %919
    %921 = vrot.lane.b32.xlu0 %v617, 111
    %v922 = vpop.permute.xlu0 %921
    %923 = vrot.lane.b32.xlu0 %v621, 111
    %v924 = vpop.permute.xlu0 %923
    %925 = vrot.lane.b32.xlu0 %v618, 111
    %v926 = vpop.permute.xlu0 %925
    %927 = vrot.lane.b32.xlu0 %v622, 111
    %v928 = vpop.permute.xlu0 %927
    %v929 = vsel %vm455, %v922, %v926
    %v930 = vsel %vm455, %v924, %v928
    %v931 = vsel %vm455, %v918, %v922
    %v932 = vsel %vm455, %v920, %v924
    %v933 = vsel %vm455, %v914, %v918
    %v934 = vsel %vm455, %v916, %v920
    %v935 = vsel %vm455, %v926, %v914
    %v936 = vsel %vm455, %v928, %v916
    %v937 = vmul.f32 %v933, %v130
    %v938 = vmul.f32 %v931, %v131
    %v939 = vmul.f32 %v929, %v132
    %v940 = vmul.f32 %v935, %v133
    %v941 = vmul.f32 %v934, %v130
    %v942 = vmul.f32 %v932, %v131
    %v943 = vmul.f32 %v930, %v132
    %v944 = vmul.f32 %v936, %v133
    %v945 = vpack.c.bf16 %v941, %v937
    %v946 = vpack.c.bf16 %v942, %v938
    %v947 = vpack.c.bf16 %v943, %v939
    %v948 = vpack.c.bf16 %v944, %v940
    %949 = vst [vmem:[#allocation2 + $0x100] sm:$0xff] %v945
    %950 = vst [vmem:[#allocation2 + $0x108] sm:$0xff] %v946
    %951 = vst [vmem:[#allocation2 + $0x110] sm:$0xff] %v947
    %952 = vst [vmem:[#allocation2 + $0x118] sm:$0xff] %v948
    %v953 = vld [vmem:[#allocation2] sm:$0xff]
    %v954 = vld [vmem:[#allocation2 + $0x8] sm:$0xff]
    %v955 = vld [vmem:[#allocation2 + $0x10] sm:$0xff]
    %v956 = vld [vmem:[#allocation2 + $0x18] sm:$0xff]
    %v957 = vld [vmem:[#allocation2 + $0x20] sm:$0xff]
    %v958 = vld [vmem:[#allocation2 + $0x28] sm:$0xff]
    %v959 = vld [vmem:[#allocation2 + $0x30] sm:$0xff]
    %v960 = vld [vmem:[#allocation2 + $0x38] sm:$0xff]
    %v961 = vld [vmem:[#allocation2 + $0x40] sm:$0xff]
    %v962 = vld [vmem:[#allocation2 + $0x48] sm:$0xff]
    %v963 = vld [vmem:[#allocation2 + $0x50] sm:$0xff]
    %v964 = vld [vmem:[#allocation2 + $0x58] sm:$0xff]
    %v965 = vld [vmem:[#allocation2 + $0x60] sm:$0xff]
    %v966 = vld [vmem:[#allocation2 + $0x68] sm:$0xff]
    %v967 = vld [vmem:[#allocation2 + $0x70] sm:$0xff]
    %v968 = vld [vmem:[#allocation2 + $0x78] sm:$0xff]
    %v969 = vld [vmem:[#allocation2 + $0x80] sm:$0xff]
    %v970 = vld [vmem:[#allocation2 + $0x88] sm:$0xff]
    %v971 = vld [vmem:[#allocation2 + $0x90] sm:$0xff]
    %v972 = vld [vmem:[#allocation2 + $0x98] sm:$0xff]
    %v973 = vld [vmem:[#allocation2 + $0xa0] sm:$0xff]
    %v974 = vld [vmem:[#allocation2 + $0xa8] sm:$0xff]
    %v975 = vld [vmem:[#allocation2 + $0xb0] sm:$0xff]
    %v976 = vld [vmem:[#allocation2 + $0xb8] sm:$0xff]
    %v977 = vld [vmem:[#allocation2 + $0xc0] sm:$0xff]
    %v978 = vld [vmem:[#allocation2 + $0xc8] sm:$0xff]
    %v979 = vld [vmem:[#allocation2 + $0xd0] sm:$0xff]
    %v980 = vld [vmem:[#allocation2 + $0xd8] sm:$0xff]
    %v981 = vld [vmem:[#allocation2 + $0xe0] sm:$0xff]
    %v982 = vld [vmem:[#allocation2 + $0xe8] sm:$0xff]
    %v983 = vld [vmem:[#allocation2 + $0xf0] sm:$0xff]
    %v984 = vld [vmem:[#allocation2 + $0xf8] sm:$0xff]
    %v985 = vld [vmem:[#allocation2 + $0x100] sm:$0xff]
    %v986 = vld [vmem:[#allocation2 + $0x108] sm:$0xff]
    %v987 = vld [vmem:[#allocation2 + $0x110] sm:$0xff]
    %v988 = vld [vmem:[#allocation2 + $0x118] sm:$0xff]
    %v991 = vunpack.c.l.b16 %v623
    %v992 = vunpack.c.h.b16 %v623
    %v993 = vunpack.c.l.b16 %v624
    %v994 = vunpack.c.h.b16 %v624
    %v995 = vpack.c.b16 %v993, %v991
    %v996 = vpack.c.b16 %v994, %v992
    %v999 = vsel %vm525, %v996, 0
    %1001 = vmatprep.subr.bf16.mxu0 %v954
    %1002 = vmatpush1.bf16.msra.mxu0 %v953
    %1003 = vmatprep.subr.bf16.mxu0 %v958
    %1004 = vmatpush1.bf16.msra.mxu0 %v957
    %1005 = vmatprep.subr.bf16.mxu0 %v962
    %1006 = vmatpush1.bf16.msra.mxu0 %v961
    %1007 = vmatprep.subr.bf16.mxu0 %v966
    %1008 = vmatpush1.bf16.msra.mxu0 %v965
    %1009 = vmatprep.subr.bf16.mxu0 %v970
    %1010 = vmatpush1.bf16.msra.mxu0 %v969
    %1011 = vmatprep.subr.bf16.mxu0 %v974
    %1012 = vmatpush1.bf16.msra.mxu0 %v973
    %1013 = vmatprep.subr.bf16.mxu0 %v978
    %1014 = vmatpush1.bf16.msra.mxu0 %v977
    %1015 = vmatprep.subr.bf16.mxu0 %v982
    %1016 = vmatpush1.bf16.msra.mxu0 %v981
    %1017 = vmatprep.subr.bf16.mxu0 %v986
    %1018 = vmatpush1.bf16.msra.mxu0 %v985
    %1019 = vmatprep.subr.bf16.mxu0 0
    %1020 = vmatpush1.bf16.msra.mxu0 0
    %1021 = vmatprep.subr.bf16.mxu0 0
    %1022 = vmatpush1.bf16.msra.mxu0 0
    %1023 = vmatprep.subr.bf16.mxu0 0
    %1024 = vmatpush1.bf16.msra.mxu0 0
    %1025 = vmatprep.subr.bf16.mxu0 0
    %1026 = vmatpush1.bf16.msra.mxu0 0
    %1027 = vmatprep.subr.bf16.mxu0 0
    %1028 = vmatpush1.bf16.msra.mxu0 0
    %1029 = vmatprep.subr.bf16.mxu0 0
    %1030 = vmatpush1.bf16.msra.mxu0 0
    %1031 = vmatprep.subr.bf16.mxu0 0
    %1032 = vmatpush1.bf16.msra.mxu0 0
    %1033 = vmatprep.mubr.bf16.mxu0 %v999
    %1034 = vmatmul.mubr.bf16.gmra.mrb[0].mxu0 %v995
    %v1035 = vpop.f32.mrb[0].mxu0
    %v1036 = vadd.f32 0.0, %v1035
    %v1037 = vpop.f32.mrb[0].mxu0
    %v1038 = vadd.f32 0.0, %v1037
    %v1039 = vpop.f32.mrb[0].mxu0
    %v1040 = vadd.f32 0.0, %v1039
    %v1041 = vpop.f32.mrb[0].mxu0
    %v1042 = vadd.f32 0.0, %v1041
    %1043 = vdwg.mxu0
    %1044 = vmatprep.subr.bf16.mxu0 %v956
    %1045 = vmatpush1.bf16.msra.mxu0 %v955
    %1046 = vmatprep.subr.bf16.mxu0 %v960
    %1047 = vmatpush1.bf16.msra.mxu0 %v959
    %1048 = vmatprep.subr.bf16.mxu0 %v964
    %1049 = vmatpush1.bf16.msra.mxu0 %v963
    %1050 = vmatprep.subr.bf16.mxu0 %v968
    %1051 = vmatpush1.bf16.msra.mxu0 %v967
    %1052 = vmatprep.subr.bf16.mxu0 %v972
    %1053 = vmatpush1.bf16.msra.mxu0 %v971
    %1054 = vmatprep.subr.bf16.mxu0 %v976
    %1055 = vmatpush1.bf16.msra.mxu0 %v975
    %1056 = vmatprep.subr.bf16.mxu0 %v980
    %1057 = vmatpush1.bf16.msra.mxu0 %v979
    %1058 = vmatprep.subr.bf16.mxu0 %v984
    %1059 = vmatpush1.bf16.msra.mxu0 %v983
    %1060 = vmatprep.subr.bf16.mxu0 %v988
    %1061 = vmatpush1.bf16.msra.mxu0 %v987
    %1062 = vmatprep.subr.bf16.mxu0 0
    %1063 = vmatpush1.bf16.msra.mxu0 0
    %1064 = vmatprep.subr.bf16.mxu0 0
    %1065 = vmatpush1.bf16.msra.mxu0 0
    %1066 = vmatprep.subr.bf16.mxu0 0
    %1067 = vmatpush1.bf16.msra.mxu0 0
    %1068 = vmatprep.subr.bf16.mxu0 0
    %1069 = vmatpush1.bf16.msra.mxu0 0
    %1070 = vmatprep.subr.bf16.mxu0 0
    %1071 = vmatpush1.bf16.msra.mxu0 0
    %1072 = vmatprep.subr.bf16.mxu0 0
    %1073 = vmatpush1.bf16.msra.mxu0 0
    %1074 = vmatprep.subr.bf16.mxu0 0
    %1075 = vmatpush1.bf16.msra.mxu0 0
    %1076 = vmatprep.mubr.bf16.mxu0 %v999
    %1077 = vmatmul.mubr.bf16.gmra.mrb[0].mxu0 %v995
    %v1078 = vpop.f32.mrb[0].mxu0
    %v1079 = vadd.f32 0.0, %v1078
    %v1080 = vpop.f32.mrb[0].mxu0
    %v1081 = vadd.f32 0.0, %v1080
    %v1082 = vpop.f32.mrb[0].mxu0
    %v1083 = vadd.f32 0.0, %v1082
    %v1084 = vpop.f32.mrb[0].mxu0
    %v1085 = vadd.f32 0.0, %v1084
    %1086 = vdwg.mxu0
    %v1087 = vadd.f32 %v1036, %v1038
    %1088 = vadd.xlane.f32.xlu0 %v1087
    %v1089 = vpop.xlane.xlu0 %1088
    %v1090 = vadd.f32 %v1040, %v1042
    %1091 = vadd.xlane.f32.xlu0 %v1090
    %v1092 = vpop.xlane.xlu0 %1091
    %v1093 = vrcp.pop 256.0
    %v1094 = vmul.f32 %v1089, %v1093
    %v1095 = vmul.f32 %v1092, %v1093
    %v1096 = vld [vmem:[%s3] sm:$0xff]
    %v1097 = vld [vmem:[%s3 + $0x8] sm:$0xff]
    %v1098 = vmul.f32 %v1094, %v1096
    %v1099 = vmul.f32 %v1095, %v1097
    %vm1100 = vcmask 31744
    %v1101 = vsel %vm1100, %v1098, 0.0
    %v1102 = vsel %vm1100, %v1099, 0.0
    %v1103 = vadd.f32 %v1101, %v1102
    %v1104 = vrot.slane %v1103, 4
    %v1105 = vadd.f32 %v1103, %v1104
    %v1106 = vrot.slane %v1105, 2
    %v1107 = vadd.f32 %v1105, %v1106
    %v1108 = vrot.slane %v1107, 1
    %v1109 = vadd.f32 %v1107, %v1108
    %v1110 = vmax.f32 %v1109, 0.0
    %v1111 = vld [vmem:[%s4] sm:$0xff]
    %v1112 = vld [vmem:[%s4 + $0x8] sm:$0xff]
    %v1113 = vmul.f32 %v1111, %v1110
    %v1114 = vmul.f32 %v1112, %v1110
    %v1115 = vsel %vm1100, %v1113, 0.0
    %1116 = vadd.xlane.f32.xlu0 %v1115
    %v1117 = vpop.xlane.xlu0 %1116
    %v1118 = vsel %vm1100, %v1114, 0.0
    %1119 = vadd.xlane.f32.xlu0 %v1118
    %v1120 = vpop.xlane.xlu0 %1119
    %v1121 = vsub.f32 0.0, %v1117
    %v1122 = vsub.f32 0.0, %v1120
    %v1123 = vmul.f32 %v1121, 1.442695
    %v1124 = vpow.pop %v1123
    %v1125 = vmul.f32 %v1122, 1.442695
    %v1126 = vpow.pop %v1125
    %v1127 = vadd.f32 %v1124, 1.0
    %v1128 = vadd.f32 %v1126, 1.0
    %v1129 = vrcp.pop %v1127
    %v1130 = vrcp.pop %v1128
    %v1131 = vmul.f32 %v1036, %v1129
    %v1132 = vmul.f32 %v1038, %v1129
    %v1133 = vmul.f32 %v1040, %v1130
    %v1134 = vmul.f32 %v1042, %v1130
    %v1135 = vadd.f32 %v1079, %v1081
    %1136 = vadd.xlane.f32.xlu0 %v1135
    %v1137 = vpop.xlane.xlu0 %1136
    %v1138 = vadd.f32 %v1083, %v1085
    %1139 = vadd.xlane.f32.xlu0 %v1138
    %v1140 = vpop.xlane.xlu0 %1139
    %v1141 = vmul.f32 %v1137, %v1093
    %v1142 = vmul.f32 %v1140, %v1093
    %v1143 = vmul.f32 %v1141, %v1096
    %v1144 = vmul.f32 %v1142, %v1097
    %v1145 = vsel %vm1100, %v1143, 0.0
    %v1146 = vsel %vm1100, %v1144, 0.0
    %v1147 = vadd.f32 %v1145, %v1146
    %v1148 = vrot.slane %v1147, 4
    %v1149 = vadd.f32 %v1147, %v1148
    %v1150 = vrot.slane %v1149, 2
    %v1151 = vadd.f32 %v1149, %v1150
    %v1152 = vrot.slane %v1151, 1
    %v1153 = vadd.f32 %v1151, %v1152
    %v1154 = vmax.f32 %v1153, 0.0
    %v1155 = vmul.f32 %v1111, %v1154
    %v1156 = vmul.f32 %v1112, %v1154
    %v1157 = vsel %vm1100, %v1155, 0.0
    %1158 = vadd.xlane.f32.xlu0 %v1157
    %v1159 = vpop.xlane.xlu0 %1158
    %v1160 = vsel %vm1100, %v1156, 0.0
    %1161 = vadd.xlane.f32.xlu0 %v1160
    %v1162 = vpop.xlane.xlu0 %1161
    %v1163 = vsub.f32 0.0, %v1159
    %v1164 = vsub.f32 0.0, %v1162
    %v1165 = vmul.f32 %v1163, 1.442695
    %v1166 = vpow.pop %v1165
    %v1167 = vmul.f32 %v1164, 1.442695
    %v1168 = vpow.pop %v1167
    %v1169 = vadd.f32 %v1166, 1.0
    %v1170 = vadd.f32 %v1168, 1.0
    %v1171 = vrcp.pop %v1169
    %v1172 = vrcp.pop %v1170
    %v1173 = vmul.f32 %v1079, %v1171
    %v1174 = vmul.f32 %v1081, %v1171
    %v1175 = vmul.f32 %v1083, %v1172
    %v1176 = vmul.f32 %v1085, %v1172
    %v1177 = vadd.f32 %v1131, %v134
    %v1178 = vadd.f32 %v1132, %v135
    %v1179 = vadd.f32 %v1173, %v136
    %v1180 = vadd.f32 %v1174, %v137
    %v1181 = vadd.f32 %v1133, %v138
    %v1182 = vadd.f32 %v1134, %v139
    %v1183 = vadd.f32 %v1175, %v140
    %v1184 = vadd.f32 %v1176, %v141
    %s1185 = scalar_lea.vmem [#allocation3], 16
    %v1186 = vld [vmem:[%s1185] sm:$0xff]
    %v1187 = vld [vmem:[%s1185 + $0x8] sm:$0xff]
    %1188 = vrot.lane.b32.xlu0 %v1177, 17
    %v1189 = vpop.permute.xlu0 %1188
    %1190 = vrot.lane.b32.xlu0 %v1181, 17
    %v1191 = vpop.permute.xlu0 %1190
    %1192 = vrot.lane.b32.xlu0 %v1178, 17
    %v1193 = vpop.permute.xlu0 %1192
    %1194 = vrot.lane.b32.xlu0 %v1182, 17
    %v1195 = vpop.permute.xlu0 %1194
    %1196 = vrot.lane.b32.xlu0 %v1179, 17
    %v1197 = vpop.permute.xlu0 %1196
    %1198 = vrot.lane.b32.xlu0 %v1183, 17
    %v1199 = vpop.permute.xlu0 %1198
    %1200 = vrot.lane.b32.xlu0 %v1180, 17
    %v1201 = vpop.permute.xlu0 %1200
    %1202 = vrot.lane.b32.xlu0 %v1184, 17
    %v1203 = vpop.permute.xlu0 %1202
    %v1204 = vsel %vm160, %v1197, %v1201
    %v1205 = vsel %vm160, %v1199, %v1203
    %v1206 = vsel %vm160, %v1193, %v1197
    %v1207 = vsel %vm160, %v1195, %v1199
    %v1208 = vsel %vm160, %v1189, %v1193
    %v1209 = vsel %vm160, %v1191, %v1195
    %v1210 = vsel %vm160, %v1201, %v1189
    %v1211 = vsel %vm160, %v1203, %v1191
    %v1212 = vmul.f32 %v1210, %v82
    %v1213 = vmul.f32 %v1208, %v83
    %v1214 = vmul.f32 %v1206, %v84
    %v1215 = vmul.f32 %v1204, %v85
    %v1216 = vmul.f32 %v1211, %v82
    %v1217 = vmul.f32 %v1209, %v83
    %v1218 = vmul.f32 %v1207, %v84
    %v1219 = vmul.f32 %v1205, %v85
    %v1220 = vpack.c.bf16 %v1216, %v1212
    %v1221 = vpack.c.bf16 %v1217, %v1213
    %v1222 = vpack.c.bf16 %v1218, %v1214
    %v1223 = vpack.c.bf16 %v1219, %v1215
    %1224 = vst [vmem:[#allocation2] sm:$0xff] %v1220
    %1225 = vst [vmem:[#allocation2 + $0x8] sm:$0xff] %v1221
    %1226 = vst [vmem:[#allocation2 + $0x10] sm:$0xff] %v1222
    %1227 = vst [vmem:[#allocation2 + $0x18] sm:$0xff] %v1223
    %1228 = vrot.lane.b32.xlu0 %v1177, 16
    %v1229 = vpop.permute.xlu0 %1228
    %1230 = vrot.lane.b32.xlu0 %v1181, 16
    %v1231 = vpop.permute.xlu0 %1230
    %1232 = vrot.lane.b32.xlu0 %v1178, 16
    %v1233 = vpop.permute.xlu0 %1232
    %1234 = vrot.lane.b32.xlu0 %v1182, 16
    %v1235 = vpop.permute.xlu0 %1234
    %1236 = vrot.lane.b32.xlu0 %v1179, 16
    %v1237 = vpop.permute.xlu0 %1236
    %1238 = vrot.lane.b32.xlu0 %v1183, 16
    %v1239 = vpop.permute.xlu0 %1238
    %1240 = vrot.lane.b32.xlu0 %v1180, 16
    %v1241 = vpop.permute.xlu0 %1240
    %1242 = vrot.lane.b32.xlu0 %v1184, 16
    %v1243 = vpop.permute.xlu0 %1242
    %v1244 = vsel %vm201, %v1237, %v1241
    %v1245 = vsel %vm201, %v1239, %v1243
    %v1246 = vsel %vm201, %v1233, %v1237
    %v1247 = vsel %vm201, %v1235, %v1239
    %v1248 = vsel %vm201, %v1229, %v1233
    %v1249 = vsel %vm201, %v1231, %v1235
    %v1250 = vsel %vm201, %v1241, %v1229
    %v1251 = vsel %vm201, %v1243, %v1231
    %v1252 = vmul.f32 %v1250, %v86
    %v1253 = vmul.f32 %v1248, %v87
    %v1254 = vmul.f32 %v1246, %v88
    %v1255 = vmul.f32 %v1244, %v89
    %v1256 = vmul.f32 %v1251, %v86
    %v1257 = vmul.f32 %v1249, %v87
    %v1258 = vmul.f32 %v1247, %v88
    %v1259 = vmul.f32 %v1245, %v89
    %v1260 = vpack.c.bf16 %v1256, %v1252
    %v1261 = vpack.c.bf16 %v1257, %v1253
    %v1262 = vpack.c.bf16 %v1258, %v1254
    %v1263 = vpack.c.bf16 %v1259, %v1255
    %1264 = vst [vmem:[#allocation2 + $0x20] sm:$0xff] %v1260
    %1265 = vst [vmem:[#allocation2 + $0x28] sm:$0xff] %v1261
    %1266 = vst [vmem:[#allocation2 + $0x30] sm:$0xff] %v1262
    %1267 = vst [vmem:[#allocation2 + $0x38] sm:$0xff] %v1263
    %1268 = vrot.lane.b32.xlu0 %v1177, 15
    %v1269 = vpop.permute.xlu0 %1268
    %1270 = vrot.lane.b32.xlu0 %v1181, 15
    %v1271 = vpop.permute.xlu0 %1270
    %1272 = vrot.lane.b32.xlu0 %v1178, 15
    %v1273 = vpop.permute.xlu0 %1272
    %1274 = vrot.lane.b32.xlu0 %v1182, 15
    %v1275 = vpop.permute.xlu0 %1274
    %1276 = vrot.lane.b32.xlu0 %v1179, 15
    %v1277 = vpop.permute.xlu0 %1276
    %1278 = vrot.lane.b32.xlu0 %v1183, 15
    %v1279 = vpop.permute.xlu0 %1278
    %1280 = vrot.lane.b32.xlu0 %v1180, 15
    %v1281 = vpop.permute.xlu0 %1280
    %1282 = vrot.lane.b32.xlu0 %v1184, 15
    %v1283 = vpop.permute.xlu0 %1282
    %v1284 = vsel %vm242, %v1277, %v1281
    %v1285 = vsel %vm242, %v1279, %v1283
    %v1286 = vsel %vm242, %v1273, %v1277
    %v1287 = vsel %vm242, %v1275, %v1279
    %v1288 = vsel %vm242, %v1269, %v1273
    %v1289 = vsel %vm242, %v1271, %v1275
    %v1290 = vsel %vm242, %v1281, %v1269
    %v1291 = vsel %vm242, %v1283, %v1271
    %v1292 = vmul.f32 %v1290, %v98
    %v1293 = vmul.f32 %v1288, %v99
    %v1294 = vmul.f32 %v1286, %v100
    %v1295 = vmul.f32 %v1284, %v101
    %v1296 = vmul.f32 %v1291, %v98
    %v1297 = vmul.f32 %v1289, %v99
    %v1298 = vmul.f32 %v1287, %v100
    %v1299 = vmul.f32 %v1285, %v101
    %v1300 = vpack.c.bf16 %v1296, %v1292
    %v1301 = vpack.c.bf16 %v1297, %v1293
    %v1302 = vpack.c.bf16 %v1298, %v1294
    %v1303 = vpack.c.bf16 %v1299, %v1295
    %1304 = vst [vmem:[#allocation2 + $0x40] sm:$0xff] %v1300
    %1305 = vst [vmem:[#allocation2 + $0x48] sm:$0xff] %v1301
    %1306 = vst [vmem:[#allocation2 + $0x50] sm:$0xff] %v1302
    %1307 = vst [vmem:[#allocation2 + $0x58] sm:$0xff] %v1303
    %1308 = vrot.lane.b32.xlu0 %v1177, 1
    %v1309 = vpop.permute.xlu0 %1308
    %1310 = vrot.lane.b32.xlu0 %v1181, 1
    %v1311 = vpop.permute.xlu0 %1310
    %1312 = vrot.lane.b32.xlu0 %v1178, 1
    %v1313 = vpop.permute.xlu0 %1312
    %1314 = vrot.lane.b32.xlu0 %v1182, 1
    %v1315 = vpop.permute.xlu0 %1314
    %1316 = vrot.lane.b32.xlu0 %v1179, 1
    %v1317 = vpop.permute.xlu0 %1316
    %1318 = vrot.lane.b32.xlu0 %v1183, 1
    %v1319 = vpop.permute.xlu0 %1318
    %1320 = vrot.lane.b32.xlu0 %v1180, 1
    %v1321 = vpop.permute.xlu0 %1320
    %1322 = vrot.lane.b32.xlu0 %v1184, 1
    %v1323 = vpop.permute.xlu0 %1322
    %v1324 = vsel %vm283, %v1317, %v1321
    %v1325 = vsel %vm283, %v1319, %v1323
    %v1326 = vsel %vm283, %v1313, %v1317
    %v1327 = vsel %vm283, %v1315, %v1319
    %v1328 = vsel %vm283, %v1309, %v1313
    %v1329 = vsel %vm283, %v1311, %v1315
    %v1330 = vsel %vm283, %v1321, %v1309
    %v1331 = vsel %vm283, %v1323, %v1311
    %v1332 = vmul.f32 %v1330, %v102
    %v1333 = vmul.f32 %v1328, %v103
    %v1334 = vmul.f32 %v1326, %v104
    %v1335 = vmul.f32 %v1324, %v105
    %v1336 = vmul.f32 %v1331, %v102
    %v1337 = vmul.f32 %v1329, %v103
    %v1338 = vmul.f32 %v1327, %v104
    %v1339 = vmul.f32 %v1325, %v105
    %v1340 = vpack.c.bf16 %v1336, %v1332
    %v1341 = vpack.c.bf16 %v1337, %v1333
    %v1342 = vpack.c.bf16 %v1338, %v1334
    %v1343 = vpack.c.bf16 %v1339, %v1335
    %1344 = vst [vmem:[#allocation2 + $0x60] sm:$0xff] %v1340
    %1345 = vst [vmem:[#allocation2 + $0x68] sm:$0xff] %v1341
    %1346 = vst [vmem:[#allocation2 + $0x70] sm:$0xff] %v1342
    %1347 = vst [vmem:[#allocation2 + $0x78] sm:$0xff] %v1343
    %v1348 = vpack.c.bf16 %v1181, %v1177
    %v1349 = vpack.c.bf16 %v1182, %v1178
    %v1350 = vpack.c.bf16 %v1183, %v1179
    %v1351 = vpack.c.bf16 %v1184, %v1180
    %1352 = vst [vmem:[#allocation2 + $0x80] sm:$0xff] %v1348
    %1353 = vst [vmem:[#allocation2 + $0x88] sm:$0xff] %v1349
    %1354 = vst [vmem:[#allocation2 + $0x90] sm:$0xff] %v1350
    %1355 = vst [vmem:[#allocation2 + $0x98] sm:$0xff] %v1351
    %1356 = vrot.lane.b32.xlu0 %v1177, 127
    %v1357 = vpop.permute.xlu0 %1356
    %1358 = vrot.lane.b32.xlu0 %v1181, 127
    %v1359 = vpop.permute.xlu0 %1358
    %1360 = vrot.lane.b32.xlu0 %v1178, 127
    %v1361 = vpop.permute.xlu0 %1360
    %1362 = vrot.lane.b32.xlu0 %v1182, 127
    %v1363 = vpop.permute.xlu0 %1362
    %1364 = vrot.lane.b32.xlu0 %v1179, 127
    %v1365 = vpop.permute.xlu0 %1364
    %1366 = vrot.lane.b32.xlu0 %v1183, 127
    %v1367 = vpop.permute.xlu0 %1366
    %1368 = vrot.lane.b32.xlu0 %v1180, 127
    %v1369 = vpop.permute.xlu0 %1368
    %1370 = vrot.lane.b32.xlu0 %v1184, 127
    %v1371 = vpop.permute.xlu0 %1370
    %v1372 = vsel %vm332, %v1365, %v1369
    %v1373 = vsel %vm332, %v1367, %v1371
    %v1374 = vsel %vm332, %v1361, %v1365
    %v1375 = vsel %vm332, %v1363, %v1367
    %v1376 = vsel %vm332, %v1357, %v1361
    %v1377 = vsel %vm332, %v1359, %v1363
    %v1378 = vsel %vm332, %v1369, %v1357
    %v1379 = vsel %vm332, %v1371, %v1359
    %v1380 = vmul.f32 %v1376, %v106
    %v1381 = vmul.f32 %v1374, %v107
    %v1382 = vmul.f32 %v1372, %v108
    %v1383 = vmul.f32 %v1378, %v109
    %v1384 = vmul.f32 %v1377, %v106
    %v1385 = vmul.f32 %v1375, %v107
    %v1386 = vmul.f32 %v1373, %v108
    %v1387 = vmul.f32 %v1379, %v109
    %v1388 = vpack.c.bf16 %v1384, %v1380
    %v1389 = vpack.c.bf16 %v1385, %v1381
    %v1390 = vpack.c.bf16 %v1386, %v1382
    %v1391 = vpack.c.bf16 %v1387, %v1383
    %1392 = vst [vmem:[#allocation2 + $0xa0] sm:$0xff] %v1388
    %1393 = vst [vmem:[#allocation2 + $0xa8] sm:$0xff] %v1389
    %1394 = vst [vmem:[#allocation2 + $0xb0] sm:$0xff] %v1390
    %1395 = vst [vmem:[#allocation2 + $0xb8] sm:$0xff] %v1391
    %1396 = vrot.lane.b32.xlu0 %v1177, 113
    %v1397 = vpop.permute.xlu0 %1396
    %1398 = vrot.lane.b32.xlu0 %v1181, 113
    %v1399 = vpop.permute.xlu0 %1398
    %1400 = vrot.lane.b32.xlu0 %v1178, 113
    %v1401 = vpop.permute.xlu0 %1400
    %1402 = vrot.lane.b32.xlu0 %v1182, 113
    %v1403 = vpop.permute.xlu0 %1402
    %1404 = vrot.lane.b32.xlu0 %v1179, 113
    %v1405 = vpop.permute.xlu0 %1404
    %1406 = vrot.lane.b32.xlu0 %v1183, 113
    %v1407 = vpop.permute.xlu0 %1406
    %1408 = vrot.lane.b32.xlu0 %v1180, 113
    %v1409 = vpop.permute.xlu0 %1408
    %1410 = vrot.lane.b32.xlu0 %v1184, 113
    %v1411 = vpop.permute.xlu0 %1410
    %v1412 = vsel %vm373, %v1405, %v1409
    %v1413 = vsel %vm373, %v1407, %v1411
    %v1414 = vsel %vm373, %v1401, %v1405
    %v1415 = vsel %vm373, %v1403, %v1407
    %v1416 = vsel %vm373, %v1397, %v1401
    %v1417 = vsel %vm373, %v1399, %v1403
    %v1418 = vsel %vm373, %v1409, %v1397
    %v1419 = vsel %vm373, %v1411, %v1399
    %v1420 = vmul.f32 %v1416, %v118
    %v1421 = vmul.f32 %v1414, %v119
    %v1422 = vmul.f32 %v1412, %v120
    %v1423 = vmul.f32 %v1418, %v121
    %v1424 = vmul.f32 %v1417, %v118
    %v1425 = vmul.f32 %v1415, %v119
    %v1426 = vmul.f32 %v1413, %v120
    %v1427 = vmul.f32 %v1419, %v121
    %v1428 = vpack.c.bf16 %v1424, %v1420
    %v1429 = vpack.c.bf16 %v1425, %v1421
    %v1430 = vpack.c.bf16 %v1426, %v1422
    %v1431 = vpack.c.bf16 %v1427, %v1423
    %1432 = vst [vmem:[#allocation2 + $0xc0] sm:$0xff] %v1428
    %1433 = vst [vmem:[#allocation2 + $0xc8] sm:$0xff] %v1429
    %1434 = vst [vmem:[#allocation2 + $0xd0] sm:$0xff] %v1430
    %1435 = vst [vmem:[#allocation2 + $0xd8] sm:$0xff] %v1431
    %1436 = vrot.lane.b32.xlu0 %v1177, 112
    %v1437 = vpop.permute.xlu0 %1436
    %1438 = vrot.lane.b32.xlu0 %v1181, 112
    %v1439 = vpop.permute.xlu0 %1438
    %1440 = vrot.lane.b32.xlu0 %v1178, 112
    %v1441 = vpop.permute.xlu0 %1440
    %1442 = vrot.lane.b32.xlu0 %v1182, 112
    %v1443 = vpop.permute.xlu0 %1442
    %1444 = vrot.lane.b32.xlu0 %v1179, 112
    %v1445 = vpop.permute.xlu0 %1444
    %1446 = vrot.lane.b32.xlu0 %v1183, 112
    %v1447 = vpop.permute.xlu0 %1446
    %1448 = vrot.lane.b32.xlu0 %v1180, 112
    %v1449 = vpop.permute.xlu0 %1448
    %1450 = vrot.lane.b32.xlu0 %v1184, 112
    %v1451 = vpop.permute.xlu0 %1450
    %v1452 = vsel %vm414, %v1445, %v1449
    %v1453 = vsel %vm414, %v1447, %v1451
    %v1454 = vsel %vm414, %v1441, %v1445
    %v1455 = vsel %vm414, %v1443, %v1447
    %v1456 = vsel %vm414, %v1437, %v1441
    %v1457 = vsel %vm414, %v1439, %v1443
    %v1458 = vsel %vm414, %v1449, %v1437
    %v1459 = vsel %vm414, %v1451, %v1439
    %v1460 = vmul.f32 %v1456, %v122
    %v1461 = vmul.f32 %v1454, %v123
    %v1462 = vmul.f32 %v1452, %v124
    %v1463 = vmul.f32 %v1458, %v125
    %v1464 = vmul.f32 %v1457, %v122
    %v1465 = vmul.f32 %v1455, %v123
    %v1466 = vmul.f32 %v1453, %v124
    %v1467 = vmul.f32 %v1459, %v125
    %v1468 = vpack.c.bf16 %v1464, %v1460
    %v1469 = vpack.c.bf16 %v1465, %v1461
    %v1470 = vpack.c.bf16 %v1466, %v1462
    %v1471 = vpack.c.bf16 %v1467, %v1463
    %1472 = vst [vmem:[#allocation2 + $0xe0] sm:$0xff] %v1468
    %1473 = vst [vmem:[#allocation2 + $0xe8] sm:$0xff] %v1469
    %1474 = vst [vmem:[#allocation2 + $0xf0] sm:$0xff] %v1470
    %1475 = vst [vmem:[#allocation2 + $0xf8] sm:$0xff] %v1471
    %1476 = vrot.lane.b32.xlu0 %v1177, 111
    %v1477 = vpop.permute.xlu0 %1476
    %1478 = vrot.lane.b32.xlu0 %v1181, 111
    %v1479 = vpop.permute.xlu0 %1478
    %1480 = vrot.lane.b32.xlu0 %v1178, 111
    %v1481 = vpop.permute.xlu0 %1480
    %1482 = vrot.lane.b32.xlu0 %v1182, 111
    %v1483 = vpop.permute.xlu0 %1482
    %1484 = vrot.lane.b32.xlu0 %v1179, 111
    %v1485 = vpop.permute.xlu0 %1484
    %1486 = vrot.lane.b32.xlu0 %v1183, 111
    %v1487 = vpop.permute.xlu0 %1486
    %1488 = vrot.lane.b32.xlu0 %v1180, 111
    %v1489 = vpop.permute.xlu0 %1488
    %1490 = vrot.lane.b32.xlu0 %v1184, 111
    %v1491 = vpop.permute.xlu0 %1490
    %v1492 = vsel %vm455, %v1485, %v1489
    %v1493 = vsel %vm455, %v1487, %v1491
    %v1494 = vsel %vm455, %v1481, %v1485
    %v1495 = vsel %vm455, %v1483, %v1487
    %v1496 = vsel %vm455, %v1477, %v1481
    %v1497 = vsel %vm455, %v1479, %v1483
    %v1498 = vsel %vm455, %v1489, %v1477
    %v1499 = vsel %vm455, %v1491, %v1479
    %v1500 = vmul.f32 %v1496, %v130
    %v1501 = vmul.f32 %v1494, %v131
    %v1502 = vmul.f32 %v1492, %v132
    %v1503 = vmul.f32 %v1498, %v133
    %v1504 = vmul.f32 %v1497, %v130
    %v1505 = vmul.f32 %v1495, %v131
    %v1506 = vmul.f32 %v1493, %v132
    %v1507 = vmul.f32 %v1499, %v133
    %v1508 = vpack.c.bf16 %v1504, %v1500
    %v1509 = vpack.c.bf16 %v1505, %v1501
    %v1510 = vpack.c.bf16 %v1506, %v1502
    %v1511 = vpack.c.bf16 %v1507, %v1503
    %1512 = vst [vmem:[#allocation2 + $0x100] sm:$0xff] %v1508
    %1513 = vst [vmem:[#allocation2 + $0x108] sm:$0xff] %v1509
    %1514 = vst [vmem:[#allocation2 + $0x110] sm:$0xff] %v1510
    %1515 = vst [vmem:[#allocation2 + $0x118] sm:$0xff] %v1511
    %v1516 = vld [vmem:[#allocation2] sm:$0xff]
    %v1517 = vld [vmem:[#allocation2 + $0x8] sm:$0xff]
    %v1518 = vld [vmem:[#allocation2 + $0x10] sm:$0xff]
    %v1519 = vld [vmem:[#allocation2 + $0x18] sm:$0xff]
    %v1520 = vld [vmem:[#allocation2 + $0x20] sm:$0xff]
    %v1521 = vld [vmem:[#allocation2 + $0x28] sm:$0xff]
    %v1522 = vld [vmem:[#allocation2 + $0x30] sm:$0xff]
    %v1523 = vld [vmem:[#allocation2 + $0x38] sm:$0xff]
    %v1524 = vld [vmem:[#allocation2 + $0x40] sm:$0xff]
    %v1525 = vld [vmem:[#allocation2 + $0x48] sm:$0xff]
    %v1526 = vld [vmem:[#allocation2 + $0x50] sm:$0xff]
    %v1527 = vld [vmem:[#allocation2 + $0x58] sm:$0xff]
    %v1528 = vld [vmem:[#allocation2 + $0x60] sm:$0xff]
    %v1529 = vld [vmem:[#allocation2 + $0x68] sm:$0xff]
    %v1530 = vld [vmem:[#allocation2 + $0x70] sm:$0xff]
    %v1531 = vld [vmem:[#allocation2 + $0x78] sm:$0xff]
    %v1532 = vld [vmem:[#allocation2 + $0x80] sm:$0xff]
    %v1533 = vld [vmem:[#allocation2 + $0x88] sm:$0xff]
    %v1534 = vld [vmem:[#allocation2 + $0x90] sm:$0xff]
    %v1535 = vld [vmem:[#allocation2 + $0x98] sm:$0xff]
    %v1536 = vld [vmem:[#allocation2 + $0xa0] sm:$0xff]
    %v1537 = vld [vmem:[#allocation2 + $0xa8] sm:$0xff]
    %v1538 = vld [vmem:[#allocation2 + $0xb0] sm:$0xff]
    %v1539 = vld [vmem:[#allocation2 + $0xb8] sm:$0xff]
    %v1540 = vld [vmem:[#allocation2 + $0xc0] sm:$0xff]
    %v1541 = vld [vmem:[#allocation2 + $0xc8] sm:$0xff]
    %v1542 = vld [vmem:[#allocation2 + $0xd0] sm:$0xff]
    %v1543 = vld [vmem:[#allocation2 + $0xd8] sm:$0xff]
    %v1544 = vld [vmem:[#allocation2 + $0xe0] sm:$0xff]
    %v1545 = vld [vmem:[#allocation2 + $0xe8] sm:$0xff]
    %v1546 = vld [vmem:[#allocation2 + $0xf0] sm:$0xff]
    %v1547 = vld [vmem:[#allocation2 + $0xf8] sm:$0xff]
    %v1548 = vld [vmem:[#allocation2 + $0x100] sm:$0xff]
    %v1549 = vld [vmem:[#allocation2 + $0x108] sm:$0xff]
    %v1550 = vld [vmem:[#allocation2 + $0x110] sm:$0xff]
    %v1551 = vld [vmem:[#allocation2 + $0x118] sm:$0xff]
    %v1554 = vunpack.c.l.b16 %v1186
    %v1555 = vunpack.c.h.b16 %v1186
    %v1556 = vunpack.c.l.b16 %v1187
    %v1557 = vunpack.c.h.b16 %v1187
    %v1558 = vpack.c.b16 %v1556, %v1554
    %v1559 = vpack.c.b16 %v1557, %v1555
    %v1562 = vsel %vm525, %v1559, 0
    %1564 = vmatprep.subr.bf16.mxu0 %v1517
    %1565 = vmatpush1.bf16.msra.mxu0 %v1516
    %1566 = vmatprep.subr.bf16.mxu0 %v1521
    %1567 = vmatpush1.bf16.msra.mxu0 %v1520
    %1568 = vmatprep.subr.bf16.mxu0 %v1525
    %1569 = vmatpush1.bf16.msra.mxu0 %v1524
    %1570 = vmatprep.subr.bf16.mxu0 %v1529
    %1571 = vmatpush1.bf16.msra.mxu0 %v1528
    %1572 = vmatprep.subr.bf16.mxu0 %v1533
    %1573 = vmatpush1.bf16.msra.mxu0 %v1532
    %1574 = vmatprep.subr.bf16.mxu0 %v1537
    %1575 = vmatpush1.bf16.msra.mxu0 %v1536
    %1576 = vmatprep.subr.bf16.mxu0 %v1541
    %1577 = vmatpush1.bf16.msra.mxu0 %v1540
    %1578 = vmatprep.subr.bf16.mxu0 %v1545
    %1579 = vmatpush1.bf16.msra.mxu0 %v1544
    %1580 = vmatprep.subr.bf16.mxu0 %v1549
    %1581 = vmatpush1.bf16.msra.mxu0 %v1548
    %1582 = vmatprep.subr.bf16.mxu0 0
    %1583 = vmatpush1.bf16.msra.mxu0 0
    %1584 = vmatprep.subr.bf16.mxu0 0
    %1585 = vmatpush1.bf16.msra.mxu0 0
    %1586 = vmatprep.subr.bf16.mxu0 0
    %1587 = vmatpush1.bf16.msra.mxu0 0
    %1588 = vmatprep.subr.bf16.mxu0 0
    %1589 = vmatpush1.bf16.msra.mxu0 0
    %1590 = vmatprep.subr.bf16.mxu0 0
    %1591 = vmatpush1.bf16.msra.mxu0 0
    %1592 = vmatprep.subr.bf16.mxu0 0
    %1593 = vmatpush1.bf16.msra.mxu0 0
    %1594 = vmatprep.subr.bf16.mxu0 0
    %1595 = vmatpush1.bf16.msra.mxu0 0
    %1596 = vmatprep.mubr.bf16.mxu0 %v1562
    %1597 = vmatmul.mubr.bf16.gmra.mrb[0].mxu0 %v1558
    %v1598 = vpop.f32.mrb[0].mxu0
    %v1599 = vadd.f32 0.0, %v1598
    %v1600 = vpop.f32.mrb[0].mxu0
    %v1601 = vadd.f32 0.0, %v1600
    %v1602 = vpop.f32.mrb[0].mxu0
    %v1603 = vadd.f32 0.0, %v1602
    %v1604 = vpop.f32.mrb[0].mxu0
    %v1605 = vadd.f32 0.0, %v1604
    %1606 = vdwg.mxu0
    %1607 = vmatprep.subr.bf16.mxu0 %v1519
    %1608 = vmatpush1.bf16.msra.mxu0 %v1518
    %1609 = vmatprep.subr.bf16.mxu0 %v1523
    %1610 = vmatpush1.bf16.msra.mxu0 %v1522
    %1611 = vmatprep.subr.bf16.mxu0 %v1527
    %1612 = vmatpush1.bf16.msra.mxu0 %v1526
    %1613 = vmatprep.subr.bf16.mxu0 %v1531
    %1614 = vmatpush1.bf16.msra.mxu0 %v1530
    %1615 = vmatprep.subr.bf16.mxu0 %v1535
    %1616 = vmatpush1.bf16.msra.mxu0 %v1534
    %1617 = vmatprep.subr.bf16.mxu0 %v1539
    %1618 = vmatpush1.bf16.msra.mxu0 %v1538
    %1619 = vmatprep.subr.bf16.mxu0 %v1543
    %1620 = vmatpush1.bf16.msra.mxu0 %v1542
    %1621 = vmatprep.subr.bf16.mxu0 %v1547
    %1622 = vmatpush1.bf16.msra.mxu0 %v1546
    %1623 = vmatprep.subr.bf16.mxu0 %v1551
    %1624 = vmatpush1.bf16.msra.mxu0 %v1550
    %1625 = vmatprep.subr.bf16.mxu0 0
    %1626 = vmatpush1.bf16.msra.mxu0 0
    %1627 = vmatprep.subr.bf16.mxu0 0
    %1628 = vmatpush1.bf16.msra.mxu0 0
    %1629 = vmatprep.subr.bf16.mxu0 0
    %1630 = vmatpush1.bf16.msra.mxu0 0
    %1631 = vmatprep.subr.bf16.mxu0 0
    %1632 = vmatpush1.bf16.msra.mxu0 0
    %1633 = vmatprep.subr.bf16.mxu0 0
    %1634 = vmatpush1.bf16.msra.mxu0 0
    %1635 = vmatprep.subr.bf16.mxu0 0
    %1636 = vmatpush1.bf16.msra.mxu0 0
    %1637 = vmatprep.subr.bf16.mxu0 0
    %1638 = vmatpush1.bf16.msra.mxu0 0
    %1639 = vmatprep.mubr.bf16.mxu0 %v1562
    %1640 = vmatmul.mubr.bf16.gmra.mrb[0].mxu0 %v1558
    %v1641 = vpop.f32.mrb[0].mxu0
    %v1642 = vadd.f32 0.0, %v1641
    %v1643 = vpop.f32.mrb[0].mxu0
    %v1644 = vadd.f32 0.0, %v1643
    %v1645 = vpop.f32.mrb[0].mxu0
    %v1646 = vadd.f32 0.0, %v1645
    %v1647 = vpop.f32.mrb[0].mxu0
    %v1648 = vadd.f32 0.0, %v1647
    %1649 = vdwg.mxu0
    %v1650 = vmax.f32 %v1599, 0.0
    %v1651 = vmax.f32 %v1601, 0.0
    %v1652 = vmax.f32 %v1642, 0.0
    %v1653 = vmax.f32 %v1644, 0.0
    %v1654 = vmax.f32 %v1603, 0.0
    %v1655 = vmax.f32 %v1605, 0.0
    %v1656 = vmax.f32 %v1646, 0.0
    %v1657 = vmax.f32 %v1648, 0.0
    %s1658 = scalar_lea.vmem [#allocation6], 16
    %v1659 = vld [vmem:[%s1658] sm:$0xff]
    %v1660 = vld [vmem:[%s1658 + $0x8] sm:$0xff]
    %1661 = vrot.lane.b32.xlu0 %v1650, 17
    %v1662 = vpop.permute.xlu0 %1661
    %1663 = vrot.lane.b32.xlu0 %v1654, 17
    %v1664 = vpop.permute.xlu0 %1663
    %1665 = vrot.lane.b32.xlu0 %v1651, 17
    %v1666 = vpop.permute.xlu0 %1665
    %1667 = vrot.lane.b32.xlu0 %v1655, 17
    %v1668 = vpop.permute.xlu0 %1667
    %1669 = vrot.lane.b32.xlu0 %v1652, 17
    %v1670 = vpop.permute.xlu0 %1669
    %1671 = vrot.lane.b32.xlu0 %v1656, 17
    %v1672 = vpop.permute.xlu0 %1671
    %1673 = vrot.lane.b32.xlu0 %v1653, 17
    %v1674 = vpop.permute.xlu0 %1673
    %1675 = vrot.lane.b32.xlu0 %v1657, 17
    %v1676 = vpop.permute.xlu0 %1675
    %v1677 = vsel %vm160, %v1670, %v1674
    %v1678 = vsel %vm160, %v1672, %v1676
    %v1679 = vsel %vm160, %v1666, %v1670
    %v1680 = vsel %vm160, %v1668, %v1672
    %v1681 = vsel %vm160, %v1662, %v1666
    %v1682 = vsel %vm160, %v1664, %v1668
    %v1683 = vsel %vm160, %v1674, %v1662
    %v1684 = vsel %vm160, %v1676, %v1664
    %v1685 = vmul.f32 %v1683, %v82
    %v1686 = vmul.f32 %v1681, %v83
    %v1687 = vmul.f32 %v1679, %v84
    %v1688 = vmul.f32 %v1677, %v85
    %v1689 = vmul.f32 %v1684, %v82
    %v1690 = vmul.f32 %v1682, %v83
    %v1691 = vmul.f32 %v1680, %v84
    %v1692 = vmul.f32 %v1678, %v85
    %v1693 = vpack.c.bf16 %v1689, %v1685
    %v1694 = vpack.c.bf16 %v1690, %v1686
    %v1695 = vpack.c.bf16 %v1691, %v1687
    %v1696 = vpack.c.bf16 %v1692, %v1688
    %1697 = vst [vmem:[#allocation2] sm:$0xff] %v1693
    %1698 = vst [vmem:[#allocation2 + $0x8] sm:$0xff] %v1694
    %1699 = vst [vmem:[#allocation2 + $0x10] sm:$0xff] %v1695
    %1700 = vst [vmem:[#allocation2 + $0x18] sm:$0xff] %v1696
    %1701 = vrot.lane.b32.xlu0 %v1650, 16
    %v1702 = vpop.permute.xlu0 %1701
    %1703 = vrot.lane.b32.xlu0 %v1654, 16
    %v1704 = vpop.permute.xlu0 %1703
    %1705 = vrot.lane.b32.xlu0 %v1651, 16
    %v1706 = vpop.permute.xlu0 %1705
    %1707 = vrot.lane.b32.xlu0 %v1655, 16
    %v1708 = vpop.permute.xlu0 %1707
    %1709 = vrot.lane.b32.xlu0 %v1652, 16
    %v1710 = vpop.permute.xlu0 %1709
    %1711 = vrot.lane.b32.xlu0 %v1656, 16
    %v1712 = vpop.permute.xlu0 %1711
    %1713 = vrot.lane.b32.xlu0 %v1653, 16
    %v1714 = vpop.permute.xlu0 %1713
    %1715 = vrot.lane.b32.xlu0 %v1657, 16
    %v1716 = vpop.permute.xlu0 %1715
    %v1717 = vsel %vm201, %v1710, %v1714
    %v1718 = vsel %vm201, %v1712, %v1716
    %v1719 = vsel %vm201, %v1706, %v1710
    %v1720 = vsel %vm201, %v1708, %v1712
    %v1721 = vsel %vm201, %v1702, %v1706
    %v1722 = vsel %vm201, %v1704, %v1708
    %v1723 = vsel %vm201, %v1714, %v1702
    %v1724 = vsel %vm201, %v1716, %v1704
    %v1725 = vmul.f32 %v1723, %v86
    %v1726 = vmul.f32 %v1721, %v87
    %v1727 = vmul.f32 %v1719, %v88
    %v1728 = vmul.f32 %v1717, %v89
    %v1729 = vmul.f32 %v1724, %v86
    %v1730 = vmul.f32 %v1722, %v87
    %v1731 = vmul.f32 %v1720, %v88
    %v1732 = vmul.f32 %v1718, %v89
    %v1733 = vpack.c.bf16 %v1729, %v1725
    %v1734 = vpack.c.bf16 %v1730, %v1726
    %v1735 = vpack.c.bf16 %v1731, %v1727
    %v1736 = vpack.c.bf16 %v1732, %v1728
    %1737 = vst [vmem:[#allocation2 + $0x20] sm:$0xff] %v1733
    %1738 = vst [vmem:[#allocation2 + $0x28] sm:$0xff] %v1734
    %1739 = vst [vmem:[#allocation2 + $0x30] sm:$0xff] %v1735
    %1740 = vst [vmem:[#allocation2 + $0x38] sm:$0xff] %v1736
    %1741 = vrot.lane.b32.xlu0 %v1650, 15
    %v1742 = vpop.permute.xlu0 %1741
    %1743 = vrot.lane.b32.xlu0 %v1654, 15
    %v1744 = vpop.permute.xlu0 %1743
    %1745 = vrot.lane.b32.xlu0 %v1651, 15
    %v1746 = vpop.permute.xlu0 %1745
    %1747 = vrot.lane.b32.xlu0 %v1655, 15
    %v1748 = vpop.permute.xlu0 %1747
    %1749 = vrot.lane.b32.xlu0 %v1652, 15
    %v1750 = vpop.permute.xlu0 %1749
    %1751 = vrot.lane.b32.xlu0 %v1656, 15
    %v1752 = vpop.permute.xlu0 %1751
    %1753 = vrot.lane.b32.xlu0 %v1653, 15
    %v1754 = vpop.permute.xlu0 %1753
    %1755 = vrot.lane.b32.xlu0 %v1657, 15
    %v1756 = vpop.permute.xlu0 %1755
    %v1757 = vsel %vm242, %v1750, %v1754
    %v1758 = vsel %vm242, %v1752, %v1756
    %v1759 = vsel %vm242, %v1746, %v1750
    %v1760 = vsel %vm242, %v1748, %v1752
    %v1761 = vsel %vm242, %v1742, %v1746
    %v1762 = vsel %vm242, %v1744, %v1748
    %v1763 = vsel %vm242, %v1754, %v1742
    %v1764 = vsel %vm242, %v1756, %v1744
    %v1765 = vmul.f32 %v1763, %v98
    %v1766 = vmul.f32 %v1761, %v99
    %v1767 = vmul.f32 %v1759, %v100
    %v1768 = vmul.f32 %v1757, %v101
    %v1769 = vmul.f32 %v1764, %v98
    %v1770 = vmul.f32 %v1762, %v99
    %v1771 = vmul.f32 %v1760, %v100
    %v1772 = vmul.f32 %v1758, %v101
    %v1773 = vpack.c.bf16 %v1769, %v1765
    %v1774 = vpack.c.bf16 %v1770, %v1766
    %v1775 = vpack.c.bf16 %v1771, %v1767
    %v1776 = vpack.c.bf16 %v1772, %v1768
    %1777 = vst [vmem:[#allocation2 + $0x40] sm:$0xff] %v1773
    %1778 = vst [vmem:[#allocation2 + $0x48] sm:$0xff] %v1774
    %1779 = vst [vmem:[#allocation2 + $0x50] sm:$0xff] %v1775
    %1780 = vst [vmem:[#allocation2 + $0x58] sm:$0xff] %v1776
    %1781 = vrot.lane.b32.xlu0 %v1650, 1
    %v1782 = vpop.permute.xlu0 %1781
    %1783 = vrot.lane.b32.xlu0 %v1654, 1
    %v1784 = vpop.permute.xlu0 %1783
    %1785 = vrot.lane.b32.xlu0 %v1651, 1
    %v1786 = vpop.permute.xlu0 %1785
    %1787 = vrot.lane.b32.xlu0 %v1655, 1
    %v1788 = vpop.permute.xlu0 %1787
    %1789 = vrot.lane.b32.xlu0 %v1652, 1
    %v1790 = vpop.permute.xlu0 %1789
    %1791 = vrot.lane.b32.xlu0 %v1656, 1
    %v1792 = vpop.permute.xlu0 %1791
    %1793 = vrot.lane.b32.xlu0 %v1653, 1
    %v1794 = vpop.permute.xlu0 %1793
    %1795 = vrot.lane.b32.xlu0 %v1657, 1
    %v1796 = vpop.permute.xlu0 %1795
    %v1797 = vsel %vm283, %v1790, %v1794
    %v1798 = vsel %vm283, %v1792, %v1796
    %v1799 = vsel %vm283, %v1786, %v1790
    %v1800 = vsel %vm283, %v1788, %v1792
    %v1801 = vsel %vm283, %v1782, %v1786
    %v1802 = vsel %vm283, %v1784, %v1788
    %v1803 = vsel %vm283, %v1794, %v1782
    %v1804 = vsel %vm283, %v1796, %v1784
    %v1805 = vmul.f32 %v1803, %v102
    %v1806 = vmul.f32 %v1801, %v103
    %v1807 = vmul.f32 %v1799, %v104
    %v1808 = vmul.f32 %v1797, %v105
    %v1809 = vmul.f32 %v1804, %v102
    %v1810 = vmul.f32 %v1802, %v103
    %v1811 = vmul.f32 %v1800, %v104
    %v1812 = vmul.f32 %v1798, %v105
    %v1813 = vpack.c.bf16 %v1809, %v1805
    %v1814 = vpack.c.bf16 %v1810, %v1806
    %v1815 = vpack.c.bf16 %v1811, %v1807
    %v1816 = vpack.c.bf16 %v1812, %v1808
    %1817 = vst [vmem:[#allocation2 + $0x60] sm:$0xff] %v1813
    %1818 = vst [vmem:[#allocation2 + $0x68] sm:$0xff] %v1814
    %1819 = vst [vmem:[#allocation2 + $0x70] sm:$0xff] %v1815
    %1820 = vst [vmem:[#allocation2 + $0x78] sm:$0xff] %v1816
    %v1821 = vpack.c.bf16 %v1654, %v1650
    %v1822 = vpack.c.bf16 %v1655, %v1651
    %v1823 = vpack.c.bf16 %v1656, %v1652
    %v1824 = vpack.c.bf16 %v1657, %v1653
    %1825 = vst [vmem:[#allocation2 + $0x80] sm:$0xff] %v1821
    %1826 = vst [vmem:[#allocation2 + $0x88] sm:$0xff] %v1822
    %1827 = vst [vmem:[#allocation2 + $0x90] sm:$0xff] %v1823
    %1828 = vst [vmem:[#allocation2 + $0x98] sm:$0xff] %v1824
    %1829 = vrot.lane.b32.xlu0 %v1650, 127
    %v1830 = vpop.permute.xlu0 %1829
    %1831 = vrot.lane.b32.xlu0 %v1654, 127
    %v1832 = vpop.permute.xlu0 %1831
    %1833 = vrot.lane.b32.xlu0 %v1651, 127
    %v1834 = vpop.permute.xlu0 %1833
    %1835 = vrot.lane.b32.xlu0 %v1655, 127
    %v1836 = vpop.permute.xlu0 %1835
    %1837 = vrot.lane.b32.xlu0 %v1652, 127
    %v1838 = vpop.permute.xlu0 %1837
    %1839 = vrot.lane.b32.xlu0 %v1656, 127
    %v1840 = vpop.permute.xlu0 %1839
    %1841 = vrot.lane.b32.xlu0 %v1653, 127
    %v1842 = vpop.permute.xlu0 %1841
    %1843 = vrot.lane.b32.xlu0 %v1657, 127
    %v1844 = vpop.permute.xlu0 %1843
    %v1845 = vsel %vm332, %v1838, %v1842
    %v1846 = vsel %vm332, %v1840, %v1844
    %v1847 = vsel %vm332, %v1834, %v1838
    %v1848 = vsel %vm332, %v1836, %v1840
    %v1849 = vsel %vm332, %v1830, %v1834
    %v1850 = vsel %vm332, %v1832, %v1836
    %v1851 = vsel %vm332, %v1842, %v1830
    %v1852 = vsel %vm332, %v1844, %v1832
    %v1853 = vmul.f32 %v1849, %v106
    %v1854 = vmul.f32 %v1847, %v107
    %v1855 = vmul.f32 %v1845, %v108
    %v1856 = vmul.f32 %v1851, %v109
    %v1857 = vmul.f32 %v1850, %v106
    %v1858 = vmul.f32 %v1848, %v107
    %v1859 = vmul.f32 %v1846, %v108
    %v1860 = vmul.f32 %v1852, %v109
    %v1861 = vpack.c.bf16 %v1857, %v1853
    %v1862 = vpack.c.bf16 %v1858, %v1854
    %v1863 = vpack.c.bf16 %v1859, %v1855
    %v1864 = vpack.c.bf16 %v1860, %v1856
    %1865 = vst [vmem:[#allocation2 + $0xa0] sm:$0xff] %v1861
    %1866 = vst [vmem:[#allocation2 + $0xa8] sm:$0xff] %v1862
    %1867 = vst [vmem:[#allocation2 + $0xb0] sm:$0xff] %v1863
    %1868 = vst [vmem:[#allocation2 + $0xb8] sm:$0xff] %v1864
    %1869 = vrot.lane.b32.xlu0 %v1650, 113
    %v1870 = vpop.permute.xlu0 %1869
    %1871 = vrot.lane.b32.xlu0 %v1654, 113
    %v1872 = vpop.permute.xlu0 %1871
    %1873 = vrot.lane.b32.xlu0 %v1651, 113
    %v1874 = vpop.permute.xlu0 %1873
    %1875 = vrot.lane.b32.xlu0 %v1655, 113
    %v1876 = vpop.permute.xlu0 %1875
    %1877 = vrot.lane.b32.xlu0 %v1652, 113
    %v1878 = vpop.permute.xlu0 %1877
    %1879 = vrot.lane.b32.xlu0 %v1656, 113
    %v1880 = vpop.permute.xlu0 %1879
    %1881 = vrot.lane.b32.xlu0 %v1653, 113
    %v1882 = vpop.permute.xlu0 %1881
    %1883 = vrot.lane.b32.xlu0 %v1657, 113
    %v1884 = vpop.permute.xlu0 %1883
    %v1885 = vsel %vm373, %v1878, %v1882
    %v1886 = vsel %vm373, %v1880, %v1884
    %v1887 = vsel %vm373, %v1874, %v1878
    %v1888 = vsel %vm373, %v1876, %v1880
    %v1889 = vsel %vm373, %v1870, %v1874
    %v1890 = vsel %vm373, %v1872, %v1876
    %v1891 = vsel %vm373, %v1882, %v1870
    %v1892 = vsel %vm373, %v1884, %v1872
    %v1893 = vmul.f32 %v1889, %v118
    %v1894 = vmul.f32 %v1887, %v119
    %v1895 = vmul.f32 %v1885, %v120
    %v1896 = vmul.f32 %v1891, %v121
    %v1897 = vmul.f32 %v1890, %v118
    %v1898 = vmul.f32 %v1888, %v119
    %v1899 = vmul.f32 %v1886, %v120
    %v1900 = vmul.f32 %v1892, %v121
    %v1901 = vpack.c.bf16 %v1897, %v1893
    %v1902 = vpack.c.bf16 %v1898, %v1894
    %v1903 = vpack.c.bf16 %v1899, %v1895
    %v1904 = vpack.c.bf16 %v1900, %v1896
    %1905 = vst [vmem:[#allocation2 + $0xc0] sm:$0xff] %v1901
    %1906 = vst [vmem:[#allocation2 + $0xc8] sm:$0xff] %v1902
    %1907 = vst [vmem:[#allocation2 + $0xd0] sm:$0xff] %v1903
    %1908 = vst [vmem:[#allocation2 + $0xd8] sm:$0xff] %v1904
    %1909 = vrot.lane.b32.xlu0 %v1650, 112
    %v1910 = vpop.permute.xlu0 %1909
    %1911 = vrot.lane.b32.xlu0 %v1654, 112
    %v1912 = vpop.permute.xlu0 %1911
    %1913 = vrot.lane.b32.xlu0 %v1651, 112
    %v1914 = vpop.permute.xlu0 %1913
    %1915 = vrot.lane.b32.xlu0 %v1655, 112
    %v1916 = vpop.permute.xlu0 %1915
    %1917 = vrot.lane.b32.xlu0 %v1652, 112
    %v1918 = vpop.permute.xlu0 %1917
    %1919 = vrot.lane.b32.xlu0 %v1656, 112
    %v1920 = vpop.permute.xlu0 %1919
    %1921 = vrot.lane.b32.xlu0 %v1653, 112
    %v1922 = vpop.permute.xlu0 %1921
    %1923 = vrot.lane.b32.xlu0 %v1657, 112
    %v1924 = vpop.permute.xlu0 %1923
    %v1925 = vsel %vm414, %v1918, %v1922
    %v1926 = vsel %vm414, %v1920, %v1924
    %v1927 = vsel %vm414, %v1914, %v1918
    %v1928 = vsel %vm414, %v1916, %v1920
    %v1929 = vsel %vm414, %v1910, %v1914
    %v1930 = vsel %vm414, %v1912, %v1916
    %v1931 = vsel %vm414, %v1922, %v1910
    %v1932 = vsel %vm414, %v1924, %v1912
    %v1933 = vmul.f32 %v1929, %v122
    %v1934 = vmul.f32 %v1927, %v123
    %v1935 = vmul.f32 %v1925, %v124
    %v1936 = vmul.f32 %v1931, %v125
    %v1937 = vmul.f32 %v1930, %v122
    %v1938 = vmul.f32 %v1928, %v123
    %v1939 = vmul.f32 %v1926, %v124
    %v1940 = vmul.f32 %v1932, %v125
    %v1941 = vpack.c.bf16 %v1937, %v1933
    %v1942 = vpack.c.bf16 %v1938, %v1934
    %v1943 = vpack.c.bf16 %v1939, %v1935
    %v1944 = vpack.c.bf16 %v1940, %v1936
    %1945 = vst [vmem:[#allocation2 + $0xe0] sm:$0xff] %v1941
    %1946 = vst [vmem:[#allocation2 + $0xe8] sm:$0xff] %v1942
    %1947 = vst [vmem:[#allocation2 + $0xf0] sm:$0xff] %v1943
    %1948 = vst [vmem:[#allocation2 + $0xf8] sm:$0xff] %v1944
    %1949 = vrot.lane.b32.xlu0 %v1650, 111
    %v1950 = vpop.permute.xlu0 %1949
    %1951 = vrot.lane.b32.xlu0 %v1654, 111
    %v1952 = vpop.permute.xlu0 %1951
    %1953 = vrot.lane.b32.xlu0 %v1651, 111
    %v1954 = vpop.permute.xlu0 %1953
    %1955 = vrot.lane.b32.xlu0 %v1655, 111
    %v1956 = vpop.permute.xlu0 %1955
    %1957 = vrot.lane.b32.xlu0 %v1652, 111
    %v1958 = vpop.permute.xlu0 %1957
    %1959 = vrot.lane.b32.xlu0 %v1656, 111
    %v1960 = vpop.permute.xlu0 %1959
    %1961 = vrot.lane.b32.xlu0 %v1653, 111
    %v1962 = vpop.permute.xlu0 %1961
    %1963 = vrot.lane.b32.xlu0 %v1657, 111
    %v1964 = vpop.permute.xlu0 %1963
    %v1965 = vsel %vm455, %v1958, %v1962
    %v1966 = vsel %vm455, %v1960, %v1964
    %v1967 = vsel %vm455, %v1954, %v1958
    %v1968 = vsel %vm455, %v1956, %v1960
    %v1969 = vsel %vm455, %v1950, %v1954
    %v1970 = vsel %vm455, %v1952, %v1956
    %v1971 = vsel %vm455, %v1962, %v1950
    %v1972 = vsel %vm455, %v1964, %v1952
    %v1973 = vmul.f32 %v1969, %v130
    %v1974 = vmul.f32 %v1967, %v131
    %v1975 = vmul.f32 %v1965, %v132
    %v1976 = vmul.f32 %v1971, %v133
    %v1977 = vmul.f32 %v1970, %v130
    %v1978 = vmul.f32 %v1968, %v131
    %v1979 = vmul.f32 %v1966, %v132
    %v1980 = vmul.f32 %v1972, %v133
    %v1981 = vpack.c.bf16 %v1977, %v1973
    %v1982 = vpack.c.bf16 %v1978, %v1974
    %v1983 = vpack.c.bf16 %v1979, %v1975
    %v1984 = vpack.c.bf16 %v1980, %v1976
    %1985 = vst [vmem:[#allocation2 + $0x100] sm:$0xff] %v1981
    %1986 = vst [vmem:[#allocation2 + $0x108] sm:$0xff] %v1982
    %1987 = vst [vmem:[#allocation2 + $0x110] sm:$0xff] %v1983
    %1988 = vst [vmem:[#allocation2 + $0x118] sm:$0xff] %v1984
    %v1989 = vld [vmem:[#allocation2] sm:$0xff]
    %v1990 = vld [vmem:[#allocation2 + $0x8] sm:$0xff]
    %v1991 = vld [vmem:[#allocation2 + $0x10] sm:$0xff]
    %v1992 = vld [vmem:[#allocation2 + $0x18] sm:$0xff]
    %v1993 = vld [vmem:[#allocation2 + $0x20] sm:$0xff]
    %v1994 = vld [vmem:[#allocation2 + $0x28] sm:$0xff]
    %v1995 = vld [vmem:[#allocation2 + $0x30] sm:$0xff]
    %v1996 = vld [vmem:[#allocation2 + $0x38] sm:$0xff]
    %v1997 = vld [vmem:[#allocation2 + $0x40] sm:$0xff]
    %v1998 = vld [vmem:[#allocation2 + $0x48] sm:$0xff]
    %v1999 = vld [vmem:[#allocation2 + $0x50] sm:$0xff]
    %v2000 = vld [vmem:[#allocation2 + $0x58] sm:$0xff]
    %v2001 = vld [vmem:[#allocation2 + $0x60] sm:$0xff]
    %v2002 = vld [vmem:[#allocation2 + $0x68] sm:$0xff]
    %v2003 = vld [vmem:[#allocation2 + $0x70] sm:$0xff]
    %v2004 = vld [vmem:[#allocation2 + $0x78] sm:$0xff]
    %v2005 = vld [vmem:[#allocation2 + $0x80] sm:$0xff]
    %v2006 = vld [vmem:[#allocation2 + $0x88] sm:$0xff]
    %v2007 = vld [vmem:[#allocation2 + $0x90] sm:$0xff]
    %v2008 = vld [vmem:[#allocation2 + $0x98] sm:$0xff]
    %v2009 = vld [vmem:[#allocation2 + $0xa0] sm:$0xff]
    %v2010 = vld [vmem:[#allocation2 + $0xa8] sm:$0xff]
    %v2011 = vld [vmem:[#allocation2 + $0xb0] sm:$0xff]
    %v2012 = vld [vmem:[#allocation2 + $0xb8] sm:$0xff]
    %v2013 = vld [vmem:[#allocation2 + $0xc0] sm:$0xff]
    %v2014 = vld [vmem:[#allocation2 + $0xc8] sm:$0xff]
    %v2015 = vld [vmem:[#allocation2 + $0xd0] sm:$0xff]
    %v2016 = vld [vmem:[#allocation2 + $0xd8] sm:$0xff]
    %v2017 = vld [vmem:[#allocation2 + $0xe0] sm:$0xff]
    %v2018 = vld [vmem:[#allocation2 + $0xe8] sm:$0xff]
    %v2019 = vld [vmem:[#allocation2 + $0xf0] sm:$0xff]
    %v2020 = vld [vmem:[#allocation2 + $0xf8] sm:$0xff]
    %v2021 = vld [vmem:[#allocation2 + $0x100] sm:$0xff]
    %v2022 = vld [vmem:[#allocation2 + $0x108] sm:$0xff]
    %v2023 = vld [vmem:[#allocation2 + $0x110] sm:$0xff]
    %v2024 = vld [vmem:[#allocation2 + $0x118] sm:$0xff]
    %v2027 = vunpack.c.l.b16 %v1659
    %v2028 = vunpack.c.h.b16 %v1659
    %v2029 = vunpack.c.l.b16 %v1660
    %v2030 = vunpack.c.h.b16 %v1660
    %v2031 = vpack.c.b16 %v2029, %v2027
    %v2032 = vpack.c.b16 %v2030, %v2028
    %v2035 = vsel %vm525, %v2032, 0
    %2037 = vmatprep.subr.bf16.mxu0 %v1990
    %2038 = vmatpush1.bf16.msra.mxu0 %v1989
    %2039 = vmatprep.subr.bf16.mxu0 %v1994
    %2040 = vmatpush1.bf16.msra.mxu0 %v1993
    %2041 = vmatprep.subr.bf16.mxu0 %v1998
    %2042 = vmatpush1.bf16.msra.mxu0 %v1997
    %2043 = vmatprep.subr.bf16.mxu0 %v2002
    %2044 = vmatpush1.bf16.msra.mxu0 %v2001
    %2045 = vmatprep.subr.bf16.mxu0 %v2006
    %2046 = vmatpush1.bf16.msra.mxu0 %v2005
    %2047 = vmatprep.subr.bf16.mxu0 %v2010
    %2048 = vmatpush1.bf16.msra.mxu0 %v2009
    %2049 = vmatprep.subr.bf16.mxu0 %v2014
    %2050 = vmatpush1.bf16.msra.mxu0 %v2013
    %2051 = vmatprep.subr.bf16.mxu0 %v2018
    %2052 = vmatpush1.bf16.msra.mxu0 %v2017
    %2053 = vmatprep.subr.bf16.mxu0 %v2022
    %2054 = vmatpush1.bf16.msra.mxu0 %v2021
    %2055 = vmatprep.subr.bf16.mxu0 0
    %2056 = vmatpush1.bf16.msra.mxu0 0
    %2057 = vmatprep.subr.bf16.mxu0 0
    %2058 = vmatpush1.bf16.msra.mxu0 0
    %2059 = vmatprep.subr.bf16.mxu0 0
    %2060 = vmatpush1.bf16.msra.mxu0 0
    %2061 = vmatprep.subr.bf16.mxu0 0
    %2062 = vmatpush1.bf16.msra.mxu0 0
    %2063 = vmatprep.subr.bf16.mxu0 0
    %2064 = vmatpush1.bf16.msra.mxu0 0
    %2065 = vmatprep.subr.bf16.mxu0 0
    %2066 = vmatpush1.bf16.msra.mxu0 0
    %2067 = vmatprep.subr.bf16.mxu0 0
    %2068 = vmatpush1.bf16.msra.mxu0 0
    %2069 = vmatprep.mubr.bf16.mxu0 %v2035
    %2070 = vmatmul.mubr.bf16.gmra.mrb[0].mxu0 %v2031
    %v2071 = vpop.f32.mrb[0].mxu0
    %v2072 = vadd.f32 0.0, %v2071
    %v2073 = vpop.f32.mrb[0].mxu0
    %v2074 = vadd.f32 0.0, %v2073
    %v2075 = vpop.f32.mrb[0].mxu0
    %v2076 = vadd.f32 0.0, %v2075
    %v2077 = vpop.f32.mrb[0].mxu0
    %v2078 = vadd.f32 0.0, %v2077
    %2079 = vdwg.mxu0
    %2080 = vmatprep.subr.bf16.mxu0 %v1992
    %2081 = vmatpush1.bf16.msra.mxu0 %v1991
    %2082 = vmatprep.subr.bf16.mxu0 %v1996
    %2083 = vmatpush1.bf16.msra.mxu0 %v1995
    %2084 = vmatprep.subr.bf16.mxu0 %v2000
    %2085 = vmatpush1.bf16.msra.mxu0 %v1999
    %2086 = vmatprep.subr.bf16.mxu0 %v2004
    %2087 = vmatpush1.bf16.msra.mxu0 %v2003
    %2088 = vmatprep.subr.bf16.mxu0 %v2008
    %2089 = vmatpush1.bf16.msra.mxu0 %v2007
    %2090 = vmatprep.subr.bf16.mxu0 %v2012
    %2091 = vmatpush1.bf16.msra.mxu0 %v2011
    %2092 = vmatprep.subr.bf16.mxu0 %v2016
    %2093 = vmatpush1.bf16.msra.mxu0 %v2015
    %2094 = vmatprep.subr.bf16.mxu0 %v2020
    %2095 = vmatpush1.bf16.msra.mxu0 %v2019
    %2096 = vmatprep.subr.bf16.mxu0 %v2024
    %2097 = vmatpush1.bf16.msra.mxu0 %v2023
    %2098 = vmatprep.subr.bf16.mxu0 0
    %2099 = vmatpush1.bf16.msra.mxu0 0
    %2100 = vmatprep.subr.bf16.mxu0 0
    %2101 = vmatpush1.bf16.msra.mxu0 0
    %2102 = vmatprep.subr.bf16.mxu0 0
    %2103 = vmatpush1.bf16.msra.mxu0 0
    %2104 = vmatprep.subr.bf16.mxu0 0
    %2105 = vmatpush1.bf16.msra.mxu0 0
    %2106 = vmatprep.subr.bf16.mxu0 0
    %2107 = vmatpush1.bf16.msra.mxu0 0
    %2108 = vmatprep.subr.bf16.mxu0 0
    %2109 = vmatpush1.bf16.msra.mxu0 0
    %2110 = vmatprep.subr.bf16.mxu0 0
    %2111 = vmatpush1.bf16.msra.mxu0 0
    %2112 = vmatprep.mubr.bf16.mxu0 %v2035
    %2113 = vmatmul.mubr.bf16.gmra.mrb[0].mxu0 %v2031
    %v2114 = vpop.f32.mrb[0].mxu0
    %v2115 = vadd.f32 0.0, %v2114
    %v2116 = vpop.f32.mrb[0].mxu0
    %v2117 = vadd.f32 0.0, %v2116
    %v2118 = vpop.f32.mrb[0].mxu0
    %v2119 = vadd.f32 0.0, %v2118
    %v2120 = vpop.f32.mrb[0].mxu0
    %v2121 = vadd.f32 0.0, %v2120
    %2122 = vdwg.mxu0
    %v2123 = vadd.f32 %v2072, %v2074
    %2124 = vadd.xlane.f32.xlu0 %v2123
    %v2125 = vpop.xlane.xlu0 %2124
    %v2126 = vadd.f32 %v2076, %v2078
    %2127 = vadd.xlane.f32.xlu0 %v2126
    %v2128 = vpop.xlane.xlu0 %2127
    %v2129 = vmul.f32 %v2125, %v1093
    %v2130 = vmul.f32 %v2128, %v1093
    %s2131 = scalar_lea.vmem %s3, 16
    %v2132 = vld [vmem:[%s2131] sm:$0xff]
    %v2133 = vld [vmem:[%s2131 + $0x8] sm:$0xff]
    %v2134 = vmul.f32 %v2129, %v2132
    %v2135 = vmul.f32 %v2130, %v2133
    %v2136 = vsel %vm1100, %v2134, 0.0
    %v2137 = vsel %vm1100, %v2135, 0.0
    %v2138 = vadd.f32 %v2136, %v2137
    %v2139 = vrot.slane %v2138, 4
    %v2140 = vadd.f32 %v2138, %v2139
    %v2141 = vrot.slane %v2140, 2
    %v2142 = vadd.f32 %v2140, %v2141
    %v2143 = vrot.slane %v2142, 1
    %v2144 = vadd.f32 %v2142, %v2143
    %v2145 = vmax.f32 %v2144, 0.0
    %s2146 = scalar_lea.vmem %s4, 16
    %v2147 = vld [vmem:[%s2146] sm:$0xff]
    %v2148 = vld [vmem:[%s2146 + $0x8] sm:$0xff]
    %v2149 = vmul.f32 %v2147, %v2145
    %v2150 = vmul.f32 %v2148, %v2145
    %v2151 = vsel %vm1100, %v2149, 0.0
    %2152 = vadd.xlane.f32.xlu0 %v2151
    %v2153 = vpop.xlane.xlu0 %2152
    %v2154 = vsel %vm1100, %v2150, 0.0
    %2155 = vadd.xlane.f32.xlu0 %v2154
    %v2156 = vpop.xlane.xlu0 %2155
    %v2157 = vsub.f32 0.0, %v2153
    %v2158 = vsub.f32 0.0, %v2156
    %v2159 = vmul.f32 %v2157, 1.442695
    %v2160 = vpow.pop %v2159
    %v2161 = vmul.f32 %v2158, 1.442695
    %v2162 = vpow.pop %v2161
    %v2163 = vadd.f32 %v2160, 1.0
    %v2164 = vadd.f32 %v2162, 1.0
    %v2165 = vrcp.pop %v2163
    %v2166 = vrcp.pop %v2164
    %v2167 = vmul.f32 %v2072, %v2165
    %v2168 = vmul.f32 %v2074, %v2165
    %v2169 = vmul.f32 %v2076, %v2166
    %v2170 = vmul.f32 %v2078, %v2166
    %v2171 = vadd.f32 %v2115, %v2117
    %2172 = vadd.xlane.f32.xlu0 %v2171
    %v2173 = vpop.xlane.xlu0 %2172
    %v2174 = vadd.f32 %v2119, %v2121
    %2175 = vadd.xlane.f32.xlu0 %v2174
    %v2176 = vpop.xlane.xlu0 %2175
    %v2177 = vmul.f32 %v2173, %v1093
    %v2178 = vmul.f32 %v2176, %v1093
    %v2179 = vmul.f32 %v2177, %v2132
    %v2180 = vmul.f32 %v2178, %v2133
    %v2181 = vsel %vm1100, %v2179, 0.0
    %v2182 = vsel %vm1100, %v2180, 0.0
    %v2183 = vadd.f32 %v2181, %v2182
    %v2184 = vrot.slane %v2183, 4
    %v2185 = vadd.f32 %v2183, %v2184
    %v2186 = vrot.slane %v2185, 2
    %v2187 = vadd.f32 %v2185, %v2186
    %v2188 = vrot.slane %v2187, 1
    %v2189 = vadd.f32 %v2187, %v2188
    %v2190 = vmax.f32 %v2189, 0.0
    %v2191 = vmul.f32 %v2147, %v2190
    %v2192 = vmul.f32 %v2148, %v2190
    %v2193 = vsel %vm1100, %v2191, 0.0
    %2194 = vadd.xlane.f32.xlu0 %v2193
    %v2195 = vpop.xlane.xlu0 %2194
    %v2196 = vsel %vm1100, %v2192, 0.0
    %2197 = vadd.xlane.f32.xlu0 %v2196
    %v2198 = vpop.xlane.xlu0 %2197
    %v2199 = vsub.f32 0.0, %v2195
    %v2200 = vsub.f32 0.0, %v2198
    %v2201 = vmul.f32 %v2199, 1.442695
    %v2202 = vpow.pop %v2201
    %v2203 = vmul.f32 %v2200, 1.442695
    %v2204 = vpow.pop %v2203
    %v2205 = vadd.f32 %v2202, 1.0
    %v2206 = vadd.f32 %v2204, 1.0
    %v2207 = vrcp.pop %v2205
    %v2208 = vrcp.pop %v2206
    %v2209 = vmul.f32 %v2115, %v2207
    %v2210 = vmul.f32 %v2117, %v2207
    %v2211 = vmul.f32 %v2119, %v2208
    %v2212 = vmul.f32 %v2121, %v2208
    %v2213 = vadd.f32 %v2167, %v1177
    %v2214 = vadd.f32 %v2168, %v1178
    %v2215 = vadd.f32 %v2209, %v1179
    %v2216 = vadd.f32 %v2210, %v1180
    %v2217 = vadd.f32 %v2169, %v1181
    %v2218 = vadd.f32 %v2170, %v1182
    %v2219 = vadd.f32 %v2211, %v1183
    %v2220 = vadd.f32 %v2212, %v1184
    %v2221 = vld [vmem:[%s5] sm:$0xff]
    %v2222 = vld [vmem:[%s5 + $0x8] sm:$0xff]
    %2223 = vrot.lane.b32.xlu0 %v2213, 17
    %v2224 = vpop.permute.xlu0 %2223
    %2225 = vrot.lane.b32.xlu0 %v2217, 17
    %v2226 = vpop.permute.xlu0 %2225
    %2227 = vrot.lane.b32.xlu0 %v2214, 17
    %v2228 = vpop.permute.xlu0 %2227
    %2229 = vrot.lane.b32.xlu0 %v2218, 17
    %v2230 = vpop.permute.xlu0 %2229
    %2231 = vrot.lane.b32.xlu0 %v2215, 17
    %v2232 = vpop.permute.xlu0 %2231
    %2233 = vrot.lane.b32.xlu0 %v2219, 17
    %v2234 = vpop.permute.xlu0 %2233
    %2235 = vrot.lane.b32.xlu0 %v2216, 17
    %v2236 = vpop.permute.xlu0 %2235
    %2237 = vrot.lane.b32.xlu0 %v2220, 17
    %v2238 = vpop.permute.xlu0 %2237
    %v2239 = vsel %vm160, %v2232, %v2236
    %v2240 = vsel %vm160, %v2234, %v2238
    %v2241 = vsel %vm160, %v2228, %v2232
    %v2242 = vsel %vm160, %v2230, %v2234
    %v2243 = vsel %vm160, %v2224, %v2228
    %v2244 = vsel %vm160, %v2226, %v2230
    %v2245 = vsel %vm160, %v2236, %v2224
    %v2246 = vsel %vm160, %v2238, %v2226
    %v2247 = vmul.f32 %v2245, %v82
    %v2248 = vmul.f32 %v2243, %v83
    %v2249 = vmul.f32 %v2241, %v84
    %v2250 = vmul.f32 %v2239, %v85
    %v2251 = vmul.f32 %v2246, %v82
    %v2252 = vmul.f32 %v2244, %v83
    %v2253 = vmul.f32 %v2242, %v84
    %v2254 = vmul.f32 %v2240, %v85
    %v2255 = vpack.c.bf16 %v2251, %v2247
    %v2256 = vpack.c.bf16 %v2252, %v2248
    %v2257 = vpack.c.bf16 %v2253, %v2249
    %v2258 = vpack.c.bf16 %v2254, %v2250
    %2259 = vst [vmem:[#allocation2] sm:$0xff] %v2255
    %2260 = vst [vmem:[#allocation2 + $0x8] sm:$0xff] %v2256
    %2261 = vst [vmem:[#allocation2 + $0x10] sm:$0xff] %v2257
    %2262 = vst [vmem:[#allocation2 + $0x18] sm:$0xff] %v2258
    %2263 = vrot.lane.b32.xlu0 %v2213, 16
    %v2264 = vpop.permute.xlu0 %2263
    %2265 = vrot.lane.b32.xlu0 %v2217, 16
    %v2266 = vpop.permute.xlu0 %2265
    %2267 = vrot.lane.b32.xlu0 %v2214, 16
    %v2268 = vpop.permute.xlu0 %2267
    %2269 = vrot.lane.b32.xlu0 %v2218, 16
    %v2270 = vpop.permute.xlu0 %2269
    %2271 = vrot.lane.b32.xlu0 %v2215, 16
    %v2272 = vpop.permute.xlu0 %2271
    %2273 = vrot.lane.b32.xlu0 %v2219, 16
    %v2274 = vpop.permute.xlu0 %2273
    %2275 = vrot.lane.b32.xlu0 %v2216, 16
    %v2276 = vpop.permute.xlu0 %2275
    %2277 = vrot.lane.b32.xlu0 %v2220, 16
    %v2278 = vpop.permute.xlu0 %2277
    %v2279 = vsel %vm201, %v2272, %v2276
    %v2280 = vsel %vm201, %v2274, %v2278
    %v2281 = vsel %vm201, %v2268, %v2272
    %v2282 = vsel %vm201, %v2270, %v2274
    %v2283 = vsel %vm201, %v2264, %v2268
    %v2284 = vsel %vm201, %v2266, %v2270
    %v2285 = vsel %vm201, %v2276, %v2264
    %v2286 = vsel %vm201, %v2278, %v2266
    %v2287 = vmul.f32 %v2285, %v86
    %v2288 = vmul.f32 %v2283, %v87
    %v2289 = vmul.f32 %v2281, %v88
    %v2290 = vmul.f32 %v2279, %v89
    %v2291 = vmul.f32 %v2286, %v86
    %v2292 = vmul.f32 %v2284, %v87
    %v2293 = vmul.f32 %v2282, %v88
    %v2294 = vmul.f32 %v2280, %v89
    %v2295 = vpack.c.bf16 %v2291, %v2287
    %v2296 = vpack.c.bf16 %v2292, %v2288
    %v2297 = vpack.c.bf16 %v2293, %v2289
    %v2298 = vpack.c.bf16 %v2294, %v2290
    %2299 = vst [vmem:[#allocation2 + $0x20] sm:$0xff] %v2295
    %2300 = vst [vmem:[#allocation2 + $0x28] sm:$0xff] %v2296
    %2301 = vst [vmem:[#allocation2 + $0x30] sm:$0xff] %v2297
    %2302 = vst [vmem:[#allocation2 + $0x38] sm:$0xff] %v2298
    %2303 = vrot.lane.b32.xlu0 %v2213, 15
    %v2304 = vpop.permute.xlu0 %2303
    %2305 = vrot.lane.b32.xlu0 %v2217, 15
    %v2306 = vpop.permute.xlu0 %2305
    %2307 = vrot.lane.b32.xlu0 %v2214, 15
    %v2308 = vpop.permute.xlu0 %2307
    %2309 = vrot.lane.b32.xlu0 %v2218, 15
    %v2310 = vpop.permute.xlu0 %2309
    %2311 = vrot.lane.b32.xlu0 %v2215, 15
    %v2312 = vpop.permute.xlu0 %2311
    %2313 = vrot.lane.b32.xlu0 %v2219, 15
    %v2314 = vpop.permute.xlu0 %2313
    %2315 = vrot.lane.b32.xlu0 %v2216, 15
    %v2316 = vpop.permute.xlu0 %2315
    %2317 = vrot.lane.b32.xlu0 %v2220, 15
    %v2318 = vpop.permute.xlu0 %2317
    %v2319 = vsel %vm242, %v2312, %v2316
    %v2320 = vsel %vm242, %v2314, %v2318
    %v2321 = vsel %vm242, %v2308, %v2312
    %v2322 = vsel %vm242, %v2310, %v2314
    %v2323 = vsel %vm242, %v2304, %v2308
    %v2324 = vsel %vm242, %v2306, %v2310
    %v2325 = vsel %vm242, %v2316, %v2304
    %v2326 = vsel %vm242, %v2318, %v2306
    %v2327 = vmul.f32 %v2325, %v98
    %v2328 = vmul.f32 %v2323, %v99
    %v2329 = vmul.f32 %v2321, %v100
    %v2330 = vmul.f32 %v2319, %v101
    %v2331 = vmul.f32 %v2326, %v98
    %v2332 = vmul.f32 %v2324, %v99
    %v2333 = vmul.f32 %v2322, %v100
    %v2334 = vmul.f32 %v2320, %v101
    %v2335 = vpack.c.bf16 %v2331, %v2327
    %v2336 = vpack.c.bf16 %v2332, %v2328
    %v2337 = vpack.c.bf16 %v2333, %v2329
    %v2338 = vpack.c.bf16 %v2334, %v2330
    %2339 = vst [vmem:[#allocation2 + $0x40] sm:$0xff] %v2335
    %2340 = vst [vmem:[#allocation2 + $0x48] sm:$0xff] %v2336
    %2341 = vst [vmem:[#allocation2 + $0x50] sm:$0xff] %v2337
    %2342 = vst [vmem:[#allocation2 + $0x58] sm:$0xff] %v2338
    %2343 = vrot.lane.b32.xlu0 %v2213, 1
    %v2344 = vpop.permute.xlu0 %2343
    %2345 = vrot.lane.b32.xlu0 %v2217, 1
    %v2346 = vpop.permute.xlu0 %2345
    %2347 = vrot.lane.b32.xlu0 %v2214, 1
    %v2348 = vpop.permute.xlu0 %2347
    %2349 = vrot.lane.b32.xlu0 %v2218, 1
    %v2350 = vpop.permute.xlu0 %2349
    %2351 = vrot.lane.b32.xlu0 %v2215, 1
    %v2352 = vpop.permute.xlu0 %2351
    %2353 = vrot.lane.b32.xlu0 %v2219, 1
    %v2354 = vpop.permute.xlu0 %2353
    %2355 = vrot.lane.b32.xlu0 %v2216, 1
    %v2356 = vpop.permute.xlu0 %2355
    %2357 = vrot.lane.b32.xlu0 %v2220, 1
    %v2358 = vpop.permute.xlu0 %2357
    %v2359 = vsel %vm283, %v2352, %v2356
    %v2360 = vsel %vm283, %v2354, %v2358
    %v2361 = vsel %vm283, %v2348, %v2352
    %v2362 = vsel %vm283, %v2350, %v2354
    %v2363 = vsel %vm283, %v2344, %v2348
    %v2364 = vsel %vm283, %v2346, %v2350
    %v2365 = vsel %vm283, %v2356, %v2344
    %v2366 = vsel %vm283, %v2358, %v2346
    %v2367 = vmul.f32 %v2365, %v102
    %v2368 = vmul.f32 %v2363, %v103
    %v2369 = vmul.f32 %v2361, %v104
    %v2370 = vmul.f32 %v2359, %v105
    %v2371 = vmul.f32 %v2366, %v102
    %v2372 = vmul.f32 %v2364, %v103
    %v2373 = vmul.f32 %v2362, %v104
    %v2374 = vmul.f32 %v2360, %v105
    %v2375 = vpack.c.bf16 %v2371, %v2367
    %v2376 = vpack.c.bf16 %v2372, %v2368
    %v2377 = vpack.c.bf16 %v2373, %v2369
    %v2378 = vpack.c.bf16 %v2374, %v2370
    %2379 = vst [vmem:[#allocation2 + $0x60] sm:$0xff] %v2375
    %2380 = vst [vmem:[#allocation2 + $0x68] sm:$0xff] %v2376
    %2381 = vst [vmem:[#allocation2 + $0x70] sm:$0xff] %v2377
    %2382 = vst [vmem:[#allocation2 + $0x78] sm:$0xff] %v2378
    %v2383 = vpack.c.bf16 %v2217, %v2213
    %v2384 = vpack.c.bf16 %v2218, %v2214
    %v2385 = vpack.c.bf16 %v2219, %v2215
    %v2386 = vpack.c.bf16 %v2220, %v2216
    %2387 = vst [vmem:[#allocation2 + $0x80] sm:$0xff] %v2383
    %2388 = vst [vmem:[#allocation2 + $0x88] sm:$0xff] %v2384
    %2389 = vst [vmem:[#allocation2 + $0x90] sm:$0xff] %v2385
    %2390 = vst [vmem:[#allocation2 + $0x98] sm:$0xff] %v2386
    %2391 = vrot.lane.b32.xlu0 %v2213, 127
    %v2392 = vpop.permute.xlu0 %2391
    %2393 = vrot.lane.b32.xlu0 %v2217, 127
    %v2394 = vpop.permute.xlu0 %2393
    %2395 = vrot.lane.b32.xlu0 %v2214, 127
    %v2396 = vpop.permute.xlu0 %2395
    %2397 = vrot.lane.b32.xlu0 %v2218, 127
    %v2398 = vpop.permute.xlu0 %2397
    %2399 = vrot.lane.b32.xlu0 %v2215, 127
    %v2400 = vpop.permute.xlu0 %2399
    %2401 = vrot.lane.b32.xlu0 %v2219, 127
    %v2402 = vpop.permute.xlu0 %2401
    %2403 = vrot.lane.b32.xlu0 %v2216, 127
    %v2404 = vpop.permute.xlu0 %2403
    %2405 = vrot.lane.b32.xlu0 %v2220, 127
    %v2406 = vpop.permute.xlu0 %2405
    %v2407 = vsel %vm332, %v2400, %v2404
    %v2408 = vsel %vm332, %v2402, %v2406
    %v2409 = vsel %vm332, %v2396, %v2400
    %v2410 = vsel %vm332, %v2398, %v2402
    %v2411 = vsel %vm332, %v2392, %v2396
    %v2412 = vsel %vm332, %v2394, %v2398
    %v2413 = vsel %vm332, %v2404, %v2392
    %v2414 = vsel %vm332, %v2406, %v2394
    %v2415 = vmul.f32 %v2411, %v106
    %v2416 = vmul.f32 %v2409, %v107
    %v2417 = vmul.f32 %v2407, %v108
    %v2418 = vmul.f32 %v2413, %v109
    %v2419 = vmul.f32 %v2412, %v106
    %v2420 = vmul.f32 %v2410, %v107
    %v2421 = vmul.f32 %v2408, %v108
    %v2422 = vmul.f32 %v2414, %v109
    %v2423 = vpack.c.bf16 %v2419, %v2415
    %v2424 = vpack.c.bf16 %v2420, %v2416
    %v2425 = vpack.c.bf16 %v2421, %v2417
    %v2426 = vpack.c.bf16 %v2422, %v2418
    %2427 = vst [vmem:[#allocation2 + $0xa0] sm:$0xff] %v2423
    %2428 = vst [vmem:[#allocation2 + $0xa8] sm:$0xff] %v2424
    %2429 = vst [vmem:[#allocation2 + $0xb0] sm:$0xff] %v2425
    %2430 = vst [vmem:[#allocation2 + $0xb8] sm:$0xff] %v2426
    %2431 = vrot.lane.b32.xlu0 %v2213, 113
    %v2432 = vpop.permute.xlu0 %2431
    %2433 = vrot.lane.b32.xlu0 %v2217, 113
    %v2434 = vpop.permute.xlu0 %2433
    %2435 = vrot.lane.b32.xlu0 %v2214, 113
    %v2436 = vpop.permute.xlu0 %2435
    %2437 = vrot.lane.b32.xlu0 %v2218, 113
    %v2438 = vpop.permute.xlu0 %2437
    %2439 = vrot.lane.b32.xlu0 %v2215, 113
    %v2440 = vpop.permute.xlu0 %2439
    %2441 = vrot.lane.b32.xlu0 %v2219, 113
    %v2442 = vpop.permute.xlu0 %2441
    %2443 = vrot.lane.b32.xlu0 %v2216, 113
    %v2444 = vpop.permute.xlu0 %2443
    %2445 = vrot.lane.b32.xlu0 %v2220, 113
    %v2446 = vpop.permute.xlu0 %2445
    %v2447 = vsel %vm373, %v2440, %v2444
    %v2448 = vsel %vm373, %v2442, %v2446
    %v2449 = vsel %vm373, %v2436, %v2440
    %v2450 = vsel %vm373, %v2438, %v2442
    %v2451 = vsel %vm373, %v2432, %v2436
    %v2452 = vsel %vm373, %v2434, %v2438
    %v2453 = vsel %vm373, %v2444, %v2432
    %v2454 = vsel %vm373, %v2446, %v2434
    %v2455 = vmul.f32 %v2451, %v118
    %v2456 = vmul.f32 %v2449, %v119
    %v2457 = vmul.f32 %v2447, %v120
    %v2458 = vmul.f32 %v2453, %v121
    %v2459 = vmul.f32 %v2452, %v118
    %v2460 = vmul.f32 %v2450, %v119
    %v2461 = vmul.f32 %v2448, %v120
    %v2462 = vmul.f32 %v2454, %v121
    %v2463 = vpack.c.bf16 %v2459, %v2455
    %v2464 = vpack.c.bf16 %v2460, %v2456
    %v2465 = vpack.c.bf16 %v2461, %v2457
    %v2466 = vpack.c.bf16 %v2462, %v2458
    %2467 = vst [vmem:[#allocation2 + $0xc0] sm:$0xff] %v2463
    %2468 = vst [vmem:[#allocation2 + $0xc8] sm:$0xff] %v2464
    %2469 = vst [vmem:[#allocation2 + $0xd0] sm:$0xff] %v2465
    %2470 = vst [vmem:[#allocation2 + $0xd8] sm:$0xff] %v2466
    %2471 = vrot.lane.b32.xlu0 %v2213, 112
    %v2472 = vpop.permute.xlu0 %2471
    %2473 = vrot.lane.b32.xlu0 %v2217, 112
    %v2474 = vpop.permute.xlu0 %2473
    %2475 = vrot.lane.b32.xlu0 %v2214, 112
    %v2476 = vpop.permute.xlu0 %2475
    %2477 = vrot.lane.b32.xlu0 %v2218, 112
    %v2478 = vpop.permute.xlu0 %2477
    %2479 = vrot.lane.b32.xlu0 %v2215, 112
    %v2480 = vpop.permute.xlu0 %2479
    %2481 = vrot.lane.b32.xlu0 %v2219, 112
    %v2482 = vpop.permute.xlu0 %2481
    %2483 = vrot.lane.b32.xlu0 %v2216, 112
    %v2484 = vpop.permute.xlu0 %2483
    %2485 = vrot.lane.b32.xlu0 %v2220, 112
    %v2486 = vpop.permute.xlu0 %2485
    %v2487 = vsel %vm414, %v2480, %v2484
    %v2488 = vsel %vm414, %v2482, %v2486
    %v2489 = vsel %vm414, %v2476, %v2480
    %v2490 = vsel %vm414, %v2478, %v2482
    %v2491 = vsel %vm414, %v2472, %v2476
    %v2492 = vsel %vm414, %v2474, %v2478
    %v2493 = vsel %vm414, %v2484, %v2472
    %v2494 = vsel %vm414, %v2486, %v2474
    %v2495 = vmul.f32 %v2491, %v122
    %v2496 = vmul.f32 %v2489, %v123
    %v2497 = vmul.f32 %v2487, %v124
    %v2498 = vmul.f32 %v2493, %v125
    %v2499 = vmul.f32 %v2492, %v122
    %v2500 = vmul.f32 %v2490, %v123
    %v2501 = vmul.f32 %v2488, %v124
    %v2502 = vmul.f32 %v2494, %v125
    %v2503 = vpack.c.bf16 %v2499, %v2495
    %v2504 = vpack.c.bf16 %v2500, %v2496
    %v2505 = vpack.c.bf16 %v2501, %v2497
    %v2506 = vpack.c.bf16 %v2502, %v2498
    %2507 = vst [vmem:[#allocation2 + $0xe0] sm:$0xff] %v2503
    %2508 = vst [vmem:[#allocation2 + $0xe8] sm:$0xff] %v2504
    %2509 = vst [vmem:[#allocation2 + $0xf0] sm:$0xff] %v2505
    %2510 = vst [vmem:[#allocation2 + $0xf8] sm:$0xff] %v2506
    %2511 = vrot.lane.b32.xlu0 %v2213, 111
    %v2512 = vpop.permute.xlu0 %2511
    %2513 = vrot.lane.b32.xlu0 %v2217, 111
    %v2514 = vpop.permute.xlu0 %2513
    %2515 = vrot.lane.b32.xlu0 %v2214, 111
    %v2516 = vpop.permute.xlu0 %2515
    %2517 = vrot.lane.b32.xlu0 %v2218, 111
    %v2518 = vpop.permute.xlu0 %2517
    %2519 = vrot.lane.b32.xlu0 %v2215, 111
    %v2520 = vpop.permute.xlu0 %2519
    %2521 = vrot.lane.b32.xlu0 %v2219, 111
    %v2522 = vpop.permute.xlu0 %2521
    %2523 = vrot.lane.b32.xlu0 %v2216, 111
    %v2524 = vpop.permute.xlu0 %2523
    %2525 = vrot.lane.b32.xlu0 %v2220, 111
    %v2526 = vpop.permute.xlu0 %2525
    %v2527 = vsel %vm455, %v2520, %v2524
    %v2528 = vsel %vm455, %v2522, %v2526
    %v2529 = vsel %vm455, %v2516, %v2520
    %v2530 = vsel %vm455, %v2518, %v2522
    %v2531 = vsel %vm455, %v2512, %v2516
    %v2532 = vsel %vm455, %v2514, %v2518
    %v2533 = vsel %vm455, %v2524, %v2512
    %v2534 = vsel %vm455, %v2526, %v2514
    %v2535 = vmul.f32 %v2531, %v130
    %v2536 = vmul.f32 %v2529, %v131
    %v2537 = vmul.f32 %v2527, %v132
    %v2538 = vmul.f32 %v2533, %v133
    %v2539 = vmul.f32 %v2532, %v130
    %v2540 = vmul.f32 %v2530, %v131
    %v2541 = vmul.f32 %v2528, %v132
    %v2542 = vmul.f32 %v2534, %v133
    %v2543 = vpack.c.bf16 %v2539, %v2535
    %v2544 = vpack.c.bf16 %v2540, %v2536
    %v2545 = vpack.c.bf16 %v2541, %v2537
    %v2546 = vpack.c.bf16 %v2542, %v2538
    %2547 = vst [vmem:[#allocation2 + $0x100] sm:$0xff] %v2543
    %2548 = vst [vmem:[#allocation2 + $0x108] sm:$0xff] %v2544
    %2549 = vst [vmem:[#allocation2 + $0x110] sm:$0xff] %v2545
    %2550 = vst [vmem:[#allocation2 + $0x118] sm:$0xff] %v2546
    %v2551 = vld [vmem:[#allocation2] sm:$0xff]
    %v2552 = vld [vmem:[#allocation2 + $0x8] sm:$0xff]
    %v2553 = vld [vmem:[#allocation2 + $0x10] sm:$0xff]
    %v2554 = vld [vmem:[#allocation2 + $0x18] sm:$0xff]
    %v2555 = vld [vmem:[#allocation2 + $0x20] sm:$0xff]
    %v2556 = vld [vmem:[#allocation2 + $0x28] sm:$0xff]
    %v2557 = vld [vmem:[#allocation2 + $0x30] sm:$0xff]
    %v2558 = vld [vmem:[#allocation2 + $0x38] sm:$0xff]
    %v2559 = vld [vmem:[#allocation2 + $0x40] sm:$0xff]
    %v2560 = vld [vmem:[#allocation2 + $0x48] sm:$0xff]
    %v2561 = vld [vmem:[#allocation2 + $0x50] sm:$0xff]
    %v2562 = vld [vmem:[#allocation2 + $0x58] sm:$0xff]
    %v2563 = vld [vmem:[#allocation2 + $0x60] sm:$0xff]
    %v2564 = vld [vmem:[#allocation2 + $0x68] sm:$0xff]
    %v2565 = vld [vmem:[#allocation2 + $0x70] sm:$0xff]
    %v2566 = vld [vmem:[#allocation2 + $0x78] sm:$0xff]
    %v2567 = vld [vmem:[#allocation2 + $0x80] sm:$0xff]
    %v2568 = vld [vmem:[#allocation2 + $0x88] sm:$0xff]
    %v2569 = vld [vmem:[#allocation2 + $0x90] sm:$0xff]
    %v2570 = vld [vmem:[#allocation2 + $0x98] sm:$0xff]
    %v2571 = vld [vmem:[#allocation2 + $0xa0] sm:$0xff]
    %v2572 = vld [vmem:[#allocation2 + $0xa8] sm:$0xff]
    %v2573 = vld [vmem:[#allocation2 + $0xb0] sm:$0xff]
    %v2574 = vld [vmem:[#allocation2 + $0xb8] sm:$0xff]
    %v2575 = vld [vmem:[#allocation2 + $0xc0] sm:$0xff]
    %v2576 = vld [vmem:[#allocation2 + $0xc8] sm:$0xff]
    %v2577 = vld [vmem:[#allocation2 + $0xd0] sm:$0xff]
    %v2578 = vld [vmem:[#allocation2 + $0xd8] sm:$0xff]
    %v2579 = vld [vmem:[#allocation2 + $0xe0] sm:$0xff]
    %v2580 = vld [vmem:[#allocation2 + $0xe8] sm:$0xff]
    %v2581 = vld [vmem:[#allocation2 + $0xf0] sm:$0xff]
    %v2582 = vld [vmem:[#allocation2 + $0xf8] sm:$0xff]
    %v2583 = vld [vmem:[#allocation2 + $0x100] sm:$0xff]
    %v2584 = vld [vmem:[#allocation2 + $0x108] sm:$0xff]
    %v2585 = vld [vmem:[#allocation2 + $0x110] sm:$0xff]
    %v2586 = vld [vmem:[#allocation2 + $0x118] sm:$0xff]
    %v2589 = vunpack.c.l.b16 %v2221
    %v2590 = vunpack.c.h.b16 %v2221
    %v2591 = vunpack.c.l.b16 %v2222
    %v2592 = vunpack.c.h.b16 %v2222
    %v2593 = vpack.c.b16 %v2591, %v2589
    %v2594 = vpack.c.b16 %v2592, %v2590
    %v2597 = vsel %vm525, %v2594, 0
    %2599 = vmatprep.subr.bf16.mxu0 %v2552
    %2600 = vmatpush1.bf16.msra.mxu0 %v2551
    %2601 = vmatprep.subr.bf16.mxu0 %v2556
    %2602 = vmatpush1.bf16.msra.mxu0 %v2555
    %2603 = vmatprep.subr.bf16.mxu0 %v2560
    %2604 = vmatpush1.bf16.msra.mxu0 %v2559
    %2605 = vmatprep.subr.bf16.mxu0 %v2564
    %2606 = vmatpush1.bf16.msra.mxu0 %v2563
    %2607 = vmatprep.subr.bf16.mxu0 %v2568
    %2608 = vmatpush1.bf16.msra.mxu0 %v2567
    %2609 = vmatprep.subr.bf16.mxu0 %v2572
    %2610 = vmatpush1.bf16.msra.mxu0 %v2571
    %2611 = vmatprep.subr.bf16.mxu0 %v2576
    %2612 = vmatpush1.bf16.msra.mxu0 %v2575
    %2613 = vmatprep.subr.bf16.mxu0 %v2580
    %2614 = vmatpush1.bf16.msra.mxu0 %v2579
    %2615 = vmatprep.subr.bf16.mxu0 %v2584
    %2616 = vmatpush1.bf16.msra.mxu0 %v2583
    %2617 = vmatprep.subr.bf16.mxu0 0
    %2618 = vmatpush1.bf16.msra.mxu0 0
    %2619 = vmatprep.subr.bf16.mxu0 0
    %2620 = vmatpush1.bf16.msra.mxu0 0
    %2621 = vmatprep.subr.bf16.mxu0 0
    %2622 = vmatpush1.bf16.msra.mxu0 0
    %2623 = vmatprep.subr.bf16.mxu0 0
    %2624 = vmatpush1.bf16.msra.mxu0 0
    %2625 = vmatprep.subr.bf16.mxu0 0
    %2626 = vmatpush1.bf16.msra.mxu0 0
    %2627 = vmatprep.subr.bf16.mxu0 0
    %2628 = vmatpush1.bf16.msra.mxu0 0
    %2629 = vmatprep.subr.bf16.mxu0 0
    %2630 = vmatpush1.bf16.msra.mxu0 0
    %2631 = vmatprep.mubr.bf16.mxu0 %v2597
    %2632 = vmatmul.mubr.bf16.gmra.mrb[0].mxu0 %v2593
    %v2633 = vpop.f32.mrb[0].mxu0
    %v2634 = vadd.f32 %v134, %v2633
    %v2635 = vpop.f32.mrb[0].mxu0
    %v2636 = vadd.f32 %v135, %v2635
    %v2637 = vpop.f32.mrb[0].mxu0
    %v2638 = vadd.f32 %v138, %v2637
    %v2639 = vpop.f32.mrb[0].mxu0
    %v2640 = vadd.f32 %v139, %v2639
    %2641 = vdwg.mxu0
    %2642 = vmatprep.subr.bf16.mxu0 %v2554
    %2643 = vmatpush1.bf16.msra.mxu0 %v2553
    %2644 = vmatprep.subr.bf16.mxu0 %v2558
    %2645 = vmatpush1.bf16.msra.mxu0 %v2557
    %2646 = vmatprep.subr.bf16.mxu0 %v2562
    %2647 = vmatpush1.bf16.msra.mxu0 %v2561
    %2648 = vmatprep.subr.bf16.mxu0 %v2566
    %2649 = vmatpush1.bf16.msra.mxu0 %v2565
    %2650 = vmatprep.subr.bf16.mxu0 %v2570
    %2651 = vmatpush1.bf16.msra.mxu0 %v2569
    %2652 = vmatprep.subr.bf16.mxu0 %v2574
    %2653 = vmatpush1.bf16.msra.mxu0 %v2573
    %2654 = vmatprep.subr.bf16.mxu0 %v2578
    %2655 = vmatpush1.bf16.msra.mxu0 %v2577
    %2656 = vmatprep.subr.bf16.mxu0 %v2582
    %2657 = vmatpush1.bf16.msra.mxu0 %v2581
    %2658 = vmatprep.subr.bf16.mxu0 %v2586
    %2659 = vmatpush1.bf16.msra.mxu0 %v2585
    %2660 = vmatprep.subr.bf16.mxu0 0
    %2661 = vmatpush1.bf16.msra.mxu0 0
    %2662 = vmatprep.subr.bf16.mxu0 0
    %2663 = vmatpush1.bf16.msra.mxu0 0
    %2664 = vmatprep.subr.bf16.mxu0 0
    %2665 = vmatpush1.bf16.msra.mxu0 0
    %2666 = vmatprep.subr.bf16.mxu0 0
    %2667 = vmatpush1.bf16.msra.mxu0 0
    %2668 = vmatprep.subr.bf16.mxu0 0
    %2669 = vmatpush1.bf16.msra.mxu0 0
    %2670 = vmatprep.subr.bf16.mxu0 0
    %2671 = vmatpush1.bf16.msra.mxu0 0
    %2672 = vmatprep.subr.bf16.mxu0 0
    %2673 = vmatpush1.bf16.msra.mxu0 0
    %2674 = vmatprep.mubr.bf16.mxu0 %v2597
    %2675 = vmatmul.mubr.bf16.gmra.mrb[0].mxu0 %v2593
    %v2676 = vpop.f32.mrb[0].mxu0
    %v2677 = vadd.f32 %v136, %v2676
    %v2678 = vpop.f32.mrb[0].mxu0
    %v2679 = vadd.f32 %v137, %v2678
    %v2680 = vpop.f32.mrb[0].mxu0
    %v2681 = vadd.f32 %v140, %v2680
    %v2682 = vpop.f32.mrb[0].mxu0
    %v2683 = vadd.f32 %v141, %v2682
    %2684 = vdwg.mxu0
    %2685 = vst [vmem:[#allocation8] sm:$0xff] %v2634
    %2686 = vst [vmem:[#allocation8 + $0x8] sm:$0xff] %v2636
    %2687 = vst [vmem:[#allocation8 + $0x10] sm:$0xff] %v2677
    %2688 = vst [vmem:[#allocation8 + $0x18] sm:$0xff] %v2679
    %2689 = vst [vmem:[#allocation8 + $0x20] sm:$0xff] %v2638
    %2690 = vst [vmem:[#allocation8 + $0x28] sm:$0xff] %v2640
    %2691 = vst [vmem:[#allocation8 + $0x30] sm:$0xff] %v2681
    %2692 = vst [vmem:[#allocation8 + $0x38] sm:$0xff] %v2683
    // Predicated region
    $region34: #{tpu_custom_call.1} parent=1 // pred_check
      _
    $region35: #{tpu_custom_call.1} parent=1 // pred_check_branch
      %2694 = sbr.rel (0) target = $region37
    $region36: #{tpu_custom_call.1} parent=1 // pred_region
      %s2696 = ssub.s32 1024, 1024
      %2697 = vsyncadd [#allocation5], %s2696
      %s2698 = sshll.u32 [#allocation8], 4
      %s2699 = int_to_ptr.vmem [resolvable:$true] %s2698
      %2704 = dma.vmem_to_hbm [thread:$0]  %s2699, 1024, %s6, [#allocation5], 512, 512, 32
    $region37: #{tpu_custom_call.1} parent=1 // pred_fallthru
      _
    // Predicated region
    $region38: #{tpu_custom_call.1} parent=1 // pred_check
      _
    $region39: #{tpu_custom_call.1} parent=1 // pred_check_branch
      %2706 = sbr.rel (0) target = $region41
    $region40: #{tpu_custom_call.1} parent=1 // pred_region
      %2707 = dma.done [#allocation5], 1024
    $region41: #{tpu_custom_call.1} parent=1 // pred_fallthru
      _
    %2708 = vsyncpa [#allocation4], 1
    %2709 = vsyncpa [#allocation7], 1
    %2710 = vsyncpa [#allocation5], 1

</llo_original>
